<compile_context>
chip_gen: v7x
topology: tpu7x:2x2x1
jax: 0.10.0
libtpu: 0.0.40
codegen_flags: <defaults>
</compile_context>

<pallas_src>
import functools

import jax
import jax.numpy as jnp
from jax.experimental import pallas as pl
from jax.experimental.pallas import tpu as pltpu

LANE = 128


def _round_up(x, m):
    return (x + m - 1) // m * m


def _pick_row_tile(h, target=8):
    t = min(target, h)
    while h % t:
        t -= 1
    return t


# ---------------------------------------------------------------------------
# Kernel 1: 3x3 conv (stride 1, spatially pre-padded input) on one row tile
#           + optional fused (previous-BN affine + ReLU) on the input tile
#           + per-tile partial BN statistics (sum, sum of squares) of the output
# ---------------------------------------------------------------------------
def _conv3x3_kernel(x_hbm, w_ref, s_ref, t_ref, y_ref, stats_ref, xbuf, sem,
                    *, TH, W, Hp, Wp, Cin, Cout, nt, fuse_act):
    n = pl.program_id(0)
    i = pl.program_id(1)
    slot = i & 1

    def fetch(row_idx, into_slot):
        row0 = pl.multiple_of(row_idx * TH, TH)
        pltpu.make_async_copy(
            x_hbm.at[n, pl.ds(row0, TH + 2)],
            xbuf.at[into_slot],
            sem.at[into_slot],
        ).start()

    # Prime the double buffer at the first row tile of every batch element.
    @pl.when(i == 0)
    def _():
        fetch(i, slot)

    # Wait for this tile's (TH+2)-row halo window (started by the priming
    # above or by the previous row tile's prefetch).
    row0 = pl.multiple_of(i * TH, TH)
    pltpu.make_async_copy(
        x_hbm.at[n, pl.ds(row0, TH + 2)], xbuf.at[slot], sem.at[slot]
    ).wait()

    # Prefetch the next row tile of the same batch element; overlaps the
    # im2col + matmul below.
    @pl.when(i + 1 < nt)
    def _():
        fetch(i + 1, 1 - slot)

    x = xbuf[slot]                                      # (TH+2, Wp, Cin) f32
    if fuse_act:
        # Fused BN affine + ReLU of the previous block, applied to the input
        # tile.  Halo positions must be forced back to zero (they are zero
        # padding of the *activation*, and relu(0*s + t) != 0 in general).
        act = jnp.maximum(x * s_ref[0, :] + t_ref[0, :], 0.0)
        rows = jax.lax.broadcasted_iota(jnp.int32, (TH + 2, Wp, 1), 0) + row0
        cols = jax.lax.broadcasted_iota(jnp.int32, (TH + 2, Wp, 1), 1)
        interior = ((rows > 0) & (rows < Hp - 1)
                    & (cols > 0) & (cols < Wp - 1))
        x = jnp.where(interior, act, 0.0)

    # im2col: 9 shifted views concatenated on the lane axis -> one MXU matmul.
    taps = []
    for ky in range(3):
        for kx in range(3):
            taps.append(x[ky:ky + TH, kx:kx + W, :].reshape(TH * W, Cin))
    patch = jnp.concatenate(taps, axis=1)               # (TH*W, 9*Cin)
    acc = jnp.dot(patch, w_ref[...], preferred_element_type=jnp.float32)

    y_ref[0] = acc.reshape(TH, W, Cout).astype(y_ref.dtype)

    # Partial BN statistics of this output tile (reduced over rows and cols).
    s1 = jnp.sum(acc, axis=0, keepdims=True)            # (1, Cout)
    s2 = jnp.sum(acc * acc, axis=0, keepdims=True)      # (1, Cout)
    stats_ref[0, 0] = jnp.concatenate([s1, s2], axis=0)


def conv3x3_bn_stats(x_pad, w_packed, scale, bias, *, H, W, TH, fuse_act):
    """x_pad: (N, H+2, W+2, Cp) f32 (spatial halo + channel pad already done).
    w_packed: (9*Cp_in, Cp_out).  scale/bias: (1, Cp_in) input affine (only
    used when fuse_act=True).  Returns y (N,H,W,Cp_out) and partial stats
    (N, H//TH, 2, Cp_out)."""
    N, Hp, Wp, Cin = x_pad.shape
    Cout = w_packed.shape[-1]
    nt = H // TH

    kernel = functools.partial(
        _conv3x3_kernel, TH=TH, W=W, Hp=Hp, Wp=Wp, Cin=Cin, Cout=Cout,
        nt=nt, fuse_act=fuse_act)

    return pl.pallas_call(
        kernel,
        out_shape=(
            jax.ShapeDtypeStruct((N, H, W, Cout), jnp.float32),
            jax.ShapeDtypeStruct((N, nt, 2, Cout), jnp.float32),
        ),
        grid_spec=pltpu.PrefetchScalarGridSpec(
            num_scalar_prefetch=0,
            grid=(N, nt),
            in_specs=[
                pl.BlockSpec(memory_space=pl.ANY),                    # x (HBM)
                pl.BlockSpec((9 * Cin, Cout), lambda n, i: (0, 0)),   # weights
                pl.BlockSpec((1, Cin), lambda n, i: (0, 0)),          # scale
                pl.BlockSpec((1, Cin), lambda n, i: (0, 0)),          # bias
            ],
            out_specs=[
                pl.BlockSpec((1, TH, W, Cout), lambda n, i: (n, i, 0, 0)),
                pl.BlockSpec((1, 1, 2, Cout), lambda n, i: (n, i, 0, 0)),
            ],
            scratch_shapes=[
                pltpu.VMEM((2, TH + 2, Wp, Cin), jnp.float32),  # halo dbl-buf
                pltpu.SemaphoreType.DMA((2,)),
            ],
        ),
        compiler_params=pltpu.CompilerParams(
            dimension_semantics=("parallel", "arbitrary")),
    )(x_pad, w_packed, scale, bias)


# ---------------------------------------------------------------------------
# Kernel 2: final fused BN affine + ReLU (lane-dense elementwise pass)
# ---------------------------------------------------------------------------
def _bn_relu_kernel(y_ref, s_ref, t_ref, o_ref):
    o_ref[...] = jnp.maximum(
        y_ref[...] * s_ref[0, :] + t_ref[0, :], 0.0).astype(o_ref.dtype)


def bn_relu(y, scale, bias, *, TH):
    N, H, W, C = y.shape
    return pl.pallas_call(
        _bn_relu_kernel,
        out_shape=jax.ShapeDtypeStruct((N, H, W, C), jnp.float32),
        grid_spec=pltpu.PrefetchScalarGridSpec(
            num_scalar_prefetch=0,
            grid=(N, H // TH),
            in_specs=[
                pl.BlockSpec((1, TH, W, C), lambda n, i: (n, i, 0, 0)),
                pl.BlockSpec((1, C), lambda n, i: (0, 0)),
                pl.BlockSpec((1, C), lambda n, i: (0, 0)),
            ],
            out_specs=pl.BlockSpec((1, TH, W, C), lambda n, i: (n, i, 0, 0)),
        ),
        compiler_params=pltpu.CompilerParams(
            dimension_semantics=("parallel", "parallel")),
    )(y, scale.reshape(1, C), bias.reshape(1, C))


# ---------------------------------------------------------------------------
# Host-side glue (channel padding, weight packing, BN fold) and forward pass
# ---------------------------------------------------------------------------
def _pad_lane(v, c_pad):
    return jnp.pad(v, (0, c_pad - v.shape[0]))


def _pack_weights(w, cin_pad, cout_pad):
    # (3, 3, Cin, Cout) -> zero-pad channels -> (9*Cin_pad, Cout_pad)
    kh, kw, cin, cout = w.shape
    w = jnp.pad(w, ((0, 0), (0, 0), (0, cin_pad - cin), (0, cout_pad - cout)))
    return w.reshape(kh * kw * cin_pad, cout_pad)


def _fold_bn(stats, gamma, beta, count, eps):
    # stats: (N, nt, 2, Cp) partial [sum, sum-of-squares].  Training-mode
    # (biased) batch statistics, exactly what nn.BatchNorm2d uses on forward().
    tot = jnp.sum(stats, axis=(0, 1))                   # (2, Cp)
    mean = tot[0] / count
    var = jnp.maximum(tot[1] / count - mean * mean, 0.0)
    scale = gamma * jax.lax.rsqrt(var + eps)
    bias = beta - mean * scale
    return scale, bias


def double_conv_forward(x_nchw, params, *, eps=1e-5, row_tile=8):
    """x_nchw: (N, Cin, H, W) f32  ->  (N, Cout, H, W) f32."""
    N, Cin, H, W = x_nchw.shape
    Cout = params["w1"].shape[-1]
    cin_p = _round_up(Cin, LANE)
    cout_p = _round_up(Cout, LANE)
    TH = _pick_row_tile(H, row_tile)   # real deployments: derive from VMEM budget
    count = float(N * H * W)

    # NCHW -> NHWC; one wrapper copy that both zero-pads channels to a 128-lane
    # multiple and adds the 1-pixel conv halo.
    x = jnp.transpose(x_nchw, (0, 2, 3, 1)).astype(jnp.float32)
    x = jnp.pad(x, ((0, 0), (1, 1), (1, 1), (0, cin_p - Cin)))

    w1 = _pack_weights(params["w1"].astype(jnp.float32), cin_p, cout_p)
    w2 = _pack_weights(params["w2"].astype(jnp.float32), cout_p, cout_p)
    g1 = _pad_lane(params["gamma1"].astype(jnp.float32), cout_p)
    b1 = _pad_lane(params["beta1"].astype(jnp.float32), cout_p)
    g2 = _pad_lane(params["gamma2"].astype(jnp.float32), cout_p)
    b2 = _pad_lane(params["beta2"].astype(jnp.float32), cout_p)
    # NOTE: params["b1"] / params["b2"] (Conv2d biases) cancel exactly under
    # training-mode BatchNorm, so the kernels never add them.

    one = jnp.ones((1, cin_p), jnp.float32)
    zero = jnp.zeros((1, cin_p), jnp.float32)

    # --- block 1: conv (+ partial BN stats); affine+ReLU deferred to conv2 ---
    y1, st1 = conv3x3_bn_stats(x, w1, one, zero, H=H, W=W, TH=TH,
                               fuse_act=False)
    s1, t1 = _fold_bn(st1, g1, b1, count, eps)

    # --- block 2: conv with fused BN1 affine + ReLU on its input tile -------
    y1p = jnp.pad(y1, ((0, 0), (1, 1), (1, 1), (0, 0)))   # conv halo only
    y2, st2 = conv3x3_bn_stats(y1p, w2, s1.reshape(1, -1), t1.reshape(1, -1),
                               H=H, W=W, TH=TH, fuse_act=True)
    s2, t2 = _fold_bn(st2, g2, b2, count, eps)

    # --- final BN2 affine + ReLU (lane-dense elementwise kernel) ------------
    out = bn_relu(y2, s2, t2, TH=TH)

    out = out[..., :Cout]                                  # drop channel pad
    return jnp.transpose(out, (0, 3, 1, 2))                # NHWC -> NCHW


def init_params(key, in_channel, out_channel):
    k1, k2, k3, k4 = jax.random.split(key, 4)
    # PyTorch Conv2d default init: U(-1/sqrt(fan_in), 1/sqrt(fan_in))
    fan1 = in_channel * 9
    fan2 = out_channel * 9
    lim1 = 1.0 / jnp.sqrt(fan1)
    lim2 = 1.0 / jnp.sqrt(fan2)
    # weights stored as (3, 3, Cin, Cout) (HWIO) for the NHWC kernels
    w1 = jax.random.uniform(k1, (3, 3, in_channel, out_channel),
                            jnp.float32, -lim1, lim1)
    b1 = jax.random.uniform(k2, (out_channel,), jnp.float32, -lim1, lim1)
    w2 = jax.random.uniform(k3, (3, 3, out_channel, out_channel),
                            jnp.float32, -lim2, lim2)
    b2 = jax.random.uniform(k4, (out_channel,), jnp.float32, -lim2, lim2)
    return {
        "w1": w1, "b1": b1,
        "gamma1": jnp.ones((out_channel,), jnp.float32),
        "beta1": jnp.zeros((out_channel,), jnp.float32),
        "w2": w2, "b2": b2,
        "gamma2": jnp.ones((out_channel,), jnp.float32),
        "beta2": jnp.zeros((out_channel,), jnp.float32),
    }


# Pure-JAX reference with the PyTorch module's exact semantics (incl. biases).
def double_conv_reference(x_nchw, params, eps=1e-5):
    def conv(x, w, b):
        y = jax.lax.conv_general_dilated(
            x, w, window_strides=(1, 1), padding="SAME",
            dimension_numbers=("NCHW", "HWIO", "NCHW"))
        return y + b[None, :, None, None]

    def bn_relu_ref(y, gamma, beta):
        mean = jnp.mean(y, axis=(0, 2, 3), keepdims=True)
        var = jnp.mean((y - mean) ** 2, axis=(0, 2, 3), keepdims=True)
        yh = (y - mean) * jax.lax.rsqrt(var + eps)
        return jnp.maximum(
            yh * gamma[None, :, None, None] + beta[None, :, None, None], 0.0)

    a1 = bn_relu_ref(conv(x_nchw, params["w1"], params["b1"]),
                     params["gamma1"], params["beta1"])
    a2 = bn_relu_ref(conv(a1, params["w2"], params["b2"]),
                     params["gamma2"], params["beta2"])
    return a2


if __name__ == "__main__":
    key = jax.random.PRNGKey(0)
    k_x, k_p = jax.random.split(key)

    N, Cin, Cout, H, W = 2, 4, 8, 16, 16
    x = jax.random.normal(k_x, (N, Cin, H, W), dtype=jnp.float32)
    params = init_params(k_p, Cin, Cout)

    fwd = jax.jit(double_conv_forward)
    out = jax.block_until_ready(fwd(x, params))

    assert out.shape == (N, Cout, H, W), out.shape
    assert bool(jnp.all(out >= 0.0))          # last op is a ReLU

    ref = jax.block_until_ready(double_conv_reference(x, params))
    max_err = float(jnp.max(jnp.abs(out - ref)))
    assert max_err < 5e-3, f"mismatch vs reference: {max_err}"

    print("KERNEL_OK")
</pallas_src>

<mosaic_0001>
module attributes {stable_mosaic.version = 11 : i64} {
  func.func @_conv3x3_kernel(%arg0: i32, %arg1: i32, %arg2: memref<2x18x18x128xf32, #tpu.memory_space<any>>, %arg3: memref<1152x128xf32, #tpu.memory_space<vmem>>, %arg4: memref<1x128xf32, #tpu.memory_space<vmem>>, %arg5: memref<1x128xf32, #tpu.memory_space<vmem>>, %arg6: memref<1x8x16x128xf32, #tpu.memory_space<vmem>>, %arg7: memref<1x1x2x128xf32, #tpu.memory_space<vmem>>, %arg8: memref<2x10x18x128xf32, #tpu.memory_space<vmem>>, %arg9: memref<2x!tpu.dma_semaphore, #tpu.memory_space<semaphore_mem>>) attributes {dimension_semantics = [#tpu.dimension_semantics<parallel>, #tpu.dimension_semantics<arbitrary>], iteration_bounds = array<i64: 2, 2>, scalar_prefetch = 0 : i64, scratch_operands = 2 : i64, tpu.core_type = #tpu.core_type<tc>, window_params = [{}, {pipeline_mode = #tpu.pipeline_mode<synchronous>, transform_indices = @transform_1, window_bounds = array<i64: 1152, 128>}, {pipeline_mode = #tpu.pipeline_mode<synchronous>, transform_indices = @transform_2, window_bounds = array<i64: 1, 128>}, {pipeline_mode = #tpu.pipeline_mode<synchronous>, transform_indices = @transform_3, window_bounds = array<i64: 1, 128>}, {transform_indices = @transform_4, window_bounds = array<i64: 1, 8, 16, 128>}, {transform_indices = @transform_5, window_bounds = array<i64: 1, 1, 2, 128>}]} {
    %c1_i32 = arith.constant 1 : i32
    %0 = arith.andi %arg1, %c1_i32 : i32
    %c0_i32 = arith.constant 0 : i32
    %1 = arith.cmpi eq, %arg1, %c0_i32 : i32
    %2 = arith.extui %1 : i1 to i32
    %c0_i32_0 = arith.constant 0 : i32
    %3 = arith.cmpi ne, %2, %c0_i32_0 : i32
    scf.if %3 {
      %c8_i32_22 = arith.constant 8 : i32
      %53 = arith.muli %arg1, %c8_i32_22 : i32
      %54 = tpu.assume_multiple %53, 8 : i32
      %c0_i32_23 = arith.constant 0 : i32
      %c0_i32_24 = arith.constant 0 : i32
      %55 = tpu.memref_slice %arg2[%arg0, %54, %c0_i32_23, %c0_i32_24] : memref<2x18x18x128xf32, #tpu.memory_space<any>> -> memref<1x10x18x128xf32, #tpu.memory_space<any>>
      %56 = tpu.memref_squeeze %55 : memref<1x10x18x128xf32, #tpu.memory_space<any>> -> memref<10x18x128xf32, #tpu.memory_space<any>>
      %c0_i32_25 = arith.constant 0 : i32
      %c0_i32_26 = arith.constant 0 : i32
      %c0_i32_27 = arith.constant 0 : i32
      %57 = tpu.memref_slice %arg8[%0, %c0_i32_25, %c0_i32_26, %c0_i32_27] : memref<2x10x18x128xf32, #tpu.memory_space<vmem>> -> memref<1x10x18x128xf32, #tpu.memory_space<vmem>>
      %58 = tpu.memref_squeeze %57 : memref<1x10x18x128xf32, #tpu.memory_space<vmem>> -> memref<10x18x128xf32, #tpu.memory_space<vmem>>
      %59 = tpu.memref_slice %arg9[%0] : memref<2x!tpu.dma_semaphore, #tpu.memory_space<semaphore_mem>> -> memref<1x!tpu.dma_semaphore, #tpu.memory_space<semaphore_mem>>
      %60 = tpu.memref_squeeze %59 : memref<1x!tpu.dma_semaphore, #tpu.memory_space<semaphore_mem>> -> memref<!tpu.dma_semaphore, #tpu.memory_space<semaphore_mem>>
      tpu.enqueue_dma source(%56 : memref<10x18x128xf32, #tpu.memory_space<any>>) target(%58 : memref<10x18x128xf32, #tpu.memory_space<vmem>>) target_semaphore(%60 : memref<!tpu.dma_semaphore, #tpu.memory_space<semaphore_mem>>)
    } else {
    }
    %c8_i32 = arith.constant 8 : i32
    %4 = arith.muli %arg1, %c8_i32 : i32
    %5 = tpu.assume_multiple %4, 8 : i32
    %c0_i32_1 = arith.constant 0 : i32
    %c0_i32_2 = arith.constant 0 : i32
    %6 = tpu.memref_slice %arg2[%arg0, %5, %c0_i32_1, %c0_i32_2] : memref<2x18x18x128xf32, #tpu.memory_space<any>> -> memref<1x10x18x128xf32, #tpu.memory_space<any>>
    %7 = tpu.memref_squeeze %6 : memref<1x10x18x128xf32, #tpu.memory_space<any>> -> memref<10x18x128xf32, #tpu.memory_space<any>>
    %c0_i32_3 = arith.constant 0 : i32
    %c0_i32_4 = arith.constant 0 : i32
    %c0_i32_5 = arith.constant 0 : i32
    %8 = tpu.memref_slice %arg8[%0, %c0_i32_3, %c0_i32_4, %c0_i32_5] : memref<2x10x18x128xf32, #tpu.memory_space<vmem>> -> memref<1x10x18x128xf32, #tpu.memory_space<vmem>>
    %9 = tpu.memref_squeeze %8 : memref<1x10x18x128xf32, #tpu.memory_space<vmem>> -> memref<10x18x128xf32, #tpu.memory_space<vmem>>
    %10 = tpu.memref_slice %arg9[%0] : memref<2x!tpu.dma_semaphore, #tpu.memory_space<semaphore_mem>> -> memref<1x!tpu.dma_semaphore, #tpu.memory_space<semaphore_mem>>
    %11 = tpu.memref_squeeze %10 : memref<1x!tpu.dma_semaphore, #tpu.memory_space<semaphore_mem>> -> memref<!tpu.dma_semaphore, #tpu.memory_space<semaphore_mem>>
    tpu.wait_dma2 semaphore(%11 : memref<!tpu.dma_semaphore, #tpu.memory_space<semaphore_mem>>) src(%7 : memref<10x18x128xf32, #tpu.memory_space<any>>) dst(%9 : memref<10x18x128xf32, #tpu.memory_space<vmem>>)
    %c1_i32_6 = arith.constant 1 : i32
    %12 = arith.addi %arg1, %c1_i32_6 : i32
    %c2_i32 = arith.constant 2 : i32
    %13 = arith.cmpi slt, %12, %c2_i32 : i32
    %14 = arith.extui %13 : i1 to i32
    %c0_i32_7 = arith.constant 0 : i32
    %15 = arith.cmpi ne, %14, %c0_i32_7 : i32
    scf.if %15 {
      %c1_i32_22 = arith.constant 1 : i32
      %53 = arith.addi %arg1, %c1_i32_22 : i32
      %c1_i32_23 = arith.constant 1 : i32
      %54 = arith.subi %c1_i32_23, %0 : i32
      %c8_i32_24 = arith.constant 8 : i32
      %55 = arith.muli %53, %c8_i32_24 : i32
      %56 = tpu.assume_multiple %55, 8 : i32
      %c0_i32_25 = arith.constant 0 : i32
      %c0_i32_26 = arith.constant 0 : i32
      %57 = tpu.memref_slice %arg2[%arg0, %56, %c0_i32_25, %c0_i32_26] : memref<2x18x18x128xf32, #tpu.memory_space<any>> -> memref<1x10x18x128xf32, #tpu.memory_space<any>>
      %58 = tpu.memref_squeeze %57 : memref<1x10x18x128xf32, #tpu.memory_space<any>> -> memref<10x18x128xf32, #tpu.memory_space<any>>
      %c0_i32_27 = arith.constant 0 : i32
      %c0_i32_28 = arith.constant 0 : i32
      %c0_i32_29 = arith.constant 0 : i32
      %59 = tpu.memref_slice %arg8[%54, %c0_i32_27, %c0_i32_28, %c0_i32_29] : memref<2x10x18x128xf32, #tpu.memory_space<vmem>> -> memref<1x10x18x128xf32, #tpu.memory_space<vmem>>
      %60 = tpu.memref_squeeze %59 : memref<1x10x18x128xf32, #tpu.memory_space<vmem>> -> memref<10x18x128xf32, #tpu.memory_space<vmem>>
      %61 = tpu.memref_slice %arg9[%54] : memref<2x!tpu.dma_semaphore, #tpu.memory_space<semaphore_mem>> -> memref<1x!tpu.dma_semaphore, #tpu.memory_space<semaphore_mem>>
      %62 = tpu.memref_squeeze %61 : memref<1x!tpu.dma_semaphore, #tpu.memory_space<semaphore_mem>> -> memref<!tpu.dma_semaphore, #tpu.memory_space<semaphore_mem>>
      tpu.enqueue_dma source(%58 : memref<10x18x128xf32, #tpu.memory_space<any>>) target(%60 : memref<10x18x128xf32, #tpu.memory_space<vmem>>) target_semaphore(%62 : memref<!tpu.dma_semaphore, #tpu.memory_space<semaphore_mem>>)
    } else {
    }
    %16 = arith.index_cast %0 : i32 to index
    %c0 = arith.constant 0 : index
    %c0_8 = arith.constant 0 : index
    %c0_9 = arith.constant 0 : index
    %17 = vector.load %arg8[%16, %c0, %c0_8, %c0_9] : memref<2x10x18x128xf32, #tpu.memory_space<vmem>>, vector<1x10x18x128xf32>
    %18 = vector.shape_cast %17 : vector<1x10x18x128xf32> to vector<10x18x128xf32>
    %19 = vector.extract_strided_slice %18 {offsets = [0, 0, 0], sizes = [8, 16, 128], strides = [1, 1, 1]} : vector<10x18x128xf32> to vector<8x16x128xf32>
    %20 = vector.shape_cast %19 : vector<8x16x128xf32> to vector<128x128xf32>
    %21 = vector.extract_strided_slice %18 {offsets = [0, 1, 0], sizes = [8, 16, 128], strides = [1, 1, 1]} : vector<10x18x128xf32> to vector<8x16x128xf32>
    %22 = vector.shape_cast %21 : vector<8x16x128xf32> to vector<128x128xf32>
    %23 = vector.extract_strided_slice %18 {offsets = [0, 2, 0], sizes = [8, 16, 128], strides = [1, 1, 1]} : vector<10x18x128xf32> to vector<8x16x128xf32>
    %24 = vector.shape_cast %23 : vector<8x16x128xf32> to vector<128x128xf32>
    %25 = vector.extract_strided_slice %18 {offsets = [1, 0, 0], sizes = [8, 16, 128], strides = [1, 1, 1]} : vector<10x18x128xf32> to vector<8x16x128xf32>
    %26 = vector.shape_cast %25 : vector<8x16x128xf32> to vector<128x128xf32>
    %27 = vector.extract_strided_slice %18 {offsets = [1, 1, 0], sizes = [8, 16, 128], strides = [1, 1, 1]} : vector<10x18x128xf32> to vector<8x16x128xf32>
    %28 = vector.shape_cast %27 : vector<8x16x128xf32> to vector<128x128xf32>
    %29 = vector.extract_strided_slice %18 {offsets = [1, 2, 0], sizes = [8, 16, 128], strides = [1, 1, 1]} : vector<10x18x128xf32> to vector<8x16x128xf32>
    %30 = vector.shape_cast %29 : vector<8x16x128xf32> to vector<128x128xf32>
    %31 = vector.extract_strided_slice %18 {offsets = [2, 0, 0], sizes = [8, 16, 128], strides = [1, 1, 1]} : vector<10x18x128xf32> to vector<8x16x128xf32>
    %32 = vector.shape_cast %31 : vector<8x16x128xf32> to vector<128x128xf32>
    %33 = vector.extract_strided_slice %18 {offsets = [2, 1, 0], sizes = [8, 16, 128], strides = [1, 1, 1]} : vector<10x18x128xf32> to vector<8x16x128xf32>
    %34 = vector.shape_cast %33 : vector<8x16x128xf32> to vector<128x128xf32>
    %35 = vector.extract_strided_slice %18 {offsets = [2, 2, 0], sizes = [8, 16, 128], strides = [1, 1, 1]} : vector<10x18x128xf32> to vector<8x16x128xf32>
    %36 = vector.shape_cast %35 : vector<8x16x128xf32> to vector<128x128xf32>
    %37 = tpu.concatenate %20, %22, %24, %26, %28, %30, %32, %34, %36 in 1 : vector<128x128xf32>, vector<128x128xf32>, vector<128x128xf32>, vector<128x128xf32>, vector<128x128xf32>, vector<128x128xf32>, vector<128x128xf32>, vector<128x128xf32>, vector<128x128xf32> -> vector<128x1152xf32>
    %c0_10 = arith.constant 0 : index
    %c0_11 = arith.constant 0 : index
    %38 = vector.load %arg3[%c0_10, %c0_11] : memref<1152x128xf32, #tpu.memory_space<vmem>>, vector<1152x128xf32>
    %cst = arith.constant dense<0.000000e+00> : vector<128x128xf32>
    %39 = tpu.matmul %37, %38, %cst {dimension_numbers = #tpu.dot_dimension_numbers<[1], [0], [0], [1], [0, 0, 1, 1], [], []>} : vector<128x1152xf32>, vector<1152x128xf32>, vector<128x128xf32> -> vector<128x128xf32>
    %40 = vector.shape_cast %39 : vector<128x128xf32> to vector<8x16x128xf32>
    %c0_12 = arith.constant 0 : index
    %c0_13 = arith.constant 0 : index
    %c0_14 = arith.constant 0 : index
    %c0_15 = arith.constant 0 : index
    %41 = vector.load %arg6[%c0_12, %c0_13, %c0_14, %c0_15] : memref<1x8x16x128xf32, #tpu.memory_space<vmem>>, vector<1x8x16x128xf32>
    %42 = vector.shape_cast %41 : vector<1x8x16x128xf32> to vector<8x16x128xf32>
    %43 = vector.shape_cast %40 : vector<8x16x128xf32> to vector<1x8x16x128xf32>
    tpu.vector_store %arg6[%c0_12, %c0_13, %c0_14, %c0_15], %43 {strides = array<i32>} : memref<1x8x16x128xf32, #tpu.memory_space<vmem>>, vector<1x8x16x128xf32>,
    %cst_16 = arith.constant dense<0.000000e+00> : vector<128xf32>
    %44 = vector.multi_reduction <add>, %39, %cst_16 [0] : vector<128x128xf32> to vector<128xf32>
    %45 = vector.shape_cast %44 : vector<128xf32> to vector<1x128xf32>
    %46 = arith.mulf %39, %39 : vector<128x128xf32>
    %cst_17 = arith.constant dense<0.000000e+00> : vector<128xf32>
    %47 = vector.multi_reduction <add>, %46, %cst_17 [0] : vector<128x128xf32> to vector<128xf32>
    %48 = vector.shape_cast %47 : vector<128xf32> to vector<1x128xf32>
    %49 = tpu.concatenate %45, %48 in 0 : vector<1x128xf32>, vector<1x128xf32> -> vector<2x128xf32>
    %c0_18 = arith.constant 0 : index
    %c0_19 = arith.constant 0 : index
    %c0_20 = arith.constant 0 : index
    %c0_21 = arith.constant 0 : index
    %50 = vector.load %arg7[%c0_18, %c0_19, %c0_20, %c0_21] : memref<1x1x2x128xf32, #tpu.memory_space<vmem>>, vector<1x1x2x128xf32>
    %51 = vector.shape_cast %50 : vector<1x1x2x128xf32> to vector<2x128xf32>
    %52 = vector.shape_cast %49 : vector<2x128xf32> to vector<1x1x2x128xf32>
    tpu.vector_store %arg7[%c0_18, %c0_19, %c0_20, %c0_21], %52 {strides = array<i32>} : memref<1x1x2x128xf32, #tpu.memory_space<vmem>>, vector<1x1x2x128xf32>,
    return
  }
  func.func @transform_1(%arg0: i32, %arg1: i32) -> (i32, i32) {
    %c0_i32 = arith.constant 0 : i32
    %c0_i32_0 = arith.constant 0 : i32
    %c0_i32_1 = arith.constant 0 : i32
    return %c0_i32, %c0_i32_0 : i32, i32
  }
  func.func @transform_2(%arg0: i32, %arg1: i32) -> (i32, i32) {
    %c0_i32 = arith.constant 0 : i32
    %c0_i32_0 = arith.constant 0 : i32
    %c0_i32_1 = arith.constant 0 : i32
    return %c0_i32, %c0_i32_0 : i32, i32
  }
  func.func @transform_3(%arg0: i32, %arg1: i32) -> (i32, i32) {
    %c0_i32 = arith.constant 0 : i32
    %c0_i32_0 = arith.constant 0 : i32
    %c0_i32_1 = arith.constant 0 : i32
    return %c0_i32, %c0_i32_0 : i32, i32
  }
  func.func @transform_4(%arg0: i32, %arg1: i32) -> (i32, i32, i32, i32) {
    %c0_i32 = arith.constant 0 : i32
    %c0_i32_0 = arith.constant 0 : i32
    %c0_i32_1 = arith.constant 0 : i32
    return %arg0, %arg1, %c0_i32, %c0_i32_0 : i32, i32, i32, i32
  }
  func.func @transform_5(%arg0: i32, %arg1: i32) -> (i32, i32, i32, i32) {
    %c0_i32 = arith.constant 0 : i32
    %c0_i32_0 = arith.constant 0 : i32
    %c0_i32_1 = arith.constant 0 : i32
    return %arg0, %arg1, %c0_i32, %c0_i32_0 : i32, i32, i32, i32
  }
}

module attributes {stable_mosaic.version = 11 : i64} {
  func.func @_bn_relu_kernel(%arg0: i32, %arg1: i32, %arg2: memref<1x8x16x128xf32, #tpu.memory_space<vmem>>, %arg3: memref<1x128xf32, #tpu.memory_space<vmem>>, %arg4: memref<1x128xf32, #tpu.memory_space<vmem>>, %arg5: memref<1x8x16x128xf32, #tpu.memory_space<vmem>>) attributes {dimension_semantics = [#tpu.dimension_semantics<parallel>, #tpu.dimension_semantics<parallel>], iteration_bounds = array<i64: 2, 2>, scalar_prefetch = 0 : i64, scratch_operands = 0 : i64, tpu.core_type = #tpu.core_type<tc>, window_params = [{transform_indices = @transform_0, window_bounds = array<i64: 1, 8, 16, 128>}, {pipeline_mode = #tpu.pipeline_mode<synchronous>, transform_indices = @transform_1, window_bounds = array<i64: 1, 128>}, {pipeline_mode = #tpu.pipeline_mode<synchronous>, transform_indices = @transform_2, window_bounds = array<i64: 1, 128>}, {transform_indices = @transform_3, window_bounds = array<i64: 1, 8, 16, 128>}]} {
    %c0 = arith.constant 0 : index
    %c0_0 = arith.constant 0 : index
    %c0_1 = arith.constant 0 : index
    %c0_2 = arith.constant 0 : index
    %0 = vector.load %arg2[%c0, %c0_0, %c0_1, %c0_2] : memref<1x8x16x128xf32, #tpu.memory_space<vmem>>, vector<1x8x16x128xf32>
    %c0_3 = arith.constant 0 : index
    %c0_4 = arith.constant 0 : index
    %1 = vector.load %arg3[%c0_3, %c0_4] : memref<1x128xf32, #tpu.memory_space<vmem>>, vector<1x128xf32>
    %2 = vector.shape_cast %1 : vector<1x128xf32> to vector<128xf32>
    %3 = vector.shape_cast %2 : vector<128xf32> to vector<1x1x1x128xf32>
    %4 = vector.broadcast %3 : vector<1x1x1x128xf32> to vector<1x8x16x128xf32>
    %5 = arith.mulf %0, %4 : vector<1x8x16x128xf32>
    %c0_5 = arith.constant 0 : index
    %c0_6 = arith.constant 0 : index
    %6 = vector.load %arg4[%c0_5, %c0_6] : memref<1x128xf32, #tpu.memory_space<vmem>>, vector<1x128xf32>
    %7 = vector.shape_cast %6 : vector<1x128xf32> to vector<128xf32>
    %8 = vector.shape_cast %7 : vector<128xf32> to vector<1x1x1x128xf32>
    %9 = vector.broadcast %8 : vector<1x1x1x128xf32> to vector<1x8x16x128xf32>
    %10 = arith.addf %5, %9 : vector<1x8x16x128xf32>
    %cst = arith.constant 0.000000e+00 : f32
    %11 = vector.broadcast %cst : f32 to vector<1x8x16x128xf32>
    %12 = arith.maximumf %10, %11 : vector<1x8x16x128xf32>
    %c0_7 = arith.constant 0 : index
    %c0_8 = arith.constant 0 : index
    %c0_9 = arith.constant 0 : index
    %c0_10 = arith.constant 0 : index
    %13 = vector.load %arg5[%c0_7, %c0_8, %c0_9, %c0_10] : memref<1x8x16x128xf32, #tpu.memory_space<vmem>>, vector<1x8x16x128xf32>
    tpu.vector_store %arg5[%c0_7, %c0_8, %c0_9, %c0_10], %12 {strides = array<i32>} : memref<1x8x16x128xf32, #tpu.memory_space<vmem>>, vector<1x8x16x128xf32>,
    return
  }
  func.func @transform_0(%arg0: i32, %arg1: i32) -> (i32, i32, i32, i32) {
    %c0_i32 = arith.constant 0 : i32
    %c0_i32_0 = arith.constant 0 : i32
    %c0_i32_1 = arith.constant 0 : i32
    return %arg0, %arg1, %c0_i32, %c0_i32_0 : i32, i32, i32, i32
  }
  func.func @transform_1(%arg0: i32, %arg1: i32) -> (i32, i32) {
    %c0_i32 = arith.constant 0 : i32
    %c0_i32_0 = arith.constant 0 : i32
    %c0_i32_1 = arith.constant 0 : i32
    return %c0_i32, %c0_i32_0 : i32, i32
  }
  func.func @transform_2(%arg0: i32, %arg1: i32) -> (i32, i32) {
    %c0_i32 = arith.constant 0 : i32
    %c0_i32_0 = arith.constant 0 : i32
    %c0_i32_1 = arith.constant 0 : i32
    return %c0_i32, %c0_i32_0 : i32, i32
  }
  func.func @transform_3(%arg0: i32, %arg1: i32) -> (i32, i32, i32, i32) {
    %c0_i32 = arith.constant 0 : i32
    %c0_i32_0 = arith.constant 0 : i32
    %c0_i32_1 = arith.constant 0 : i32
    return %arg0, %arg1, %c0_i32, %c0_i32_0 : i32, i32, i32, i32
  }
}

module attributes {stable_mosaic.version = 11 : i64} {
  func.func @_conv3x3_kernel(%arg0: i32, %arg1: i32, %arg2: memref<2x18x18x128xf32, #tpu.memory_space<any>>, %arg3: memref<1152x128xf32, #tpu.memory_space<vmem>>, %arg4: memref<1x128xf32, #tpu.memory_space<vmem>>, %arg5: memref<1x128xf32, #tpu.memory_space<vmem>>, %arg6: memref<1x8x16x128xf32, #tpu.memory_space<vmem>>, %arg7: memref<1x1x2x128xf32, #tpu.memory_space<vmem>>, %arg8: memref<2x10x18x128xf32, #tpu.memory_space<vmem>>, %arg9: memref<2x!tpu.dma_semaphore, #tpu.memory_space<semaphore_mem>>) attributes {dimension_semantics = [#tpu.dimension_semantics<parallel>, #tpu.dimension_semantics<arbitrary>], iteration_bounds = array<i64: 2, 2>, scalar_prefetch = 0 : i64, scratch_operands = 2 : i64, tpu.core_type = #tpu.core_type<tc>, window_params = [{}, {pipeline_mode = #tpu.pipeline_mode<synchronous>, transform_indices = @transform_1, window_bounds = array<i64: 1152, 128>}, {pipeline_mode = #tpu.pipeline_mode<synchronous>, transform_indices = @transform_2, window_bounds = array<i64: 1, 128>}, {pipeline_mode = #tpu.pipeline_mode<synchronous>, transform_indices = @transform_3, window_bounds = array<i64: 1, 128>}, {transform_indices = @transform_4, window_bounds = array<i64: 1, 8, 16, 128>}, {transform_indices = @transform_5, window_bounds = array<i64: 1, 1, 2, 128>}]} {
    %c1_i32 = arith.constant 1 : i32
    %0 = arith.andi %arg1, %c1_i32 : i32
    %c0_i32 = arith.constant 0 : i32
    %1 = arith.cmpi eq, %arg1, %c0_i32 : i32
    %2 = arith.extui %1 : i1 to i32
    %c0_i32_0 = arith.constant 0 : i32
    %3 = arith.cmpi ne, %2, %c0_i32_0 : i32
    scf.if %3 {
      %c8_i32_31 = arith.constant 8 : i32
      %84 = arith.muli %arg1, %c8_i32_31 : i32
      %85 = tpu.assume_multiple %84, 8 : i32
      %c0_i32_32 = arith.constant 0 : i32
      %c0_i32_33 = arith.constant 0 : i32
      %86 = tpu.memref_slice %arg2[%arg0, %85, %c0_i32_32, %c0_i32_33] : memref<2x18x18x128xf32, #tpu.memory_space<any>> -> memref<1x10x18x128xf32, #tpu.memory_space<any>>
      %87 = tpu.memref_squeeze %86 : memref<1x10x18x128xf32, #tpu.memory_space<any>> -> memref<10x18x128xf32, #tpu.memory_space<any>>
      %c0_i32_34 = arith.constant 0 : i32
      %c0_i32_35 = arith.constant 0 : i32
      %c0_i32_36 = arith.constant 0 : i32
      %88 = tpu.memref_slice %arg8[%0, %c0_i32_34, %c0_i32_35, %c0_i32_36] : memref<2x10x18x128xf32, #tpu.memory_space<vmem>> -> memref<1x10x18x128xf32, #tpu.memory_space<vmem>>
      %89 = tpu.memref_squeeze %88 : memref<1x10x18x128xf32, #tpu.memory_space<vmem>> -> memref<10x18x128xf32, #tpu.memory_space<vmem>>
      %90 = tpu.memref_slice %arg9[%0] : memref<2x!tpu.dma_semaphore, #tpu.memory_space<semaphore_mem>> -> memref<1x!tpu.dma_semaphore, #tpu.memory_space<semaphore_mem>>
      %91 = tpu.memref_squeeze %90 : memref<1x!tpu.dma_semaphore, #tpu.memory_space<semaphore_mem>> -> memref<!tpu.dma_semaphore, #tpu.memory_space<semaphore_mem>>
      tpu.enqueue_dma source(%87 : memref<10x18x128xf32, #tpu.memory_space<any>>) target(%89 : memref<10x18x128xf32, #tpu.memory_space<vmem>>) target_semaphore(%91 : memref<!tpu.dma_semaphore, #tpu.memory_space<semaphore_mem>>)
    } else {
    }
    %c8_i32 = arith.constant 8 : i32
    %4 = arith.muli %arg1, %c8_i32 : i32
    %5 = tpu.assume_multiple %4, 8 : i32
    %c0_i32_1 = arith.constant 0 : i32
    %c0_i32_2 = arith.constant 0 : i32
    %6 = tpu.memref_slice %arg2[%arg0, %5, %c0_i32_1, %c0_i32_2] : memref<2x18x18x128xf32, #tpu.memory_space<any>> -> memref<1x10x18x128xf32, #tpu.memory_space<any>>
    %7 = tpu.memref_squeeze %6 : memref<1x10x18x128xf32, #tpu.memory_space<any>> -> memref<10x18x128xf32, #tpu.memory_space<any>>
    %c0_i32_3 = arith.constant 0 : i32
    %c0_i32_4 = arith.constant 0 : i32
    %c0_i32_5 = arith.constant 0 : i32
    %8 = tpu.memref_slice %arg8[%0, %c0_i32_3, %c0_i32_4, %c0_i32_5] : memref<2x10x18x128xf32, #tpu.memory_space<vmem>> -> memref<1x10x18x128xf32, #tpu.memory_space<vmem>>
    %9 = tpu.memref_squeeze %8 : memref<1x10x18x128xf32, #tpu.memory_space<vmem>> -> memref<10x18x128xf32, #tpu.memory_space<vmem>>
    %10 = tpu.memref_slice %arg9[%0] : memref<2x!tpu.dma_semaphore, #tpu.memory_space<semaphore_mem>> -> memref<1x!tpu.dma_semaphore, #tpu.memory_space<semaphore_mem>>
    %11 = tpu.memref_squeeze %10 : memref<1x!tpu.dma_semaphore, #tpu.memory_space<semaphore_mem>> -> memref<!tpu.dma_semaphore, #tpu.memory_space<semaphore_mem>>
    tpu.wait_dma2 semaphore(%11 : memref<!tpu.dma_semaphore, #tpu.memory_space<semaphore_mem>>) src(%7 : memref<10x18x128xf32, #tpu.memory_space<any>>) dst(%9 : memref<10x18x128xf32, #tpu.memory_space<vmem>>)
    %c1_i32_6 = arith.constant 1 : i32
    %12 = arith.addi %arg1, %c1_i32_6 : i32
    %c2_i32 = arith.constant 2 : i32
    %13 = arith.cmpi slt, %12, %c2_i32 : i32
    %14 = arith.extui %13 : i1 to i32
    %c0_i32_7 = arith.constant 0 : i32
    %15 = arith.cmpi ne, %14, %c0_i32_7 : i32
    scf.if %15 {
      %c1_i32_31 = arith.constant 1 : i32
      %84 = arith.addi %arg1, %c1_i32_31 : i32
      %c1_i32_32 = arith.constant 1 : i32
      %85 = arith.subi %c1_i32_32, %0 : i32
      %c8_i32_33 = arith.constant 8 : i32
      %86 = arith.muli %84, %c8_i32_33 : i32
      %87 = tpu.assume_multiple %86, 8 : i32
      %c0_i32_34 = arith.constant 0 : i32
      %c0_i32_35 = arith.constant 0 : i32
      %88 = tpu.memref_slice %arg2[%arg0, %87, %c0_i32_34, %c0_i32_35] : memref<2x18x18x128xf32, #tpu.memory_space<any>> -> memref<1x10x18x128xf32, #tpu.memory_space<any>>
      %89 = tpu.memref_squeeze %88 : memref<1x10x18x128xf32, #tpu.memory_space<any>> -> memref<10x18x128xf32, #tpu.memory_space<any>>
      %c0_i32_36 = arith.constant 0 : i32
      %c0_i32_37 = arith.constant 0 : i32
      %c0_i32_38 = arith.constant 0 : i32
      %90 = tpu.memref_slice %arg8[%85, %c0_i32_36, %c0_i32_37, %c0_i32_38] : memref<2x10x18x128xf32, #tpu.memory_space<vmem>> -> memref<1x10x18x128xf32, #tpu.memory_space<vmem>>
      %91 = tpu.memref_squeeze %90 : memref<1x10x18x128xf32, #tpu.memory_space<vmem>> -> memref<10x18x128xf32, #tpu.memory_space<vmem>>
      %92 = tpu.memref_slice %arg9[%85] : memref<2x!tpu.dma_semaphore, #tpu.memory_space<semaphore_mem>> -> memref<1x!tpu.dma_semaphore, #tpu.memory_space<semaphore_mem>>
      %93 = tpu.memref_squeeze %92 : memref<1x!tpu.dma_semaphore, #tpu.memory_space<semaphore_mem>> -> memref<!tpu.dma_semaphore, #tpu.memory_space<semaphore_mem>>
      tpu.enqueue_dma source(%89 : memref<10x18x128xf32, #tpu.memory_space<any>>) target(%91 : memref<10x18x128xf32, #tpu.memory_space<vmem>>) target_semaphore(%93 : memref<!tpu.dma_semaphore, #tpu.memory_space<semaphore_mem>>)
    } else {
    }
    %16 = arith.index_cast %0 : i32 to index
    %c0 = arith.constant 0 : index
    %c0_8 = arith.constant 0 : index
    %c0_9 = arith.constant 0 : index
    %17 = vector.load %arg8[%16, %c0, %c0_8, %c0_9] : memref<2x10x18x128xf32, #tpu.memory_space<vmem>>, vector<1x10x18x128xf32>
    %18 = vector.shape_cast %17 : vector<1x10x18x128xf32> to vector<10x18x128xf32>
    %c0_10 = arith.constant 0 : index
    %c0_11 = arith.constant 0 : index
    %19 = vector.load %arg4[%c0_10, %c0_11] : memref<1x128xf32, #tpu.memory_space<vmem>>, vector<1x128xf32>
    %20 = vector.shape_cast %19 : vector<1x128xf32> to vector<128xf32>
    %21 = vector.shape_cast %20 : vector<128xf32> to vector<1x1x128xf32>
    %22 = vector.broadcast %21 : vector<1x1x128xf32> to vector<10x18x128xf32>
    %23 = arith.mulf %18, %22 : vector<10x18x128xf32>
    %c0_12 = arith.constant 0 : index
    %c0_13 = arith.constant 0 : index
    %24 = vector.load %arg5[%c0_12, %c0_13] : memref<1x128xf32, #tpu.memory_space<vmem>>, vector<1x128xf32>
    %25 = vector.shape_cast %24 : vector<1x128xf32> to vector<128xf32>
    %26 = vector.shape_cast %25 : vector<128xf32> to vector<1x1x128xf32>
    %27 = vector.broadcast %26 : vector<1x1x128xf32> to vector<10x18x128xf32>
    %28 = arith.addf %23, %27 : vector<10x18x128xf32>
    %cst = arith.constant 0.000000e+00 : f32
    %29 = vector.broadcast %cst : f32 to vector<10x18x128xf32>
    %30 = arith.maximumf %28, %29 : vector<10x18x128xf32>
    %31 = tpu.iota {dimensions = array<i32: 0>} : vector<10x18x1xi32>
    %32 = vector.broadcast %5 : i32 to vector<10x18x1xi32>
    %33 = arith.addi %31, %32 : vector<10x18x1xi32>
    %34 = tpu.iota {dimensions = array<i32: 1>} : vector<10x18x1xi32>
    %c0_i32_14 = arith.constant 0 : i32
    %35 = vector.broadcast %c0_i32_14 : i32 to vector<10x18x1xi32>
    %36 = arith.cmpi sgt, %33, %35 : vector<10x18x1xi32>
    %c17_i32 = arith.constant 17 : i32
    %37 = vector.broadcast %c17_i32 : i32 to vector<10x18x1xi32>
    %38 = arith.cmpi slt, %33, %37 : vector<10x18x1xi32>
    %39 = arith.andi %36, %38 : vector<10x18x1xi1>
    %c0_i32_15 = arith.constant 0 : i32
    %40 = vector.broadcast %c0_i32_15 : i32 to vector<10x18x1xi32>
    %41 = arith.cmpi sgt, %34, %40 : vector<10x18x1xi32>
    %42 = arith.andi %39, %41 : vector<10x18x1xi1>
    %c17_i32_16 = arith.constant 17 : i32
    %43 = vector.broadcast %c17_i32_16 : i32 to vector<10x18x1xi32>
    %44 = arith.cmpi slt, %34, %43 : vector<10x18x1xi32>
    %45 = arith.andi %42, %44 : vector<10x18x1xi1>
    %cst_17 = arith.constant 0.000000e+00 : f32
    %46 = vector.shape_cast %45 : vector<10x18x1xi1> to vector<10x18x1xi1>
    %47 = vector.broadcast %46 : vector<10x18x1xi1> to vector<10x18x128xi1>
    %48 = vector.broadcast %cst_17 : f32 to vector<10x18x128xf32>
    %49 = arith.select %47, %30, %48 : vector<10x18x128xi1>, vector<10x18x128xf32>
    %50 = vector.extract_strided_slice %49 {offsets = [0, 0, 0], sizes = [8, 16, 128], strides = [1, 1, 1]} : vector<10x18x128xf32> to vector<8x16x128xf32>
    %51 = vector.shape_cast %50 : vector<8x16x128xf32> to vector<128x128xf32>
    %52 = vector.extract_strided_slice %49 {offsets = [0, 1, 0], sizes = [8, 16, 128], strides = [1, 1, 1]} : vector<10x18x128xf32> to vector<8x16x128xf32>
    %53 = vector.shape_cast %52 : vector<8x16x128xf32> to vector<128x128xf32>
    %54 = vector.extract_strided_slice %49 {offsets = [0, 2, 0], sizes = [8, 16, 128], strides = [1, 1, 1]} : vector<10x18x128xf32> to vector<8x16x128xf32>
    %55 = vector.shape_cast %54 : vector<8x16x128xf32> to vector<128x128xf32>
    %56 = vector.extract_strided_slice %49 {offsets = [1, 0, 0], sizes = [8, 16, 128], strides = [1, 1, 1]} : vector<10x18x128xf32> to vector<8x16x128xf32>
    %57 = vector.shape_cast %56 : vector<8x16x128xf32> to vector<128x128xf32>
    %58 = vector.extract_strided_slice %49 {offsets = [1, 1, 0], sizes = [8, 16, 128], strides = [1, 1, 1]} : vector<10x18x128xf32> to vector<8x16x128xf32>
    %59 = vector.shape_cast %58 : vector<8x16x128xf32> to vector<128x128xf32>
    %60 = vector.extract_strided_slice %49 {offsets = [1, 2, 0], sizes = [8, 16, 128], strides = [1, 1, 1]} : vector<10x18x128xf32> to vector<8x16x128xf32>
    %61 = vector.shape_cast %60 : vector<8x16x128xf32> to vector<128x128xf32>
    %62 = vector.extract_strided_slice %49 {offsets = [2, 0, 0], sizes = [8, 16, 128], strides = [1, 1, 1]} : vector<10x18x128xf32> to vector<8x16x128xf32>
    %63 = vector.shape_cast %62 : vector<8x16x128xf32> to vector<128x128xf32>
    %64 = vector.extract_strided_slice %49 {offsets = [2, 1, 0], sizes = [8, 16, 128], strides = [1, 1, 1]} : vector<10x18x128xf32> to vector<8x16x128xf32>
    %65 = vector.shape_cast %64 : vector<8x16x128xf32> to vector<128x128xf32>
    %66 = vector.extract_strided_slice %49 {offsets = [2, 2, 0], sizes = [8, 16, 128], strides = [1, 1, 1]} : vector<10x18x128xf32> to vector<8x16x128xf32>
    %67 = vector.shape_cast %66 : vector<8x16x128xf32> to vector<128x128xf32>
    %68 = tpu.concatenate %51, %53, %55, %57, %59, %61, %63, %65, %67 in 1 : vector<128x128xf32>, vector<128x128xf32>, vector<128x128xf32>, vector<128x128xf32>, vector<128x128xf32>, vector<128x128xf32>, vector<128x128xf32>, vector<128x128xf32>, vector<128x128xf32> -> vector<128x1152xf32>
    %c0_18 = arith.constant 0 : index
    %c0_19 = arith.constant 0 : index
    %69 = vector.load %arg3[%c0_18, %c0_19] : memref<1152x128xf32, #tpu.memory_space<vmem>>, vector<1152x128xf32>
    %cst_20 = arith.constant dense<0.000000e+00> : vector<128x128xf32>
    %70 = tpu.matmul %68, %69, %cst_20 {dimension_numbers = #tpu.dot_dimension_numbers<[1], [0], [0], [1], [0, 0, 1, 1], [], []>} : vector<128x1152xf32>, vector<1152x128xf32>, vector<128x128xf32> -> vector<128x128xf32>
    %71 = vector.shape_cast %70 : vector<128x128xf32> to vector<8x16x128xf32>
    %c0_21 = arith.constant 0 : index
    %c0_22 = arith.constant 0 : index
    %c0_23 = arith.constant 0 : index
    %c0_24 = arith.constant 0 : index
    %72 = vector.load %arg6[%c0_21, %c0_22, %c0_23, %c0_24] : memref<1x8x16x128xf32, #tpu.memory_space<vmem>>, vector<1x8x16x128xf32>
    %73 = vector.shape_cast %72 : vector<1x8x16x128xf32> to vector<8x16x128xf32>
    %74 = vector.shape_cast %71 : vector<8x16x128xf32> to vector<1x8x16x128xf32>
    tpu.vector_store %arg6[%c0_21, %c0_22, %c0_23, %c0_24], %74 {strides = array<i32>} : memref<1x8x16x128xf32, #tpu.memory_space<vmem>>, vector<1x8x16x128xf32>,
    %cst_25 = arith.constant dense<0.000000e+00> : vector<128xf32>
    %75 = vector.multi_reduction <add>, %70, %cst_25 [0] : vector<128x128xf32> to vector<128xf32>
    %76 = vector.shape_cast %75 : vector<128xf32> to vector<1x128xf32>
    %77 = arith.mulf %70, %70 : vector<128x128xf32>
    %cst_26 = arith.constant dense<0.000000e+00> : vector<128xf32>
    %78 = vector.multi_reduction <add>, %77, %cst_26 [0] : vector<128x128xf32> to vector<128xf32>
    %79 = vector.shape_cast %78 : vector<128xf32> to vector<1x128xf32>
    %80 = tpu.concatenate %76, %79 in 0 : vector<1x128xf32>, vector<1x128xf32> -> vector<2x128xf32>
    %c0_27 = arith.constant 0 : index
    %c0_28 = arith.constant 0 : index
    %c0_29 = arith.constant 0 : index
    %c0_30 = arith.constant 0 : index
    %81 = vector.load %arg7[%c0_27, %c0_28, %c0_29, %c0_30] : memref<1x1x2x128xf32, #tpu.memory_space<vmem>>, vector<1x1x2x128xf32>
    %82 = vector.shape_cast %81 : vector<1x1x2x128xf32> to vector<2x128xf32>
    %83 = vector.shape_cast %80 : vector<2x128xf32> to vector<1x1x2x128xf32>
    tpu.vector_store %arg7[%c0_27, %c0_28, %c0_29, %c0_30], %83 {strides = array<i32>} : memref<1x1x2x128xf32, #tpu.memory_space<vmem>>, vector<1x1x2x128xf32>,
    return
  }
  func.func @transform_1(%arg0: i32, %arg1: i32) -> (i32, i32) {
    %c0_i32 = arith.constant 0 : i32
    %c0_i32_0 = arith.constant 0 : i32
    %c0_i32_1 = arith.constant 0 : i32
    return %c0_i32, %c0_i32_0 : i32, i32
  }
  func.func @transform_2(%arg0: i32, %arg1: i32) -> (i32, i32) {
    %c0_i32 = arith.constant 0 : i32
    %c0_i32_0 = arith.constant 0 : i32
    %c0_i32_1 = arith.constant 0 : i32
    return %c0_i32, %c0_i32_0 : i32, i32
  }
  func.func @transform_3(%arg0: i32, %arg1: i32) -> (i32, i32) {
    %c0_i32 = arith.constant 0 : i32
    %c0_i32_0 = arith.constant 0 : i32
    %c0_i32_1 = arith.constant 0 : i32
    return %c0_i32, %c0_i32_0 : i32, i32
  }
  func.func @transform_4(%arg0: i32, %arg1: i32) -> (i32, i32, i32, i32) {
    %c0_i32 = arith.constant 0 : i32
    %c0_i32_0 = arith.constant 0 : i32
    %c0_i32_1 = arith.constant 0 : i32
    return %arg0, %arg1, %c0_i32, %c0_i32_0 : i32, i32, i32, i32
  }
  func.func @transform_5(%arg0: i32, %arg1: i32) -> (i32, i32, i32, i32) {
    %c0_i32 = arith.constant 0 : i32
    %c0_i32_0 = arith.constant 0 : i32
    %c0_i32_1 = arith.constant 0 : i32
    return %arg0, %arg1, %c0_i32, %c0_i32_0 : i32, i32, i32, i32
  }
}

</mosaic_0001>

<llo_original>
// kernel: double_conv_forward.5
$region0: #{double_conv_forward.5}
  #allocation0 [shape = 'u32[]', space=smem, size = 0x4, offset = 0x4, fixed_abs, tag = 'smem constant byte address 0x4 - core index']
  #allocation1 [shape = 'u32[144,128]{1,0:T(1,128)}', space=vmem, size = 0x12000, scoped, tag = 'internal scratch']
  %s0 = inlined_call_operand.vmem [shape: f32[2,16,16,128], index: 0, kind: input, shape index: {}]
  %s1 = inlined_call_operand.vmem [shape: f32[1,128], index: 1, kind: input, shape index: {}]
  %s2 = inlined_call_operand.vmem [shape: f32[1,128], index: 2, kind: input, shape index: {}]
  %s3 = inlined_call_operand.vmem [shape: f32[2,16,16,128], index: 3, kind: output, shape index: {}]
  %s4 = sld [smem:[#allocation0]]
  $region45: #{double_conv_forward.5} parent=0
    _
  %s6 = ssub.s32 1, %s4
  %s7 = scalar_select 0, %s6, %s4
  loop: start=0, step=1, limit=6
  $region2: #{double_conv_forward.5} parent=0 // loop_pre_header
    _
  $region3: #{double_conv_forward.5} parent=0 // loop_header
    %s9 = sphi 0, %s13
    %p10 = scmp.ge.s32.totalorder %s9, 6
    %s16 = sphi 0, %s28
    %s17 = sphi 0, %s24
    %s18 = sphi 0, %s16
    %s19 = sphi 0, %s17
    %s20 = sphi 0, %s18
    %s21 = sphi 0, %s19
    %s33 = sphi 0, %s35
    %s36 = sphi 0, %s33
    %s37 = sphi 0, %s36
    %s53 = sphi 0, %s37
    %s57 = sphi 0, %s57
    %s59 = sphi 0, %s57
    %s60 = sphi 0, %s59
    %s74 = sphi 0, %s60
    %s78 = sphi 0, %s78
    %s80 = sphi 0, %s78
    %s81 = sphi 0, %s80
    %s95 = sphi 0, %s81
    %s103 = sphi 0, %s105
    %s106 = sphi 0, %s103
    %s107 = sphi 0, %s106
    %s123 = sphi 0, %s107
  $region4: #{double_conv_forward.5} parent=0 // loop_header_branch
    %12 = sbr.rel (%p10) target = $region8
  $region5: #{double_conv_forward.5} parent=0 // loop_body
    %s14 = ssub.s32 %s9, 1
    %s15 = ssub.s32 %s9, 2
    %s22 = sadd.s32 1, %s17
    %p23 = scmp.ge.s32.totalorder %s22, 2
    %s24 = scalar_select %p23, 0, %s22
    %s25 = sadd.s32 1, %s16
    %s26 = scalar_select %p23, %s25, %s16
    %p27 = scmp.ge.s32.totalorder %s26, 2
    %s28 = scalar_select %p27, 0, %s26
    %s29 = ssub.s32 %s16, %s28
    %s30 = ssub.s32 %s17, %s24
    %s31 = sor.u32 %s29, %s30
    %p32 = scmp.eq.s32.totalorder %s31, 0
    %s34 = sadd.s32 %s33, 1
    %s35 = scalar_select %p32, %s33, %s34
    %p38 = pneg %p32
    %p39 = scmp.eq.s32.totalorder %s9, 3
    %p40 = por %p38, %p39
    %p41 = scmp.ne.s32.totalorder %s33, %s36
    %p42 = scmp.eq.s32.totalorder %s9, 0
    %p43 = por %p41, %p42
    %p44 = scmp.ne.s32.totalorder %s33, %s36
    %p45 = scmp.eq.s32.totalorder %s14, 3
    %p46 = por %p44, %p45
    %p47 = scmp.ne.s32.totalorder %s36, %s37
    %p48 = scmp.eq.s32.totalorder %s14, 0
    %p49 = por %p47, %p48
    %p50 = scmp.ne.s32.totalorder %s36, %s37
    %p51 = scmp.eq.s32.totalorder %s15, 3
    %p52 = por %p50, %p51
    %p54 = scmp.ne.s32.totalorder %s37, %s53
    %p55 = scmp.eq.s32.totalorder %s15, 0
    %p56 = por %p54, %p55
    %s58 = sadd.s32 %s57, 1
    %p61 = scmp.eq.s32.totalorder %s9, 3
    %p62 = scmp.ne.s32.totalorder %s57, %s59
    %p63 = scmp.eq.s32.totalorder %s9, 0
    %p64 = por %p62, %p63
    %p65 = scmp.ne.s32.totalorder %s57, %s59
    %p66 = scmp.eq.s32.totalorder %s14, 3
    %p67 = por %p65, %p66
    %p68 = scmp.ne.s32.totalorder %s59, %s60
    %p69 = scmp.eq.s32.totalorder %s14, 0
    %p70 = por %p68, %p69
    %p71 = scmp.ne.s32.totalorder %s59, %s60
    %p72 = scmp.eq.s32.totalorder %s15, 3
    %p73 = por %p71, %p72
    %p75 = scmp.ne.s32.totalorder %s60, %s74
    %p76 = scmp.eq.s32.totalorder %s15, 0
    %p77 = por %p75, %p76
    %s79 = sadd.s32 %s78, 1
    %p82 = scmp.eq.s32.totalorder %s9, 3
    %p83 = scmp.ne.s32.totalorder %s78, %s80
    %p84 = scmp.eq.s32.totalorder %s9, 0
    %p85 = por %p83, %p84
    %p86 = scmp.ne.s32.totalorder %s78, %s80
    %p87 = scmp.eq.s32.totalorder %s14, 3
    %p88 = por %p86, %p87
    %p89 = scmp.ne.s32.totalorder %s80, %s81
    %p90 = scmp.eq.s32.totalorder %s14, 0
    %p91 = por %p89, %p90
    %p92 = scmp.ne.s32.totalorder %s80, %s81
    %p93 = scmp.eq.s32.totalorder %s15, 3
    %p94 = por %p92, %p93
    %p96 = scmp.ne.s32.totalorder %s81, %s95
    %p97 = scmp.eq.s32.totalorder %s15, 0
    %p98 = por %p96, %p97
    %s99 = ssub.s32 %s16, %s28
    %s100 = ssub.s32 %s17, %s24
    %s101 = sor.u32 %s99, %s100
    %p102 = scmp.eq.s32.totalorder %s101, 0
    %s104 = sadd.s32 %s103, 1
    %s105 = scalar_select %p102, %s103, %s104
    %p108 = pneg %p102
    %p109 = scmp.eq.s32.totalorder %s9, 3
    %p110 = por %p108, %p109
    %p111 = scmp.ne.s32.totalorder %s103, %s106
    %p112 = scmp.eq.s32.totalorder %s9, 0
    %p113 = por %p111, %p112
    %p114 = scmp.ne.s32.totalorder %s103, %s106
    %p115 = scmp.eq.s32.totalorder %s14, 3
    %p116 = por %p114, %p115
    %p117 = scmp.ne.s32.totalorder %s106, %s107
    %p118 = scmp.eq.s32.totalorder %s14, 0
    %p119 = por %p117, %p118
    %p120 = scmp.ne.s32.totalorder %s106, %s107
    %p121 = scmp.eq.s32.totalorder %s15, 3
    %p122 = por %p120, %p121
    %p124 = scmp.ne.s32.totalorder %s107, %s123
    %p125 = scmp.eq.s32.totalorder %s15, 0
    %p126 = por %p124, %p125
    %p127 = scmp.le.s32.totalorder 1, %s9
    %p128 = scmp.lt.s32.totalorder %s9, 5
    %p129 = pnand %p127, %p128
    %p130 = pneg %p129
    // Predicated region
    $region9: #{double_conv_forward.5} parent=5 // pred_check
      _
    $region10: #{double_conv_forward.5} parent=5 // pred_check_branch
      %132 = sbr.rel (%p129) target = $region12
    $region11: #{double_conv_forward.5} parent=5 // pred_region
      %s133 = ssub.s32 %s9, 1
      // Predicated region
      $region13: #{double_conv_forward.5} parent=11 // pred_check
        %p134 = pneg %p70
      $region14: #{double_conv_forward.5} parent=11 // pred_check_branch
        %136 = sbr.rel (%p134) target = $region16
      $region15: #{double_conv_forward.5} parent=11 // pred_region
        _
      $region16: #{double_conv_forward.5} parent=11 // pred_fallthru
        _
      // Predicated region
      $region17: #{double_conv_forward.5} parent=11 // pred_check
        %p137 = pneg %p91
      $region18: #{double_conv_forward.5} parent=11 // pred_check_branch
        %139 = sbr.rel (%p137) target = $region20
      $region19: #{double_conv_forward.5} parent=11 // pred_region
        _
      $region20: #{double_conv_forward.5} parent=11 // pred_fallthru
        _
    $region12: #{double_conv_forward.5} parent=5 // pred_fallthru
      _
    %p140 = scmp.lt.s32.totalorder %s9, 4
    // Predicated region
    $region21: #{double_conv_forward.5} parent=5 // pred_check
      %p141 = pneg %p140
    $region22: #{double_conv_forward.5} parent=5 // pred_check_branch
      %143 = sbr.rel (%p141) target = $region24
    $region23: #{double_conv_forward.5} parent=5 // pred_region
      // Predicated region
      $region25: #{double_conv_forward.5} parent=23 // pred_check
        %p144 = pneg %p43
      $region26: #{double_conv_forward.5} parent=23 // pred_check_branch
        %146 = sbr.rel (%p144) target = $region28
      $region27: #{double_conv_forward.5} parent=23 // pred_region
        %s147 = smul.u32 8, %s17
        %p148 = scmp.lt.s32.totalorder %s16, 1
        %s149 = scalar_select %p148, %s16, 1
        %p150 = scmp.lt.s32.totalorder %s147, 15
        %s151 = scalar_select %p150, %s147, 15
        %s152 = smul.addr %s151, 2
        %s153 = smul.addr %s149, 32
        %s154 = sadd.s32 %s152, %s153
        %s155 = smul.addr %s154, 8
        %s156 = scalar_lea.vmem %s0, %s155
        %s157 = smul.u32 8, %s17
      $region28: #{double_conv_forward.5} parent=23 // pred_fallthru
        _
    $region24: #{double_conv_forward.5} parent=5 // pred_fallthru
      _
    %p158 = scmp.le.s32.totalorder 1, %s9
    %p159 = scmp.lt.s32.totalorder %s9, 5
    %p160 = pnand %p158, %p159
    %p161 = pneg %p160
    // Predicated region
    $region29: #{double_conv_forward.5} parent=5 // pred_check
      _
    $region30: #{double_conv_forward.5} parent=5 // pred_check_branch
      %163 = sbr.rel (%p160) target = $region32
    $region31: #{double_conv_forward.5} parent=5 // pred_region
      %s164 = ssub.s32 %s9, 1
      %s165 = smul.u32 8, %s19
      %p166 = scmp.lt.s32.totalorder %s18, 1
      %s167 = scalar_select %p166, %s18, 1
      %p168 = scmp.lt.s32.totalorder %s165, 15
      %s169 = scalar_select %p168, %s165, 15
      %s170 = smul.addr %s169, 2
      %s171 = smul.addr %s167, 32
      %s172 = sadd.s32 %s170, %s171
      %s173 = smul.addr %s172, 8
      %s174 = scalar_lea.vmem %s0, %s173
      %p175 = pneg %p49
      %p176 = pneg %p46
      %p177 = pneg %p70
      %p178 = pneg %p67
      %p179 = pneg %p91
      %p180 = pneg %p88
      %p181 = pneg %p119
      %p182 = pneg %p116
      %s183 = smul.u32 8, %s19
      %p184 = scmp.lt.s32.totalorder %s18, 1
      %s185 = scalar_select %p184, %s18, 1
      %p186 = scmp.lt.s32.totalorder %s183, 15
      %s187 = scalar_select %p186, %s183, 15
      %s188 = smul.addr %s187, 2
      %s189 = smul.addr %s185, 32
      %s190 = sadd.s32 %s188, %s189
      %s191 = smul.addr %s190, 8
      %s192 = scalar_lea.vmem %s3, %s191
      %s193 = smul.u32 8, %s19
      %p194 = scmp.lt.s32.totalorder %s18, 1
      %s195 = scalar_select %p194, %s18, 1
      %p196 = scmp.lt.s32.totalorder %s193, 15
      %s197 = scalar_select %p196, %s193, 15
      %s198 = smul.addr %s197, 2
      %s199 = smul.addr %s195, 32
      %s200 = sadd.s32 %s198, %s199
      %s201 = smul.addr %s200, 8
      %s202 = scalar_lea.vmem %s0, %s201
      %s203 = smul.u32 8, %s19
      %s204 = smul.u32 8, %s19
      %p205 = scmp.lt.s32.totalorder %s18, 1
      %s206 = scalar_select %p205, %s18, 1
      %p207 = scmp.lt.s32.totalorder %s204, 15
      %s208 = scalar_select %p207, %s204, 15
      %s209 = smul.addr %s208, 2
      %s210 = smul.addr %s206, 32
      %s211 = sadd.s32 %s209, %s210
      %s212 = smul.addr %s211, 8
      %s213 = scalar_lea.vmem %s3, %s212
      %s214 = smul.u32 8, %s19
      %v215 = vld [vmem:[%s202] sm:$0xff]
      %v216 = vld [vmem:[%s202 + $0x8] sm:$0xff]
      %v217 = vld [vmem:[%s202 + $0x10] sm:$0xff]
      %v218 = vld [vmem:[%s202 + $0x18] sm:$0xff]
      %v219 = vld [vmem:[%s202 + $0x20] sm:$0xff]
      %v220 = vld [vmem:[%s202 + $0x28] sm:$0xff]
      %v221 = vld [vmem:[%s202 + $0x30] sm:$0xff]
      %v222 = vld [vmem:[%s202 + $0x38] sm:$0xff]
      %v223 = vld [vmem:[%s202 + $0x40] sm:$0xff]
      %v224 = vld [vmem:[%s202 + $0x48] sm:$0xff]
      %v225 = vld [vmem:[%s202 + $0x50] sm:$0xff]
      %v226 = vld [vmem:[%s202 + $0x58] sm:$0xff]
      %v227 = vld [vmem:[%s202 + $0x60] sm:$0xff]
      %v228 = vld [vmem:[%s202 + $0x68] sm:$0xff]
      %v229 = vld [vmem:[%s202 + $0x70] sm:$0xff]
      %v230 = vld [vmem:[%s202 + $0x78] sm:$0xff]
      %v231 = vld [vmem:[%s1] sm:$0x1]
      %v233 = vlaneseq
      %v234 = vshrl.u32 %v233, 7
      %v235 = vsub.s32 0, %v234
      %v236 = vrot.slane %v231, %v235
      %v238 = vmul.f32 %v215, %v236
      %v239 = vmul.f32 %v216, %v236
      %v240 = vmul.f32 %v217, %v236
      %v241 = vmul.f32 %v218, %v236
      %v242 = vmul.f32 %v219, %v236
      %v243 = vmul.f32 %v220, %v236
      %v244 = vmul.f32 %v221, %v236
      %v245 = vmul.f32 %v222, %v236
      %v246 = vmul.f32 %v223, %v236
      %v247 = vmul.f32 %v224, %v236
      %v248 = vmul.f32 %v225, %v236
      %v249 = vmul.f32 %v226, %v236
      %v250 = vmul.f32 %v227, %v236
      %v251 = vmul.f32 %v228, %v236
      %v252 = vmul.f32 %v229, %v236
      %v253 = vmul.f32 %v230, %v236
      %v254 = vld [vmem:[%s2] sm:$0x1]
      %v256 = vlaneseq
      %v257 = vshrl.u32 %v256, 7
      %v258 = vsub.s32 0, %v257
      %v259 = vrot.slane %v254, %v258
      %v261 = vadd.f32 %v238, %v259
      %v262 = vadd.f32 %v239, %v259
      %v263 = vadd.f32 %v240, %v259
      %v264 = vadd.f32 %v241, %v259
      %v265 = vadd.f32 %v242, %v259
      %v266 = vadd.f32 %v243, %v259
      %v267 = vadd.f32 %v244, %v259
      %v268 = vadd.f32 %v245, %v259
      %v269 = vadd.f32 %v246, %v259
      %v270 = vadd.f32 %v247, %v259
      %v271 = vadd.f32 %v248, %v259
      %v272 = vadd.f32 %v249, %v259
      %v273 = vadd.f32 %v250, %v259
      %v274 = vadd.f32 %v251, %v259
      %v275 = vadd.f32 %v252, %v259
      %v276 = vadd.f32 %v253, %v259
      %v277 = vmax.f32 %v261, 0.0
      %v278 = vmax.f32 %v262, 0.0
      %v279 = vmax.f32 %v263, 0.0
      %v280 = vmax.f32 %v264, 0.0
      %v281 = vmax.f32 %v265, 0.0
      %v282 = vmax.f32 %v266, 0.0
      %v283 = vmax.f32 %v267, 0.0
      %v284 = vmax.f32 %v268, 0.0
      %v285 = vmax.f32 %v269, 0.0
      %v286 = vmax.f32 %v270, 0.0
      %v287 = vmax.f32 %v271, 0.0
      %v288 = vmax.f32 %v272, 0.0
      %v289 = vmax.f32 %v273, 0.0
      %v290 = vmax.f32 %v274, 0.0
      %v291 = vmax.f32 %v275, 0.0
      %v292 = vmax.f32 %v276, 0.0
      %293 = vst [vmem:[%s213] sm:$0xff] %v277
      %294 = vst [vmem:[%s213 + $0x8] sm:$0xff] %v278
      %295 = vst [vmem:[%s213 + $0x10] sm:$0xff] %v279
      %296 = vst [vmem:[%s213 + $0x18] sm:$0xff] %v280
      %297 = vst [vmem:[%s213 + $0x20] sm:$0xff] %v281
      %298 = vst [vmem:[%s213 + $0x28] sm:$0xff] %v282
      %299 = vst [vmem:[%s213 + $0x30] sm:$0xff] %v283
      %300 = vst [vmem:[%s213 + $0x38] sm:$0xff] %v284
      %301 = vst [vmem:[%s213 + $0x40] sm:$0xff] %v285
      %302 = vst [vmem:[%s213 + $0x48] sm:$0xff] %v286
      %303 = vst [vmem:[%s213 + $0x50] sm:$0xff] %v287
      %304 = vst [vmem:[%s213 + $0x58] sm:$0xff] %v288
      %305 = vst [vmem:[%s213 + $0x60] sm:$0xff] %v289
      %306 = vst [vmem:[%s213 + $0x68] sm:$0xff] %v290
      %307 = vst [vmem:[%s213 + $0x70] sm:$0xff] %v291
      %308 = vst [vmem:[%s213 + $0x78] sm:$0xff] %v292
      %s309 = smul.u32 8, %s19
      %p310 = scmp.lt.s32.totalorder %s18, 1
      %s311 = scalar_select %p310, %s18, 1
      %p312 = scmp.lt.s32.totalorder %s309, 15
      %s313 = scalar_select %p312, %s309, 15
      %s314 = smul.addr %s313, 2
      %s315 = smul.addr %s311, 32
      %s316 = sadd.s32 %s314, %s315
      %s317 = smul.addr %s316, 8
      %s318 = scalar_lea.vmem %s3, %s317
      // Predicated region
      $region33: #{double_conv_forward.5} parent=31 // pred_check
        %p319 = pneg %p116
      $region34: #{double_conv_forward.5} parent=31 // pred_check_branch
        %321 = sbr.rel (%p319) target = $region36
      $region35: #{double_conv_forward.5} parent=31 // pred_region
        %s322 = smul.u32 8, %s19
      $region36: #{double_conv_forward.5} parent=31 // pred_fallthru
        _
    $region32: #{double_conv_forward.5} parent=5 // pred_fallthru
      _
    %p323 = scmp.le.s32.totalorder 2, %s9
    // Predicated region
    $region37: #{double_conv_forward.5} parent=5 // pred_check
      %p324 = pneg %p323
    $region38: #{double_conv_forward.5} parent=5 // pred_check_branch
      %326 = sbr.rel (%p324) target = $region40
    $region39: #{double_conv_forward.5} parent=5 // pred_region
      %s327 = ssub.s32 %s9, 2
      // Predicated region
      $region41: #{double_conv_forward.5} parent=39 // pred_check
        %p328 = pneg %p122
      $region42: #{double_conv_forward.5} parent=39 // pred_check_branch
        %330 = sbr.rel (%p328) target = $region44
      $region43: #{double_conv_forward.5} parent=39 // pred_region
        %s331 = smul.u32 8, %s21
        %p332 = scmp.lt.s32.totalorder %s20, 1
        %s333 = scalar_select %p332, %s20, 1
        %p334 = scmp.lt.s32.totalorder %s331, 15
        %s335 = scalar_select %p334, %s331, 15
        %s336 = smul.addr %s335, 2
        %s337 = smul.addr %s333, 32
        %s338 = sadd.s32 %s336, %s337
        %s339 = smul.addr %s338, 8
        %s340 = scalar_lea.vmem %s3, %s339
      $region44: #{double_conv_forward.5} parent=39 // pred_fallthru
        _
    $region40: #{double_conv_forward.5} parent=5 // pred_fallthru
      _
  $region6: #{double_conv_forward.5} parent=0 // loop_footer
    %s13 = sadd.s32 1, %s9
  $region7: #{double_conv_forward.5} parent=0 // loop_footer_branch
    %8 = sbr.rel target = $region3
  $region8: #{double_conv_forward.5} parent=0 // loop_exit
    _

// kernel: double_conv_forward.3
$region0: #{double_conv_forward.3}
  #allocation0 [shape = 'u32[]', space=smem, size = 0x4, offset = 0x4, fixed_abs, tag = 'smem constant byte address 0x4 - core index']
  #allocation1 [shape = 'u32[144,128]{1,0:T(1,128)}', space=vmem, size = 0x12000, scoped, tag = 'internal scratch']
  #allocation2 [shape = 'f32[2,10,18,128]{3,2,1,0:T(8,128)}', space=vmem, size = 0x3c000, scoped, tag = 'scratch operand']
  #allocation3 [shape = 's32[2]{0}', space=sflag, size = 0x8, scoped, tag = 'scratch operand']
  #allocation4 [shape = 's32[]', space=sflag, size = 0x4, offset = 0, fixed_abs, tag = 'sflag constant byte address 0x0 - dummy sync flag']
  #allocation5 [shape = 's32[]', space=sflag, size = 0x4, offset = 0, fixed_abs, tag = 'sflag constant byte address 0x0 - dummy sync flag']
  %s0 = inlined_call_operand.vmem [shape: f32[2,18,18,128], index: 0, kind: input, shape index: {}]
  %s1 = inlined_call_operand.vmem [shape: f32[1152,128], index: 1, kind: input, shape index: {}]
  %s2 = inlined_call_operand.vmem [shape: f32[1,128], index: 2, kind: input, shape index: {}]
  %s3 = inlined_call_operand.vmem [shape: f32[1,128], index: 3, kind: input, shape index: {}]
  %s4 = inlined_call_operand.vmem [shape: f32[2,16,16,128], index: 4, kind: output, shape index: {0}]
  %s5 = inlined_call_operand.vmem [shape: f32[2,2,2,128], index: 5, kind: output, shape index: {1}]
  %6 = xla_tuple %s4, %s5
  %s7 = sld [smem:[#allocation0]]
  $region135: #{double_conv_forward.3} parent=0
    _
  %s9 = ssub.s32 1, %s7
  %s10 = scalar_select 0, %s9, %s7
  loop: start=0, step=1, limit=6
  $region2: #{double_conv_forward.3} parent=0 // loop_pre_header
    _
  $region3: #{double_conv_forward.3} parent=0 // loop_header
    %s12 = sphi 0, %s16
    %p13 = scmp.ge.s32.totalorder %s12, 6
    %s19 = sphi 0, %s31
    %s20 = sphi 0, %s27
    %s21 = sphi 0, %s19
    %s22 = sphi 0, %s20
    %s23 = sphi 0, %s21
    %s24 = sphi 0, %s22
    %s32 = sphi 0, %s32
    %s34 = sphi 0, %s32
    %s35 = sphi 0, %s34
    %s49 = sphi 0, %s35
    %s53 = sphi 0, %s53
    %s55 = sphi 0, %s53
    %s56 = sphi 0, %s55
    %s70 = sphi 0, %s56
    %s74 = sphi 0, %s74
    %s76 = sphi 0, %s74
    %s77 = sphi 0, %s76
    %s91 = sphi 0, %s77
    %s99 = sphi 0, %s101
    %s102 = sphi 0, %s99
    %s103 = sphi 0, %s102
    %s119 = sphi 0, %s103
    %s127 = sphi 0, %s129
    %s130 = sphi 0, %s127
    %s131 = sphi 0, %s130
    %s147 = sphi 0, %s131
  $region4: #{double_conv_forward.3} parent=0 // loop_header_branch
    %15 = sbr.rel (%p13) target = $region8
  $region5: #{double_conv_forward.3} parent=0 // loop_body
    %s17 = ssub.s32 %s12, 1
    %s18 = ssub.s32 %s12, 2
    %s25 = sadd.s32 1, %s20
    %p26 = scmp.ge.s32.totalorder %s25, 2
    %s27 = scalar_select %p26, 0, %s25
    %s28 = sadd.s32 1, %s19
    %s29 = scalar_select %p26, %s28, %s19
    %p30 = scmp.ge.s32.totalorder %s29, 2
    %s31 = scalar_select %p30, 0, %s29
    %s33 = sadd.s32 %s32, 1
    %p36 = scmp.eq.s32.totalorder %s12, 3
    %p37 = scmp.ne.s32.totalorder %s32, %s34
    %p38 = scmp.eq.s32.totalorder %s12, 0
    %p39 = por %p37, %p38
    %p40 = scmp.ne.s32.totalorder %s32, %s34
    %p41 = scmp.eq.s32.totalorder %s17, 3
    %p42 = por %p40, %p41
    %p43 = scmp.ne.s32.totalorder %s34, %s35
    %p44 = scmp.eq.s32.totalorder %s17, 0
    %p45 = por %p43, %p44
    %p46 = scmp.ne.s32.totalorder %s34, %s35
    %p47 = scmp.eq.s32.totalorder %s18, 3
    %p48 = por %p46, %p47
    %p50 = scmp.ne.s32.totalorder %s35, %s49
    %p51 = scmp.eq.s32.totalorder %s18, 0
    %p52 = por %p50, %p51
    %s54 = sadd.s32 %s53, 1
    %p57 = scmp.eq.s32.totalorder %s12, 3
    %p58 = scmp.ne.s32.totalorder %s53, %s55
    %p59 = scmp.eq.s32.totalorder %s12, 0
    %p60 = por %p58, %p59
    %p61 = scmp.ne.s32.totalorder %s53, %s55
    %p62 = scmp.eq.s32.totalorder %s17, 3
    %p63 = por %p61, %p62
    %p64 = scmp.ne.s32.totalorder %s55, %s56
    %p65 = scmp.eq.s32.totalorder %s17, 0
    %p66 = por %p64, %p65
    %p67 = scmp.ne.s32.totalorder %s55, %s56
    %p68 = scmp.eq.s32.totalorder %s18, 3
    %p69 = por %p67, %p68
    %p71 = scmp.ne.s32.totalorder %s56, %s70
    %p72 = scmp.eq.s32.totalorder %s18, 0
    %p73 = por %p71, %p72
    %s75 = sadd.s32 %s74, 1
    %p78 = scmp.eq.s32.totalorder %s12, 3
    %p79 = scmp.ne.s32.totalorder %s74, %s76
    %p80 = scmp.eq.s32.totalorder %s12, 0
    %p81 = por %p79, %p80
    %p82 = scmp.ne.s32.totalorder %s74, %s76
    %p83 = scmp.eq.s32.totalorder %s17, 3
    %p84 = por %p82, %p83
    %p85 = scmp.ne.s32.totalorder %s76, %s77
    %p86 = scmp.eq.s32.totalorder %s17, 0
    %p87 = por %p85, %p86
    %p88 = scmp.ne.s32.totalorder %s76, %s77
    %p89 = scmp.eq.s32.totalorder %s18, 3
    %p90 = por %p88, %p89
    %p92 = scmp.ne.s32.totalorder %s77, %s91
    %p93 = scmp.eq.s32.totalorder %s18, 0
    %p94 = por %p92, %p93
    %s95 = ssub.s32 %s19, %s31
    %s96 = ssub.s32 %s20, %s27
    %s97 = sor.u32 %s95, %s96
    %p98 = scmp.eq.s32.totalorder %s97, 0
    %s100 = sadd.s32 %s99, 1
    %s101 = scalar_select %p98, %s99, %s100
    %p104 = pneg %p98
    %p105 = scmp.eq.s32.totalorder %s12, 3
    %p106 = por %p104, %p105
    %p107 = scmp.ne.s32.totalorder %s99, %s102
    %p108 = scmp.eq.s32.totalorder %s12, 0
    %p109 = por %p107, %p108
    %p110 = scmp.ne.s32.totalorder %s99, %s102
    %p111 = scmp.eq.s32.totalorder %s17, 3
    %p112 = por %p110, %p111
    %p113 = scmp.ne.s32.totalorder %s102, %s103
    %p114 = scmp.eq.s32.totalorder %s17, 0
    %p115 = por %p113, %p114
    %p116 = scmp.ne.s32.totalorder %s102, %s103
    %p117 = scmp.eq.s32.totalorder %s18, 3
    %p118 = por %p116, %p117
    %p120 = scmp.ne.s32.totalorder %s103, %s119
    %p121 = scmp.eq.s32.totalorder %s18, 0
    %p122 = por %p120, %p121
    %s123 = ssub.s32 %s19, %s31
    %s124 = ssub.s32 %s20, %s27
    %s125 = sor.u32 %s123, %s124
    %p126 = scmp.eq.s32.totalorder %s125, 0
    %s128 = sadd.s32 %s127, 1
    %s129 = scalar_select %p126, %s127, %s128
    %p132 = pneg %p126
    %p133 = scmp.eq.s32.totalorder %s12, 3
    %p134 = por %p132, %p133
    %p135 = scmp.ne.s32.totalorder %s127, %s130
    %p136 = scmp.eq.s32.totalorder %s12, 0
    %p137 = por %p135, %p136
    %p138 = scmp.ne.s32.totalorder %s127, %s130
    %p139 = scmp.eq.s32.totalorder %s17, 3
    %p140 = por %p138, %p139
    %p141 = scmp.ne.s32.totalorder %s130, %s131
    %p142 = scmp.eq.s32.totalorder %s17, 0
    %p143 = por %p141, %p142
    %p144 = scmp.ne.s32.totalorder %s130, %s131
    %p145 = scmp.eq.s32.totalorder %s18, 3
    %p146 = por %p144, %p145
    %p148 = scmp.ne.s32.totalorder %s131, %s147
    %p149 = scmp.eq.s32.totalorder %s18, 0
    %p150 = por %p148, %p149
    %p151 = scmp.le.s32.totalorder 1, %s12
    %p152 = scmp.lt.s32.totalorder %s12, 5
    %p153 = pnand %p151, %p152
    %p154 = pneg %p153
    // Predicated region
    $region9: #{double_conv_forward.3} parent=5 // pred_check
      _
    $region10: #{double_conv_forward.3} parent=5 // pred_check_branch
      %156 = sbr.rel (%p153) target = $region12
    $region11: #{double_conv_forward.3} parent=5 // pred_region
      %s157 = ssub.s32 %s12, 1
      // Predicated region
      $region13: #{double_conv_forward.3} parent=11 // pred_check
        %p158 = pneg %p45
      $region14: #{double_conv_forward.3} parent=11 // pred_check_branch
        %160 = sbr.rel (%p158) target = $region16
      $region15: #{double_conv_forward.3} parent=11 // pred_region
        _
      $region16: #{double_conv_forward.3} parent=11 // pred_fallthru
        _
      // Predicated region
      $region17: #{double_conv_forward.3} parent=11 // pred_check
        %p161 = pneg %p66
      $region18: #{double_conv_forward.3} parent=11 // pred_check_branch
        %163 = sbr.rel (%p161) target = $region20
      $region19: #{double_conv_forward.3} parent=11 // pred_region
        _
      $region20: #{double_conv_forward.3} parent=11 // pred_fallthru
        _
      // Predicated region
      $region21: #{double_conv_forward.3} parent=11 // pred_check
        %p164 = pneg %p87
      $region22: #{double_conv_forward.3} parent=11 // pred_check_branch
        %166 = sbr.rel (%p164) target = $region24
      $region23: #{double_conv_forward.3} parent=11 // pred_region
        _
      $region24: #{double_conv_forward.3} parent=11 // pred_fallthru
        _
    $region12: #{double_conv_forward.3} parent=5 // pred_fallthru
      _
    %p167 = scmp.lt.s32.totalorder %s12, 4
    // Predicated region
    $region25: #{double_conv_forward.3} parent=5 // pred_check
      %p168 = pneg %p167
    $region26: #{double_conv_forward.3} parent=5 // pred_check_branch
      %170 = sbr.rel (%p168) target = $region28
    $region27: #{double_conv_forward.3} parent=5 // pred_region
      _
    $region28: #{double_conv_forward.3} parent=5 // pred_fallthru
      _
    %p171 = scmp.le.s32.totalorder 1, %s12
    %p172 = scmp.lt.s32.totalorder %s12, 5
    %p173 = pnand %p171, %p172
    %p174 = pneg %p173
    // Predicated region
    $region29: #{double_conv_forward.3} parent=5 // pred_check
      _
    $region30: #{double_conv_forward.3} parent=5 // pred_check_branch
      %176 = sbr.rel (%p173) target = $region32
    $region31: #{double_conv_forward.3} parent=5 // pred_region
      %s177 = ssub.s32 %s12, 1
      %p178 = pneg %p45
      %p179 = pneg %p42
      %p180 = pneg %p66
      %p181 = pneg %p63
      %p182 = pneg %p87
      %p183 = pneg %p84
      %p184 = pneg %p115
      %p185 = pneg %p112
      %s186 = smul.u32 8, %s22
      %p187 = scmp.lt.s32.totalorder %s21, 1
      %s188 = scalar_select %p187, %s21, 1
      %p189 = scmp.lt.s32.totalorder %s186, 15
      %s190 = scalar_select %p189, %s186, 15
      %s191 = smul.addr %s190, 2
      %s192 = smul.addr %s188, 32
      %s193 = sadd.s32 %s191, %s192
      %s194 = smul.addr %s193, 8
      %s195 = scalar_lea.vmem %s4, %s194
      %p196 = pneg %p143
      %p197 = pneg %p140
      %p198 = scmp.lt.s32.totalorder %s21, 1
      %s199 = scalar_select %p198, %s21, 1
      %p200 = scmp.lt.s32.totalorder %s22, 1
      %s201 = scalar_select %p200, %s22, 1
      %s202 = smul.addr %s199, 2
      %s203 = sadd.s32 %s201, %s202
      %s204 = smul.addr %s203, 2
      %s205 = scalar_lea.vmem %s5, %s204
      %s206 = smul.u32 8, %s22
      %p207 = scmp.lt.s32.totalorder %s21, 1
      %s208 = scalar_select %p207, %s21, 1
      %p209 = scmp.lt.s32.totalorder %s206, 15
      %s210 = scalar_select %p209, %s206, 15
      %s211 = smul.addr %s210, 2
      %s212 = smul.addr %s208, 32
      %s213 = sadd.s32 %s211, %s212
      %s214 = smul.addr %s213, 8
      %s215 = scalar_lea.vmem %s4, %s214
      %s216 = smul.u32 8, %s22
      %p217 = scmp.lt.s32.totalorder %s21, 1
      %s218 = scalar_select %p217, %s21, 1
      %p219 = scmp.lt.s32.totalorder %s22, 1
      %s220 = scalar_select %p219, %s22, 1
      %s221 = smul.addr %s218, 2
      %s222 = sadd.s32 %s220, %s221
      %s223 = smul.addr %s222, 2
      %s224 = scalar_lea.vmem %s5, %s223
      %s225 = sand.u32 %s22, 1
      %p226 = scmp.eq.s32.totalorder %s22, 0
      // Predicated region
      $region33: #{double_conv_forward.3} parent=31 // pred_check
        %p227 = pneg %p226
      $region34: #{double_conv_forward.3} parent=31 // pred_check_branch
        %229 = sbr.rel (%p227) target = $region36
      $region35: #{double_conv_forward.3} parent=31 // pred_region
        %s230 = smul.u32 %s22, 8
        %s231 = smul.u32 %s230, 24
        %s232 = smul.u32 %s21, 432
        %s233 = sadd.s32 %s231, %s232
        %s234 = scalar_lea.vmem %s0, %s233
        %s235 = smul.u32 %s225, 240
        %s236 = scalar_lea.vmem [#allocation2], %s235
        %s237 = scalar_lea.sflag [#allocation3], %s225
        %p239 = scmp.lt.u32.totalorder 18, 8
        %p240 = pneg %p239
        // Predicated region
        $region37: #{double_conv_forward.3} parent=35 // pred_check
          _
        $region38: #{double_conv_forward.3} parent=35 // pred_check_branch
          %242 = sbr.rel (%p239) target = $region40
        $region39: #{double_conv_forward.3} parent=35 // pred_region
          %s275 = sand.u32 18, 7
          %p276 = scmp.eq.s32.totalorder %s275, 0
          %p277 = pneg %p276
          // Predicated region
          $region52: #{double_conv_forward.3} parent=39 // pred_check
            _
          $region53: #{double_conv_forward.3} parent=39 // pred_check_branch
            %279 = sbr.rel (%p276) target = $region55
          $region54: #{double_conv_forward.3} parent=39 // pred_region
            %s280 = sand.u32 18, 7
            %s281 = ssub.s32 18, %s280
            %s282 = scalar_lea.vmem %s234, %s281
            %s283 = ssub.s32 18, %s280
            %s284 = scalar_lea.vmem %s236, %s283 [#allocation2]
            loop: start=0, step=1, limit=1
            $region56: #{double_conv_forward.3} parent=54 // loop_pre_header
              _
            $region57: #{double_conv_forward.3} parent=54 // loop_header
              %s286 = sphi 0, %s290
              %p287 = scmp.ge.s32.totalorder %s286, 1
              %s291 = sphi %s234, %s234
              %s292 = sphi %s236, %s236
            $region58: #{double_conv_forward.3} parent=54 // loop_header_branch
              %289 = sbr.rel (%p287) target = $region62
            $region59: #{double_conv_forward.3} parent=54 // loop_body
              %v293 = vld [vmem:[%s291] sm:$0xff]
              %294 = vst [vmem:[%s292] sm:$0xff] %v293
              %v295 = vld [vmem:[%s291 + $0x8] sm:$0xff]
              %296 = vst [vmem:[%s292 + $0x8] sm:$0xff] %v295
              %v297 = vld [vmem:[%s291 + $0x18] sm:$0xff]
              %298 = vst [vmem:[%s292 + $0x18] sm:$0xff] %v297
              %v299 = vld [vmem:[%s291 + $0x20] sm:$0xff]
              %300 = vst [vmem:[%s292 + $0x20] sm:$0xff] %v299
              %v301 = vld [vmem:[%s291 + $0x30] sm:$0xff]
              %302 = vst [vmem:[%s292 + $0x30] sm:$0xff] %v301
              %v303 = vld [vmem:[%s291 + $0x38] sm:$0xff]
              %304 = vst [vmem:[%s292 + $0x38] sm:$0xff] %v303
              %v305 = vld [vmem:[%s291 + $0x48] sm:$0xff]
              %306 = vst [vmem:[%s292 + $0x48] sm:$0xff] %v305
              %v307 = vld [vmem:[%s291 + $0x50] sm:$0xff]
              %308 = vst [vmem:[%s292 + $0x50] sm:$0xff] %v307
              %v309 = vld [vmem:[%s291 + $0x60] sm:$0xff]
              %310 = vst [vmem:[%s292 + $0x60] sm:$0xff] %v309
              %v311 = vld [vmem:[%s291 + $0x68] sm:$0xff]
              %312 = vst [vmem:[%s292 + $0x68] sm:$0xff] %v311
              %v313 = vld [vmem:[%s291 + $0x78] sm:$0xff]
              %314 = vst [vmem:[%s292 + $0x78] sm:$0xff] %v313
              %v315 = vld [vmem:[%s291 + $0x80] sm:$0xff]
              %316 = vst [vmem:[%s292 + $0x80] sm:$0xff] %v315
              %v317 = vld [vmem:[%s291 + $0x90] sm:$0xff]
              %318 = vst [vmem:[%s292 + $0x90] sm:$0xff] %v317
              %v319 = vld [vmem:[%s291 + $0x98] sm:$0xff]
              %320 = vst [vmem:[%s292 + $0x98] sm:$0xff] %v319
              %v321 = vld [vmem:[%s291 + $0xa8] sm:$0xff]
              %322 = vst [vmem:[%s292 + $0xa8] sm:$0xff] %v321
              %v323 = vld [vmem:[%s291 + $0xb0] sm:$0xff]
              %324 = vst [vmem:[%s292 + $0xb0] sm:$0xff] %v323
              %v325 = vld [vmem:[%s291 + $0xc0] sm:$0xff]
              %326 = vst [vmem:[%s292 + $0xc0] sm:$0xff] %v325
              %v327 = vld [vmem:[%s291 + $0xc8] sm:$0xff]
              %328 = vst [vmem:[%s292 + $0xc8] sm:$0xff] %v327
              %v329 = vld [vmem:[%s291 + $0xd8] sm:$0xff]
              %330 = vst [vmem:[%s292 + $0xd8] sm:$0xff] %v329
              %v331 = vld [vmem:[%s291 + $0xe0] sm:$0xff]
              %332 = vst [vmem:[%s292 + $0xe0] sm:$0xff] %v331
            $region60: #{double_conv_forward.3} parent=54 // loop_footer
              %s290 = sadd.s32 1, %s286
            $region61: #{double_conv_forward.3} parent=54 // loop_footer_branch
              %285 = sbr.rel target = $region57
            $region62: #{double_conv_forward.3} parent=54 // loop_exit
              _
            %s333 = sshllo.u32 0, %s280
            loop: start=0, step=1, limit=1
            $region63: #{double_conv_forward.3} parent=54 // loop_pre_header
              _
            $region64: #{double_conv_forward.3} parent=54 // loop_header
              %s335 = sphi 0, %s339
              %p336 = scmp.ge.s32.totalorder %s335, 1
              %s340 = sphi %s282, %s282
              %s341 = sphi %s284, %s284
            $region65: #{double_conv_forward.3} parent=54 // loop_header_branch
              %338 = sbr.rel (%p336) target = $region69
            $region66: #{double_conv_forward.3} parent=54 // loop_body
              %v342 = vld [vmem:[%s340] sm:%s333]
              %343 = vst [vmem:[%s341] sm:%s333] %v342
              %v344 = vld [vmem:[%s340 + $0x18] sm:%s333]
              %345 = vst [vmem:[%s341 + $0x18] sm:%s333] %v344
              %v346 = vld [vmem:[%s340 + $0x30] sm:%s333]
              %347 = vst [vmem:[%s341 + $0x30] sm:%s333] %v346
              %v348 = vld [vmem:[%s340 + $0x48] sm:%s333]
              %349 = vst [vmem:[%s341 + $0x48] sm:%s333] %v348
              %v350 = vld [vmem:[%s340 + $0x60] sm:%s333]
              %351 = vst [vmem:[%s341 + $0x60] sm:%s333] %v350
              %v352 = vld [vmem:[%s340 + $0x78] sm:%s333]
              %353 = vst [vmem:[%s341 + $0x78] sm:%s333] %v352
              %v354 = vld [vmem:[%s340 + $0x90] sm:%s333]
              %355 = vst [vmem:[%s341 + $0x90] sm:%s333] %v354
              %v356 = vld [vmem:[%s340 + $0xa8] sm:%s333]
              %357 = vst [vmem:[%s341 + $0xa8] sm:%s333] %v356
              %v358 = vld [vmem:[%s340 + $0xc0] sm:%s333]
              %359 = vst [vmem:[%s341 + $0xc0] sm:%s333] %v358
              %v360 = vld [vmem:[%s340 + $0xd8] sm:%s333]
              %361 = vst [vmem:[%s341 + $0xd8] sm:%s333] %v360
            $region67: #{double_conv_forward.3} parent=54 // loop_footer
              %s339 = sadd.s32 1, %s335
            $region68: #{double_conv_forward.3} parent=54 // loop_footer_branch
              %334 = sbr.rel target = $region64
            $region69: #{double_conv_forward.3} parent=54 // loop_exit
              _
          $region55: #{double_conv_forward.3} parent=39 // pred_fallthru
            _
        $region40: #{double_conv_forward.3} parent=35 // pred_fallthru
          _
        // Predicated region
        $region41: #{double_conv_forward.3} parent=35 // pred_check
          %p243 = pneg %p239
        $region42: #{double_conv_forward.3} parent=35 // pred_check_branch
          %245 = sbr.rel (%p243) target = $region44
        $region43: #{double_conv_forward.3} parent=35 // pred_region
          %s246 = sshllo.u32 0, 18
          loop: start=0, step=1, limit=1
          $region45: #{double_conv_forward.3} parent=43 // loop_pre_header
            _
          $region46: #{double_conv_forward.3} parent=43 // loop_header
            %s248 = sphi 0, %s252
            %p249 = scmp.ge.s32.totalorder %s248, 1
            %s253 = sphi %s234, %s234
            %s254 = sphi %s236, %s236
          $region47: #{double_conv_forward.3} parent=43 // loop_header_branch
            %251 = sbr.rel (%p249) target = $region51
          $region48: #{double_conv_forward.3} parent=43 // loop_body
            %v255 = vld [vmem:[%s253] sm:%s246]
            %256 = vst [vmem:[%s254] sm:%s246] %v255
            %v257 = vld [vmem:[%s253 + $0x18] sm:%s246]
            %258 = vst [vmem:[%s254 + $0x18] sm:%s246] %v257
            %v259 = vld [vmem:[%s253 + $0x30] sm:%s246]
            %260 = vst [vmem:[%s254 + $0x30] sm:%s246] %v259
            %v261 = vld [vmem:[%s253 + $0x48] sm:%s246]
            %262 = vst [vmem:[%s254 + $0x48] sm:%s246] %v261
            %v263 = vld [vmem:[%s253 + $0x60] sm:%s246]
            %264 = vst [vmem:[%s254 + $0x60] sm:%s246] %v263
            %v265 = vld [vmem:[%s253 + $0x78] sm:%s246]
            %266 = vst [vmem:[%s254 + $0x78] sm:%s246] %v265
            %v267 = vld [vmem:[%s253 + $0x90] sm:%s246]
            %268 = vst [vmem:[%s254 + $0x90] sm:%s246] %v267
            %v269 = vld [vmem:[%s253 + $0xa8] sm:%s246]
            %270 = vst [vmem:[%s254 + $0xa8] sm:%s246] %v269
            %v271 = vld [vmem:[%s253 + $0xc0] sm:%s246]
            %272 = vst [vmem:[%s254 + $0xc0] sm:%s246] %v271
            %v273 = vld [vmem:[%s253 + $0xd8] sm:%s246]
            %274 = vst [vmem:[%s254 + $0xd8] sm:%s246] %v273
          $region49: #{double_conv_forward.3} parent=43 // loop_footer
            %s252 = sadd.s32 1, %s248
          $region50: #{double_conv_forward.3} parent=43 // loop_footer_branch
            %247 = sbr.rel target = $region46
          $region51: #{double_conv_forward.3} parent=43 // loop_exit
            _
        $region44: #{double_conv_forward.3} parent=35 // pred_fallthru
          _
        // Predicated region
        $region70: #{double_conv_forward.3} parent=35 // pred_check
          _
        $region71: #{double_conv_forward.3} parent=35 // pred_check_branch
          %364 = sbr.rel (0) target = $region73
        $region72: #{double_conv_forward.3} parent=35 // pred_region
          %365 = vsyncadd %s237, 2880
        $region73: #{double_conv_forward.3} parent=35 // pred_fallthru
          _
      $region36: #{double_conv_forward.3} parent=31 // pred_fallthru
        _
      %s366 = smul.u32 %s22, 8
      %s367 = smul.u32 %s225, 240
      %s368 = scalar_lea.vmem [#allocation2], %s367
      %s369 = scalar_lea.sflag [#allocation3], %s225
      %s370 = smul.u32 10, 18
      %s371 = smul.u32 %s370, 1
      %s372 = sshll.u32 %s371, 4
      %373 = dma.done %s369, %s372
      %s374 = sadd.s32 %s22, 1
      %p375 = scmp.lt.s32.totalorder %s374, 2
      // Predicated region
      $region74: #{double_conv_forward.3} parent=31 // pred_check
        %p376 = pneg %p375
      $region75: #{double_conv_forward.3} parent=31 // pred_check_branch
        %378 = sbr.rel (%p376) target = $region77
      $region76: #{double_conv_forward.3} parent=31 // pred_region
        %s379 = ssub.s32 1, %s225
        %s380 = smul.u32 %s374, 8
        %s381 = smul.u32 %s380, 24
        %s382 = smul.u32 %s21, 432
        %s383 = sadd.s32 %s381, %s382
        %s384 = scalar_lea.vmem %s0, %s383
        %s385 = smul.u32 %s379, 240
        %s386 = scalar_lea.vmem [#allocation2], %s385
        %s387 = scalar_lea.sflag [#allocation3], %s379
        %p389 = scmp.lt.u32.totalorder 18, 8
        %p390 = pneg %p389
        // Predicated region
        $region78: #{double_conv_forward.3} parent=76 // pred_check
          _
        $region79: #{double_conv_forward.3} parent=76 // pred_check_branch
          %392 = sbr.rel (%p389) target = $region81
        $region80: #{double_conv_forward.3} parent=76 // pred_region
          %s425 = sand.u32 18, 7
          %p426 = scmp.eq.s32.totalorder %s425, 0
          %p427 = pneg %p426
          // Predicated region
          $region93: #{double_conv_forward.3} parent=80 // pred_check
            _
          $region94: #{double_conv_forward.3} parent=80 // pred_check_branch
            %429 = sbr.rel (%p426) target = $region96
          $region95: #{double_conv_forward.3} parent=80 // pred_region
            %s430 = sand.u32 18, 7
            %s431 = ssub.s32 18, %s430
            %s432 = scalar_lea.vmem %s384, %s431
            %s433 = ssub.s32 18, %s430
            %s434 = scalar_lea.vmem %s386, %s433 [#allocation2]
            loop: start=0, step=1, limit=1
            $region97: #{double_conv_forward.3} parent=95 // loop_pre_header
              _
            $region98: #{double_conv_forward.3} parent=95 // loop_header
              %s436 = sphi 0, %s440
              %p437 = scmp.ge.s32.totalorder %s436, 1
              %s441 = sphi %s384, %s384
              %s442 = sphi %s386, %s386
            $region99: #{double_conv_forward.3} parent=95 // loop_header_branch
              %439 = sbr.rel (%p437) target = $region103
            $region100: #{double_conv_forward.3} parent=95 // loop_body
              %v443 = vld [vmem:[%s441] sm:$0xff]
              %444 = vst [vmem:[%s442] sm:$0xff] %v443
              %v445 = vld [vmem:[%s441 + $0x8] sm:$0xff]
              %446 = vst [vmem:[%s442 + $0x8] sm:$0xff] %v445
              %v447 = vld [vmem:[%s441 + $0x18] sm:$0xff]
              %448 = vst [vmem:[%s442 + $0x18] sm:$0xff] %v447
              %v449 = vld [vmem:[%s441 + $0x20] sm:$0xff]
              %450 = vst [vmem:[%s442 + $0x20] sm:$0xff] %v449
              %v451 = vld [vmem:[%s441 + $0x30] sm:$0xff]
              %452 = vst [vmem:[%s442 + $0x30] sm:$0xff] %v451
              %v453 = vld [vmem:[%s441 + $0x38] sm:$0xff]
              %454 = vst [vmem:[%s442 + $0x38] sm:$0xff] %v453
              %v455 = vld [vmem:[%s441 + $0x48] sm:$0xff]
              %456 = vst [vmem:[%s442 + $0x48] sm:$0xff] %v455
              %v457 = vld [vmem:[%s441 + $0x50] sm:$0xff]
              %458 = vst [vmem:[%s442 + $0x50] sm:$0xff] %v457
              %v459 = vld [vmem:[%s441 + $0x60] sm:$0xff]
              %460 = vst [vmem:[%s442 + $0x60] sm:$0xff] %v459
              %v461 = vld [vmem:[%s441 + $0x68] sm:$0xff]
              %462 = vst [vmem:[%s442 + $0x68] sm:$0xff] %v461
              %v463 = vld [vmem:[%s441 + $0x78] sm:$0xff]
              %464 = vst [vmem:[%s442 + $0x78] sm:$0xff] %v463
              %v465 = vld [vmem:[%s441 + $0x80] sm:$0xff]
              %466 = vst [vmem:[%s442 + $0x80] sm:$0xff] %v465
              %v467 = vld [vmem:[%s441 + $0x90] sm:$0xff]
              %468 = vst [vmem:[%s442 + $0x90] sm:$0xff] %v467
              %v469 = vld [vmem:[%s441 + $0x98] sm:$0xff]
              %470 = vst [vmem:[%s442 + $0x98] sm:$0xff] %v469
              %v471 = vld [vmem:[%s441 + $0xa8] sm:$0xff]
              %472 = vst [vmem:[%s442 + $0xa8] sm:$0xff] %v471
              %v473 = vld [vmem:[%s441 + $0xb0] sm:$0xff]
              %474 = vst [vmem:[%s442 + $0xb0] sm:$0xff] %v473
              %v475 = vld [vmem:[%s441 + $0xc0] sm:$0xff]
              %476 = vst [vmem:[%s442 + $0xc0] sm:$0xff] %v475
              %v477 = vld [vmem:[%s441 + $0xc8] sm:$0xff]
              %478 = vst [vmem:[%s442 + $0xc8] sm:$0xff] %v477
              %v479 = vld [vmem:[%s441 + $0xd8] sm:$0xff]
              %480 = vst [vmem:[%s442 + $0xd8] sm:$0xff] %v479
              %v481 = vld [vmem:[%s441 + $0xe0] sm:$0xff]
              %482 = vst [vmem:[%s442 + $0xe0] sm:$0xff] %v481
            $region101: #{double_conv_forward.3} parent=95 // loop_footer
              %s440 = sadd.s32 1, %s436
            $region102: #{double_conv_forward.3} parent=95 // loop_footer_branch
              %435 = sbr.rel target = $region98
            $region103: #{double_conv_forward.3} parent=95 // loop_exit
              _
            %s483 = sshllo.u32 0, %s430
            loop: start=0, step=1, limit=1
            $region104: #{double_conv_forward.3} parent=95 // loop_pre_header
              _
            $region105: #{double_conv_forward.3} parent=95 // loop_header
              %s485 = sphi 0, %s489
              %p486 = scmp.ge.s32.totalorder %s485, 1
              %s490 = sphi %s432, %s432
              %s491 = sphi %s434, %s434
            $region106: #{double_conv_forward.3} parent=95 // loop_header_branch
              %488 = sbr.rel (%p486) target = $region110
            $region107: #{double_conv_forward.3} parent=95 // loop_body
              %v492 = vld [vmem:[%s490] sm:%s483]
              %493 = vst [vmem:[%s491] sm:%s483] %v492
              %v494 = vld [vmem:[%s490 + $0x18] sm:%s483]
              %495 = vst [vmem:[%s491 + $0x18] sm:%s483] %v494
              %v496 = vld [vmem:[%s490 + $0x30] sm:%s483]
              %497 = vst [vmem:[%s491 + $0x30] sm:%s483] %v496
              %v498 = vld [vmem:[%s490 + $0x48] sm:%s483]
              %499 = vst [vmem:[%s491 + $0x48] sm:%s483] %v498
              %v500 = vld [vmem:[%s490 + $0x60] sm:%s483]
              %501 = vst [vmem:[%s491 + $0x60] sm:%s483] %v500
              %v502 = vld [vmem:[%s490 + $0x78] sm:%s483]
              %503 = vst [vmem:[%s491 + $0x78] sm:%s483] %v502
              %v504 = vld [vmem:[%s490 + $0x90] sm:%s483]
              %505 = vst [vmem:[%s491 + $0x90] sm:%s483] %v504
              %v506 = vld [vmem:[%s490 + $0xa8] sm:%s483]
              %507 = vst [vmem:[%s491 + $0xa8] sm:%s483] %v506
              %v508 = vld [vmem:[%s490 + $0xc0] sm:%s483]
              %509 = vst [vmem:[%s491 + $0xc0] sm:%s483] %v508
              %v510 = vld [vmem:[%s490 + $0xd8] sm:%s483]
              %511 = vst [vmem:[%s491 + $0xd8] sm:%s483] %v510
            $region108: #{double_conv_forward.3} parent=95 // loop_footer
              %s489 = sadd.s32 1, %s485
            $region109: #{double_conv_forward.3} parent=95 // loop_footer_branch
              %484 = sbr.rel target = $region105
            $region110: #{double_conv_forward.3} parent=95 // loop_exit
              _
          $region96: #{double_conv_forward.3} parent=80 // pred_fallthru
            _
        $region81: #{double_conv_forward.3} parent=76 // pred_fallthru
          _
        // Predicated region
        $region82: #{double_conv_forward.3} parent=76 // pred_check
          %p393 = pneg %p389
        $region83: #{double_conv_forward.3} parent=76 // pred_check_branch
          %395 = sbr.rel (%p393) target = $region85
        $region84: #{double_conv_forward.3} parent=76 // pred_region
          %s396 = sshllo.u32 0, 18
          loop: start=0, step=1, limit=1
          $region86: #{double_conv_forward.3} parent=84 // loop_pre_header
            _
          $region87: #{double_conv_forward.3} parent=84 // loop_header
            %s398 = sphi 0, %s402
            %p399 = scmp.ge.s32.totalorder %s398, 1
            %s403 = sphi %s384, %s384
            %s404 = sphi %s386, %s386
          $region88: #{double_conv_forward.3} parent=84 // loop_header_branch
            %401 = sbr.rel (%p399) target = $region92
          $region89: #{double_conv_forward.3} parent=84 // loop_body
            %v405 = vld [vmem:[%s403] sm:%s396]
            %406 = vst [vmem:[%s404] sm:%s396] %v405
            %v407 = vld [vmem:[%s403 + $0x18] sm:%s396]
            %408 = vst [vmem:[%s404 + $0x18] sm:%s396] %v407
            %v409 = vld [vmem:[%s403 + $0x30] sm:%s396]
            %410 = vst [vmem:[%s404 + $0x30] sm:%s396] %v409
            %v411 = vld [vmem:[%s403 + $0x48] sm:%s396]
            %412 = vst [vmem:[%s404 + $0x48] sm:%s396] %v411
            %v413 = vld [vmem:[%s403 + $0x60] sm:%s396]
            %414 = vst [vmem:[%s404 + $0x60] sm:%s396] %v413
            %v415 = vld [vmem:[%s403 + $0x78] sm:%s396]
            %416 = vst [vmem:[%s404 + $0x78] sm:%s396] %v415
            %v417 = vld [vmem:[%s403 + $0x90] sm:%s396]
            %418 = vst [vmem:[%s404 + $0x90] sm:%s396] %v417
            %v419 = vld [vmem:[%s403 + $0xa8] sm:%s396]
            %420 = vst [vmem:[%s404 + $0xa8] sm:%s396] %v419
            %v421 = vld [vmem:[%s403 + $0xc0] sm:%s396]
            %422 = vst [vmem:[%s404 + $0xc0] sm:%s396] %v421
            %v423 = vld [vmem:[%s403 + $0xd8] sm:%s396]
            %424 = vst [vmem:[%s404 + $0xd8] sm:%s396] %v423
          $region90: #{double_conv_forward.3} parent=84 // loop_footer
            %s402 = sadd.s32 1, %s398
          $region91: #{double_conv_forward.3} parent=84 // loop_footer_branch
            %397 = sbr.rel target = $region87
          $region92: #{double_conv_forward.3} parent=84 // loop_exit
            _
        $region85: #{double_conv_forward.3} parent=76 // pred_fallthru
          _
        // Predicated region
        $region111: #{double_conv_forward.3} parent=76 // pred_check
          _
        $region112: #{double_conv_forward.3} parent=76 // pred_check_branch
          %514 = sbr.rel (0) target = $region114
        $region113: #{double_conv_forward.3} parent=76 // pred_region
          %515 = vsyncadd %s387, 2880
        $region114: #{double_conv_forward.3} parent=76 // pred_fallthru
          _
      $region77: #{double_conv_forward.3} parent=31 // pred_fallthru
        _
      %v516 = vld [vmem:[%s368] sm:$0xff]
      %v517 = vld [vmem:[%s368 + $0x8] sm:$0xff]
      %v518 = vld [vmem:[%s368 + $0x10] sm:$0x3]
      %v519 = vld [vmem:[%s368 + $0x18] sm:$0xff]
      %v520 = vld [vmem:[%s368 + $0x20] sm:$0xff]
      %v521 = vld [vmem:[%s368 + $0x28] sm:$0x3]
      %v522 = vld [vmem:[%s368 + $0x30] sm:$0xff]
      %v523 = vld [vmem:[%s368 + $0x38] sm:$0xff]
      %v524 = vld [vmem:[%s368 + $0x40] sm:$0x3]
      %v525 = vld [vmem:[%s368 + $0x48] sm:$0xff]
      %v526 = vld [vmem:[%s368 + $0x50] sm:$0xff]
      %v527 = vld [vmem:[%s368 + $0x58] sm:$0x3]
      %v528 = vld [vmem:[%s368 + $0x60] sm:$0xff]
      %v529 = vld [vmem:[%s368 + $0x68] sm:$0xff]
      %v530 = vld [vmem:[%s368 + $0x70] sm:$0x3]
      %v531 = vld [vmem:[%s368 + $0x78] sm:$0xff]
      %v532 = vld [vmem:[%s368 + $0x80] sm:$0xff]
      %v533 = vld [vmem:[%s368 + $0x88] sm:$0x3]
      %v534 = vld [vmem:[%s368 + $0x90] sm:$0xff]
      %v535 = vld [vmem:[%s368 + $0x98] sm:$0xff]
      %v536 = vld [vmem:[%s368 + $0xa0] sm:$0x3]
      %v537 = vld [vmem:[%s368 + $0xa8] sm:$0xff]
      %v538 = vld [vmem:[%s368 + $0xb0] sm:$0xff]
      %v539 = vld [vmem:[%s368 + $0xb8] sm:$0x3]
      %v540 = vld [vmem:[%s368 + $0xc0] sm:$0xff]
      %v541 = vld [vmem:[%s368 + $0xc8] sm:$0xff]
      %v542 = vld [vmem:[%s368 + $0xd0] sm:$0x3]
      %v543 = vld [vmem:[%s368 + $0xd8] sm:$0xff]
      %v544 = vld [vmem:[%s368 + $0xe0] sm:$0xff]
      %v545 = vld [vmem:[%s368 + $0xe8] sm:$0x3]
      %vm570 = vcmask 1046528
      %v571 = vrot.slane %v516, 1
      %v572 = vrot.slane %v517, 1
      %v573 = vsel %vm570, %v571, %v572
      %v574 = vrot.slane %v518, 1
      %v575 = vsel %vm570, %v572, %v574
      %v576 = vrot.slane %v519, 1
      %v577 = vrot.slane %v520, 1
      %v578 = vsel %vm570, %v576, %v577
      %v579 = vrot.slane %v521, 1
      %v580 = vsel %vm570, %v577, %v579
      %v581 = vrot.slane %v522, 1
      %v582 = vrot.slane %v523, 1
      %v583 = vsel %vm570, %v581, %v582
      %v584 = vrot.slane %v524, 1
      %v585 = vsel %vm570, %v582, %v584
      %v586 = vrot.slane %v525, 1
      %v587 = vrot.slane %v526, 1
      %v588 = vsel %vm570, %v586, %v587
      %v589 = vrot.slane %v527, 1
      %v590 = vsel %vm570, %v587, %v589
      %v591 = vrot.slane %v528, 1
      %v592 = vrot.slane %v529, 1
      %v593 = vsel %vm570, %v591, %v592
      %v594 = vrot.slane %v530, 1
      %v595 = vsel %vm570, %v592, %v594
      %v596 = vrot.slane %v531, 1
      %v597 = vrot.slane %v532, 1
      %v598 = vsel %vm570, %v596, %v597
      %v599 = vrot.slane %v533, 1
      %v600 = vsel %vm570, %v597, %v599
      %v601 = vrot.slane %v534, 1
      %v602 = vrot.slane %v535, 1
      %v603 = vsel %vm570, %v601, %v602
      %v604 = vrot.slane %v536, 1
      %v605 = vsel %vm570, %v602, %v604
      %v606 = vrot.slane %v537, 1
      %v607 = vrot.slane %v538, 1
      %v608 = vsel %vm570, %v606, %v607
      %v609 = vrot.slane %v539, 1
      %v610 = vsel %vm570, %v607, %v609
      %vm627 = vcmask 1045504
      %v628 = vrot.slane %v516, 2
      %v629 = vrot.slane %v517, 2
      %v630 = vsel %vm627, %v628, %v629
      %v631 = vrot.slane %v518, 2
      %v632 = vsel %vm627, %v629, %v631
      %v633 = vrot.slane %v519, 2
      %v634 = vrot.slane %v520, 2
      %v635 = vsel %vm627, %v633, %v634
      %v636 = vrot.slane %v521, 2
      %v637 = vsel %vm627, %v634, %v636
      %v638 = vrot.slane %v522, 2
      %v639 = vrot.slane %v523, 2
      %v640 = vsel %vm627, %v638, %v639
      %v641 = vrot.slane %v524, 2
      %v642 = vsel %vm627, %v639, %v641
      %v643 = vrot.slane %v525, 2
      %v644 = vrot.slane %v526, 2
      %v645 = vsel %vm627, %v643, %v644
      %v646 = vrot.slane %v527, 2
      %v647 = vsel %vm627, %v644, %v646
      %v648 = vrot.slane %v528, 2
      %v649 = vrot.slane %v529, 2
      %v650 = vsel %vm627, %v648, %v649
      %v651 = vrot.slane %v530, 2
      %v652 = vsel %vm627, %v649, %v651
      %v653 = vrot.slane %v531, 2
      %v654 = vrot.slane %v532, 2
      %v655 = vsel %vm627, %v653, %v654
      %v656 = vrot.slane %v533, 2
      %v657 = vsel %vm627, %v654, %v656
      %v658 = vrot.slane %v534, 2
      %v659 = vrot.slane %v535, 2
      %v660 = vsel %vm627, %v658, %v659
      %v661 = vrot.slane %v536, 2
      %v662 = vsel %vm627, %v659, %v661
      %v663 = vrot.slane %v537, 2
      %v664 = vrot.slane %v538, 2
      %v665 = vsel %vm627, %v663, %v664
      %v666 = vrot.slane %v539, 2
      %v667 = vsel %vm627, %v664, %v666
      %v687 = vrot.slane %v540, 1
      %v688 = vrot.slane %v541, 1
      %v689 = vsel %vm570, %v687, %v688
      %v690 = vrot.slane %v542, 1
      %v691 = vsel %vm570, %v688, %v690
      %v694 = vrot.slane %v540, 2
      %v695 = vrot.slane %v541, 2
      %v696 = vsel %vm627, %v694, %v695
      %v697 = vrot.slane %v542, 2
      %v698 = vsel %vm627, %v695, %v697
      %v704 = vrot.slane %v543, 1
      %v705 = vrot.slane %v544, 1
      %v706 = vsel %vm570, %v704, %v705
      %v707 = vrot.slane %v545, 1
      %v708 = vsel %vm570, %v705, %v707
      %v711 = vrot.slane %v543, 2
      %v712 = vrot.slane %v544, 2
      %v713 = vsel %vm627, %v711, %v712
      %v714 = vrot.slane %v545, 2
      %v715 = vsel %vm627, %v712, %v714
      %v718 = vld [vmem:[%s1] sm:$0xff]
      %v719 = vld [vmem:[%s1 + $0x8] sm:$0xff]
      %v720 = vld [vmem:[%s1 + $0x10] sm:$0xff]
      %v721 = vld [vmem:[%s1 + $0x18] sm:$0xff]
      %v722 = vld [vmem:[%s1 + $0x20] sm:$0xff]
      %v723 = vld [vmem:[%s1 + $0x28] sm:$0xff]
      %v724 = vld [vmem:[%s1 + $0x30] sm:$0xff]
      %v725 = vld [vmem:[%s1 + $0x38] sm:$0xff]
      %v726 = vld [vmem:[%s1 + $0x40] sm:$0xff]
      %v727 = vld [vmem:[%s1 + $0x48] sm:$0xff]
      %v728 = vld [vmem:[%s1 + $0x50] sm:$0xff]
      %v729 = vld [vmem:[%s1 + $0x58] sm:$0xff]
      %v730 = vld [vmem:[%s1 + $0x60] sm:$0xff]
      %v731 = vld [vmem:[%s1 + $0x68] sm:$0xff]
      %v732 = vld [vmem:[%s1 + $0x70] sm:$0xff]
      %v733 = vld [vmem:[%s1 + $0x78] sm:$0xff]
      %v734 = vld [vmem:[%s1 + $0x80] sm:$0xff]
      %v735 = vld [vmem:[%s1 + $0x88] sm:$0xff]
      %v736 = vld [vmem:[%s1 + $0x90] sm:$0xff]
      %v737 = vld [vmem:[%s1 + $0x98] sm:$0xff]
      %v738 = vld [vmem:[%s1 + $0xa0] sm:$0xff]
      %v739 = vld [vmem:[%s1 + $0xa8] sm:$0xff]
      %v740 = vld [vmem:[%s1 + $0xb0] sm:$0xff]
      %v741 = vld [vmem:[%s1 + $0xb8] sm:$0xff]
      %v742 = vld [vmem:[%s1 + $0xc0] sm:$0xff]
      %v743 = vld [vmem:[%s1 + $0xc8] sm:$0xff]
      %v744 = vld [vmem:[%s1 + $0xd0] sm:$0xff]
      %v745 = vld [vmem:[%s1 + $0xd8] sm:$0xff]
      %v746 = vld [vmem:[%s1 + $0xe0] sm:$0xff]
      %v747 = vld [vmem:[%s1 + $0xe8] sm:$0xff]
      %v748 = vld [vmem:[%s1 + $0xf0] sm:$0xff]
      %v749 = vld [vmem:[%s1 + $0xf8] sm:$0xff]
      %v750 = vld [vmem:[%s1 + $0x100] sm:$0xff]
      %v751 = vld [vmem:[%s1 + $0x108] sm:$0xff]
      %v752 = vld [vmem:[%s1 + $0x110] sm:$0xff]
      %v753 = vld [vmem:[%s1 + $0x118] sm:$0xff]
      %v754 = vld [vmem:[%s1 + $0x120] sm:$0xff]
      %v755 = vld [vmem:[%s1 + $0x128] sm:$0xff]
      %v756 = vld [vmem:[%s1 + $0x130] sm:$0xff]
      %v757 = vld [vmem:[%s1 + $0x138] sm:$0xff]
      %v758 = vld [vmem:[%s1 + $0x140] sm:$0xff]
      %v759 = vld [vmem:[%s1 + $0x148] sm:$0xff]
      %v760 = vld [vmem:[%s1 + $0x150] sm:$0xff]
      %v761 = vld [vmem:[%s1 + $0x158] sm:$0xff]
      %v762 = vld [vmem:[%s1 + $0x160] sm:$0xff]
      %v763 = vld [vmem:[%s1 + $0x168] sm:$0xff]
      %v764 = vld [vmem:[%s1 + $0x170] sm:$0xff]
      %v765 = vld [vmem:[%s1 + $0x178] sm:$0xff]
      %v766 = vld [vmem:[%s1 + $0x180] sm:$0xff]
      %v767 = vld [vmem:[%s1 + $0x188] sm:$0xff]
      %v768 = vld [vmem:[%s1 + $0x190] sm:$0xff]
      %v769 = vld [vmem:[%s1 + $0x198] sm:$0xff]
      %v770 = vld [vmem:[%s1 + $0x1a0] sm:$0xff]
      %v771 = vld [vmem:[%s1 + $0x1a8] sm:$0xff]
      %v772 = vld [vmem:[%s1 + $0x1b0] sm:$0xff]
      %v773 = vld [vmem:[%s1 + $0x1b8] sm:$0xff]
      %v774 = vld [vmem:[%s1 + $0x1c0] sm:$0xff]
      %v775 = vld [vmem:[%s1 + $0x1c8] sm:$0xff]
      %v776 = vld [vmem:[%s1 + $0x1d0] sm:$0xff]
      %v777 = vld [vmem:[%s1 + $0x1d8] sm:$0xff]
      %v778 = vld [vmem:[%s1 + $0x1e0] sm:$0xff]
      %v779 = vld [vmem:[%s1 + $0x1e8] sm:$0xff]
      %v780 = vld [vmem:[%s1 + $0x1f0] sm:$0xff]
      %v781 = vld [vmem:[%s1 + $0x1f8] sm:$0xff]
      %v782 = vld [vmem:[%s1 + $0x200] sm:$0xff]
      %v783 = vld [vmem:[%s1 + $0x208] sm:$0xff]
      %v784 = vld [vmem:[%s1 + $0x210] sm:$0xff]
      %v785 = vld [vmem:[%s1 + $0x218] sm:$0xff]
      %v786 = vld [vmem:[%s1 + $0x220] sm:$0xff]
      %v787 = vld [vmem:[%s1 + $0x228] sm:$0xff]
      %v788 = vld [vmem:[%s1 + $0x230] sm:$0xff]
      %v789 = vld [vmem:[%s1 + $0x238] sm:$0xff]
      %v790 = vld [vmem:[%s1 + $0x240] sm:$0xff]
      %v791 = vld [vmem:[%s1 + $0x248] sm:$0xff]
      %v792 = vld [vmem:[%s1 + $0x250] sm:$0xff]
      %v793 = vld [vmem:[%s1 + $0x258] sm:$0xff]
      %v794 = vld [vmem:[%s1 + $0x260] sm:$0xff]
      %v795 = vld [vmem:[%s1 + $0x268] sm:$0xff]
      %v796 = vld [vmem:[%s1 + $0x270] sm:$0xff]
      %v797 = vld [vmem:[%s1 + $0x278] sm:$0xff]
      %v798 = vld [vmem:[%s1 + $0x280] sm:$0xff]
      %v799 = vld [vmem:[%s1 + $0x288] sm:$0xff]
      %v800 = vld [vmem:[%s1 + $0x290] sm:$0xff]
      %v801 = vld [vmem:[%s1 + $0x298] sm:$0xff]
      %v802 = vld [vmem:[%s1 + $0x2a0] sm:$0xff]
      %v803 = vld [vmem:[%s1 + $0x2a8] sm:$0xff]
      %v804 = vld [vmem:[%s1 + $0x2b0] sm:$0xff]
      %v805 = vld [vmem:[%s1 + $0x2b8] sm:$0xff]
      %v806 = vld [vmem:[%s1 + $0x2c0] sm:$0xff]
      %v807 = vld [vmem:[%s1 + $0x2c8] sm:$0xff]
      %v808 = vld [vmem:[%s1 + $0x2d0] sm:$0xff]
      %v809 = vld [vmem:[%s1 + $0x2d8] sm:$0xff]
      %v810 = vld [vmem:[%s1 + $0x2e0] sm:$0xff]
      %v811 = vld [vmem:[%s1 + $0x2e8] sm:$0xff]
      %v812 = vld [vmem:[%s1 + $0x2f0] sm:$0xff]
      %v813 = vld [vmem:[%s1 + $0x2f8] sm:$0xff]
      %v814 = vld [vmem:[%s1 + $0x300] sm:$0xff]
      %v815 = vld [vmem:[%s1 + $0x308] sm:$0xff]
      %v816 = vld [vmem:[%s1 + $0x310] sm:$0xff]
      %v817 = vld [vmem:[%s1 + $0x318] sm:$0xff]
      %v818 = vld [vmem:[%s1 + $0x320] sm:$0xff]
      %v819 = vld [vmem:[%s1 + $0x328] sm:$0xff]
      %v820 = vld [vmem:[%s1 + $0x330] sm:$0xff]
      %v821 = vld [vmem:[%s1 + $0x338] sm:$0xff]
      %v822 = vld [vmem:[%s1 + $0x340] sm:$0xff]
      %v823 = vld [vmem:[%s1 + $0x348] sm:$0xff]
      %v824 = vld [vmem:[%s1 + $0x350] sm:$0xff]
      %v825 = vld [vmem:[%s1 + $0x358] sm:$0xff]
      %v826 = vld [vmem:[%s1 + $0x360] sm:$0xff]
      %v827 = vld [vmem:[%s1 + $0x368] sm:$0xff]
      %v828 = vld [vmem:[%s1 + $0x370] sm:$0xff]
      %v829 = vld [vmem:[%s1 + $0x378] sm:$0xff]
      %v830 = vld [vmem:[%s1 + $0x380] sm:$0xff]
      %v831 = vld [vmem:[%s1 + $0x388] sm:$0xff]
      %v832 = vld [vmem:[%s1 + $0x390] sm:$0xff]
      %v833 = vld [vmem:[%s1 + $0x398] sm:$0xff]
      %v834 = vld [vmem:[%s1 + $0x3a0] sm:$0xff]
      %v835 = vld [vmem:[%s1 + $0x3a8] sm:$0xff]
      %v836 = vld [vmem:[%s1 + $0x3b0] sm:$0xff]
      %v837 = vld [vmem:[%s1 + $0x3b8] sm:$0xff]
      %v838 = vld [vmem:[%s1 + $0x3c0] sm:$0xff]
      %v839 = vld [vmem:[%s1 + $0x3c8] sm:$0xff]
      %v840 = vld [vmem:[%s1 + $0x3d0] sm:$0xff]
      %v841 = vld [vmem:[%s1 + $0x3d8] sm:$0xff]
      %v842 = vld [vmem:[%s1 + $0x3e0] sm:$0xff]
      %v843 = vld [vmem:[%s1 + $0x3e8] sm:$0xff]
      %v844 = vld [vmem:[%s1 + $0x3f0] sm:$0xff]
      %v845 = vld [vmem:[%s1 + $0x3f8] sm:$0xff]
      %v846 = vld [vmem:[%s1 + $0x400] sm:$0xff]
      %v847 = vld [vmem:[%s1 + $0x408] sm:$0xff]
      %v848 = vld [vmem:[%s1 + $0x410] sm:$0xff]
      %v849 = vld [vmem:[%s1 + $0x418] sm:$0xff]
      %v850 = vld [vmem:[%s1 + $0x420] sm:$0xff]
      %v851 = vld [vmem:[%s1 + $0x428] sm:$0xff]
      %v852 = vld [vmem:[%s1 + $0x430] sm:$0xff]
      %v853 = vld [vmem:[%s1 + $0x438] sm:$0xff]
      %v854 = vld [vmem:[%s1 + $0x440] sm:$0xff]
      %v855 = vld [vmem:[%s1 + $0x448] sm:$0xff]
      %v856 = vld [vmem:[%s1 + $0x450] sm:$0xff]
      %v857 = vld [vmem:[%s1 + $0x458] sm:$0xff]
      %v858 = vld [vmem:[%s1 + $0x460] sm:$0xff]
      %v859 = vld [vmem:[%s1 + $0x468] sm:$0xff]
      %v860 = vld [vmem:[%s1 + $0x470] sm:$0xff]
      %v861 = vld [vmem:[%s1 + $0x478] sm:$0xff]
      %862 = vmatprep.subr.mxu0 0.0
      %863 = vmatpush1.msra.mxu0 %v718
      %864 = vmatprep.subr.mxu0 0.0
      %865 = vmatpush1.msra.mxu0 %v719
      %866 = vmatprep.subr.mxu0 0.0
      %867 = vmatpush1.msra.mxu0 %v720
      %868 = vmatprep.subr.mxu0 0.0
      %869 = vmatpush1.msra.mxu0 %v721
      %870 = vmatprep.subr.mxu0 0.0
      %871 = vmatpush1.msra.mxu0 %v722
      %872 = vmatprep.subr.mxu0 0.0
      %873 = vmatpush1.msra.mxu0 %v723
      %874 = vmatprep.subr.mxu0 0.0
      %875 = vmatpush1.msra.mxu0 %v724
      %876 = vmatprep.subr.mxu0 0.0
      %877 = vmatpush1.msra.mxu0 %v725
      %878 = vmatprep.subr.mxu0 0.0
      %879 = vmatpush1.msra.mxu0 %v726
      %880 = vmatprep.subr.mxu0 0.0
      %881 = vmatpush1.msra.mxu0 %v727
      %882 = vmatprep.subr.mxu0 0.0
      %883 = vmatpush1.msra.mxu0 %v728
      %884 = vmatprep.subr.mxu0 0.0
      %885 = vmatpush1.msra.mxu0 %v729
      %886 = vmatprep.subr.mxu0 0.0
      %887 = vmatpush1.msra.mxu0 %v730
      %888 = vmatprep.subr.mxu0 0.0
      %889 = vmatpush1.msra.mxu0 %v731
      %890 = vmatprep.subr.mxu0 0.0
      %891 = vmatpush1.msra.mxu0 %v732
      %892 = vmatprep.subr.mxu0 0.0
      %893 = vmatpush1.msra.mxu0 %v733
      %894 = vmatprep.subr.mxu0 0.0
      %895 = vmatpush1.msra.mxu0 %v734
      %896 = vmatprep.subr.mxu0 0.0
      %897 = vmatpush1.msra.mxu0 %v735
      %898 = vmatprep.subr.mxu0 0.0
      %899 = vmatpush1.msra.mxu0 %v736
      %900 = vmatprep.subr.mxu0 0.0
      %901 = vmatpush1.msra.mxu0 %v737
      %902 = vmatprep.subr.mxu0 0.0
      %903 = vmatpush1.msra.mxu0 %v738
      %904 = vmatprep.subr.mxu0 0.0
      %905 = vmatpush1.msra.mxu0 %v739
      %906 = vmatprep.subr.mxu0 0.0
      %907 = vmatpush1.msra.mxu0 %v740
      %908 = vmatprep.subr.mxu0 0.0
      %909 = vmatpush1.msra.mxu0 %v741
      %910 = vmatprep.subr.mxu0 0.0
      %911 = vmatpush1.msra.mxu0 %v742
      %912 = vmatprep.subr.mxu0 0.0
      %913 = vmatpush1.msra.mxu0 %v743
      %914 = vmatprep.subr.mxu0 0.0
      %915 = vmatpush1.msra.mxu0 %v744
      %916 = vmatprep.subr.mxu0 0.0
      %917 = vmatpush1.msra.mxu0 %v745
      %918 = vmatprep.subr.mxu0 0.0
      %919 = vmatpush1.msra.mxu0 %v746
      %920 = vmatprep.subr.mxu0 0.0
      %921 = vmatpush1.msra.mxu0 %v747
      %922 = vmatprep.subr.mxu0 0.0
      %923 = vmatpush1.msra.mxu0 %v748
      %924 = vmatprep.subr.mxu0 0.0
      %925 = vmatpush1.msra.mxu0 %v749
      %926 = vmatprep.mubr.f32.mxu0 %v573
      %927 = vmatmul.mubr.f32.gmra.mrb[0].mxu0 %v516
      %v928 = vpop.f32.mrb[0].mxu0
      %v929 = vadd.f32 0.0, %v928
      %v930 = vpop.f32.mrb[0].mxu0
      %931 = vmatprep.mubr.f32.mxu0 %v575
      %932 = vmatmul.mubr.f32.gmra.mrb[0].mxu0 %v517
      %v933 = vpop.f32.mrb[0].mxu0
      %v934 = vadd.f32 0.0, %v933
      %v935 = vpop.f32.mrb[0].mxu0
      %936 = vmatprep.mubr.f32.mxu0 %v578
      %937 = vmatmul.mubr.f32.gmra.mrb[0].mxu0 %v519
      %v938 = vpop.f32.mrb[0].mxu0
      %v939 = vadd.f32 0.0, %v938
      %v940 = vpop.f32.mrb[0].mxu0
      %941 = vmatprep.mubr.f32.mxu0 %v580
      %942 = vmatmul.mubr.f32.gmra.mrb[0].mxu0 %v520
      %v943 = vpop.f32.mrb[0].mxu0
      %v944 = vadd.f32 0.0, %v943
      %v945 = vpop.f32.mrb[0].mxu0
      %946 = vmatprep.mubr.f32.mxu0 %v583
      %947 = vmatmul.mubr.f32.gmra.mrb[0].mxu0 %v522
      %v948 = vpop.f32.mrb[0].mxu0
      %v949 = vadd.f32 0.0, %v948
      %v950 = vpop.f32.mrb[0].mxu0
      %951 = vmatprep.mubr.f32.mxu0 %v585
      %952 = vmatmul.mubr.f32.gmra.mrb[0].mxu0 %v523
      %v953 = vpop.f32.mrb[0].mxu0
      %v954 = vadd.f32 0.0, %v953
      %v955 = vpop.f32.mrb[0].mxu0
      %956 = vmatprep.mubr.f32.mxu0 %v588
      %957 = vmatmul.mubr.f32.gmra.mrb[0].mxu0 %v525
      %v958 = vpop.f32.mrb[0].mxu0
      %v959 = vadd.f32 0.0, %v958
      %v960 = vpop.f32.mrb[0].mxu0
      %961 = vmatprep.mubr.f32.mxu0 %v590
      %962 = vmatmul.mubr.f32.gmra.mrb[0].mxu0 %v526
      %v963 = vpop.f32.mrb[0].mxu0
      %v964 = vadd.f32 0.0, %v963
      %v965 = vpop.f32.mrb[0].mxu0
      %966 = vmatprep.mubr.f32.mxu0 %v593
      %967 = vmatmul.mubr.f32.gmra.mrb[0].mxu0 %v528
      %v968 = vpop.f32.mrb[0].mxu0
      %v969 = vadd.f32 0.0, %v968
      %v970 = vpop.f32.mrb[0].mxu0
      %971 = vmatprep.mubr.f32.mxu0 %v595
      %972 = vmatmul.mubr.f32.gmra.mrb[0].mxu0 %v529
      %v973 = vpop.f32.mrb[0].mxu0
      %v974 = vadd.f32 0.0, %v973
      %v975 = vpop.f32.mrb[0].mxu0
      %976 = vmatprep.mubr.f32.mxu0 %v598
      %977 = vmatmul.mubr.f32.gmra.mrb[0].mxu0 %v531
      %v978 = vpop.f32.mrb[0].mxu0
      %v979 = vadd.f32 0.0, %v978
      %v980 = vpop.f32.mrb[0].mxu0
      %981 = vmatprep.mubr.f32.mxu0 %v600
      %982 = vmatmul.mubr.f32.gmra.mrb[0].mxu0 %v532
      %v983 = vpop.f32.mrb[0].mxu0
      %v984 = vadd.f32 0.0, %v983
      %v985 = vpop.f32.mrb[0].mxu0
      %986 = vmatprep.mubr.f32.mxu0 %v603
      %987 = vmatmul.mubr.f32.gmra.mrb[0].mxu0 %v534
      %v988 = vpop.f32.mrb[0].mxu0
      %v989 = vadd.f32 0.0, %v988
      %v990 = vpop.f32.mrb[0].mxu0
      %991 = vmatprep.mubr.f32.mxu0 %v605
      %992 = vmatmul.mubr.f32.gmra.mrb[0].mxu0 %v535
      %v993 = vpop.f32.mrb[0].mxu0
      %v994 = vadd.f32 0.0, %v993
      %v995 = vpop.f32.mrb[0].mxu0
      %996 = vmatprep.mubr.f32.mxu0 %v608
      %997 = vmatmul.mubr.f32.gmra.mrb[0].mxu0 %v537
      %v998 = vpop.f32.mrb[0].mxu0
      %v999 = vadd.f32 0.0, %v998
      %v1000 = vpop.f32.mrb[0].mxu0
      %1001 = vmatprep.mubr.f32.mxu0 %v610
      %1002 = vmatmul.mubr.f32.gmra.mrb[0].mxu0 %v538
      %v1003 = vpop.f32.mrb[0].mxu0
      %v1004 = vadd.f32 0.0, %v1003
      %v1005 = vpop.f32.mrb[0].mxu0
      %1006 = vdwg.mxu0
      %1007 = vmatprep.subr.mxu0 0.0
      %1008 = vmatpush1.msra.mxu0 %v750
      %1009 = vmatprep.subr.mxu0 0.0
      %1010 = vmatpush1.msra.mxu0 %v751
      %1011 = vmatprep.subr.mxu0 0.0
      %1012 = vmatpush1.msra.mxu0 %v752
      %1013 = vmatprep.subr.mxu0 0.0
      %1014 = vmatpush1.msra.mxu0 %v753
      %1015 = vmatprep.subr.mxu0 0.0
      %1016 = vmatpush1.msra.mxu0 %v754
      %1017 = vmatprep.subr.mxu0 0.0
      %1018 = vmatpush1.msra.mxu0 %v755
      %1019 = vmatprep.subr.mxu0 0.0
      %1020 = vmatpush1.msra.mxu0 %v756
      %1021 = vmatprep.subr.mxu0 0.0
      %1022 = vmatpush1.msra.mxu0 %v757
      %1023 = vmatprep.subr.mxu0 0.0
      %1024 = vmatpush1.msra.mxu0 %v758
      %1025 = vmatprep.subr.mxu0 0.0
      %1026 = vmatpush1.msra.mxu0 %v759
      %1027 = vmatprep.subr.mxu0 0.0
      %1028 = vmatpush1.msra.mxu0 %v760
      %1029 = vmatprep.subr.mxu0 0.0
      %1030 = vmatpush1.msra.mxu0 %v761
      %1031 = vmatprep.subr.mxu0 0.0
      %1032 = vmatpush1.msra.mxu0 %v762
      %1033 = vmatprep.subr.mxu0 0.0
      %1034 = vmatpush1.msra.mxu0 %v763
      %1035 = vmatprep.subr.mxu0 0.0
      %1036 = vmatpush1.msra.mxu0 %v764
      %1037 = vmatprep.subr.mxu0 0.0
      %1038 = vmatpush1.msra.mxu0 %v765
      %1039 = vmatprep.subr.mxu0 0.0
      %1040 = vmatpush1.msra.mxu0 %v766
      %1041 = vmatprep.subr.mxu0 0.0
      %1042 = vmatpush1.msra.mxu0 %v767
      %1043 = vmatprep.subr.mxu0 0.0
      %1044 = vmatpush1.msra.mxu0 %v768
      %1045 = vmatprep.subr.mxu0 0.0
      %1046 = vmatpush1.msra.mxu0 %v769
      %1047 = vmatprep.subr.mxu0 0.0
      %1048 = vmatpush1.msra.mxu0 %v770
      %1049 = vmatprep.subr.mxu0 0.0
      %1050 = vmatpush1.msra.mxu0 %v771
      %1051 = vmatprep.subr.mxu0 0.0
      %1052 = vmatpush1.msra.mxu0 %v772
      %1053 = vmatprep.subr.mxu0 0.0
      %1054 = vmatpush1.msra.mxu0 %v773
      %1055 = vmatprep.subr.mxu0 0.0
      %1056 = vmatpush1.msra.mxu0 %v774
      %1057 = vmatprep.subr.mxu0 0.0
      %1058 = vmatpush1.msra.mxu0 %v775
      %1059 = vmatprep.subr.mxu0 0.0
      %1060 = vmatpush1.msra.mxu0 %v776
      %1061 = vmatprep.subr.mxu0 0.0
      %1062 = vmatpush1.msra.mxu0 %v777
      %1063 = vmatprep.subr.mxu0 0.0
      %1064 = vmatpush1.msra.mxu0 %v778
      %1065 = vmatprep.subr.mxu0 0.0
      %1066 = vmatpush1.msra.mxu0 %v779
      %1067 = vmatprep.subr.mxu0 0.0
      %1068 = vmatpush1.msra.mxu0 %v780
      %1069 = vmatprep.subr.mxu0 0.0
      %1070 = vmatpush1.msra.mxu0 %v781
      %1071 = vmatprep.mubr.f32.mxu0 %v519
      %1072 = vmatmul.mubr.f32.gmra.mrb[0].mxu0 %v630
      %v1073 = vpop.f32.mrb[0].mxu0
      %v1074 = vadd.f32 %v929, %v1073
      %v1075 = vpop.f32.mrb[0].mxu0
      %1076 = vmatprep.mubr.f32.mxu0 %v520
      %1077 = vmatmul.mubr.f32.gmra.mrb[0].mxu0 %v632
      %v1078 = vpop.f32.mrb[0].mxu0
      %v1079 = vadd.f32 %v934, %v1078
      %v1080 = vpop.f32.mrb[0].mxu0
      %1081 = vmatprep.mubr.f32.mxu0 %v522
      %1082 = vmatmul.mubr.f32.gmra.mrb[0].mxu0 %v635
      %v1083 = vpop.f32.mrb[0].mxu0
      %v1084 = vadd.f32 %v939, %v1083
      %v1085 = vpop.f32.mrb[0].mxu0
      %1086 = vmatprep.mubr.f32.mxu0 %v523
      %1087 = vmatmul.mubr.f32.gmra.mrb[0].mxu0 %v637
      %v1088 = vpop.f32.mrb[0].mxu0
      %v1089 = vadd.f32 %v944, %v1088
      %v1090 = vpop.f32.mrb[0].mxu0
      %1091 = vmatprep.mubr.f32.mxu0 %v525
      %1092 = vmatmul.mubr.f32.gmra.mrb[0].mxu0 %v640
      %v1093 = vpop.f32.mrb[0].mxu0
      %v1094 = vadd.f32 %v949, %v1093
      %v1095 = vpop.f32.mrb[0].mxu0
      %1096 = vmatprep.mubr.f32.mxu0 %v526
      %1097 = vmatmul.mubr.f32.gmra.mrb[0].mxu0 %v642
      %v1098 = vpop.f32.mrb[0].mxu0
      %v1099 = vadd.f32 %v954, %v1098
      %v1100 = vpop.f32.mrb[0].mxu0
      %1101 = vmatprep.mubr.f32.mxu0 %v528
      %1102 = vmatmul.mubr.f32.gmra.mrb[0].mxu0 %v645
      %v1103 = vpop.f32.mrb[0].mxu0
      %v1104 = vadd.f32 %v959, %v1103
      %v1105 = vpop.f32.mrb[0].mxu0
      %1106 = vmatprep.mubr.f32.mxu0 %v529
      %1107 = vmatmul.mubr.f32.gmra.mrb[0].mxu0 %v647
      %v1108 = vpop.f32.mrb[0].mxu0
      %v1109 = vadd.f32 %v964, %v1108
      %v1110 = vpop.f32.mrb[0].mxu0
      %1111 = vmatprep.mubr.f32.mxu0 %v531
      %1112 = vmatmul.mubr.f32.gmra.mrb[0].mxu0 %v650
      %v1113 = vpop.f32.mrb[0].mxu0
      %v1114 = vadd.f32 %v969, %v1113
      %v1115 = vpop.f32.mrb[0].mxu0
      %1116 = vmatprep.mubr.f32.mxu0 %v532
      %1117 = vmatmul.mubr.f32.gmra.mrb[0].mxu0 %v652
      %v1118 = vpop.f32.mrb[0].mxu0
      %v1119 = vadd.f32 %v974, %v1118
      %v1120 = vpop.f32.mrb[0].mxu0
      %1121 = vmatprep.mubr.f32.mxu0 %v534
      %1122 = vmatmul.mubr.f32.gmra.mrb[0].mxu0 %v655
      %v1123 = vpop.f32.mrb[0].mxu0
      %v1124 = vadd.f32 %v979, %v1123
      %v1125 = vpop.f32.mrb[0].mxu0
      %1126 = vmatprep.mubr.f32.mxu0 %v535
      %1127 = vmatmul.mubr.f32.gmra.mrb[0].mxu0 %v657
      %v1128 = vpop.f32.mrb[0].mxu0
      %v1129 = vadd.f32 %v984, %v1128
      %v1130 = vpop.f32.mrb[0].mxu0
      %1131 = vmatprep.mubr.f32.mxu0 %v537
      %1132 = vmatmul.mubr.f32.gmra.mrb[0].mxu0 %v660
      %v1133 = vpop.f32.mrb[0].mxu0
      %v1134 = vadd.f32 %v989, %v1133
      %v1135 = vpop.f32.mrb[0].mxu0
      %1136 = vmatprep.mubr.f32.mxu0 %v538
      %1137 = vmatmul.mubr.f32.gmra.mrb[0].mxu0 %v662
      %v1138 = vpop.f32.mrb[0].mxu0
      %v1139 = vadd.f32 %v994, %v1138
      %v1140 = vpop.f32.mrb[0].mxu0
      %1141 = vmatprep.mubr.f32.mxu0 %v540
      %1142 = vmatmul.mubr.f32.gmra.mrb[0].mxu0 %v665
      %v1143 = vpop.f32.mrb[0].mxu0
      %v1144 = vadd.f32 %v999, %v1143
      %v1145 = vpop.f32.mrb[0].mxu0
      %1146 = vmatprep.mubr.f32.mxu0 %v541
      %1147 = vmatmul.mubr.f32.gmra.mrb[0].mxu0 %v667
      %v1148 = vpop.f32.mrb[0].mxu0
      %v1149 = vadd.f32 %v1004, %v1148
      %v1150 = vpop.f32.mrb[0].mxu0
      %1151 = vdwg.mxu0
      %1152 = vmatprep.subr.mxu0 0.0
      %1153 = vmatpush1.msra.mxu0 %v782
      %1154 = vmatprep.subr.mxu0 0.0
      %1155 = vmatpush1.msra.mxu0 %v783
      %1156 = vmatprep.subr.mxu0 0.0
      %1157 = vmatpush1.msra.mxu0 %v784
      %1158 = vmatprep.subr.mxu0 0.0
      %1159 = vmatpush1.msra.mxu0 %v785
      %1160 = vmatprep.subr.mxu0 0.0
      %1161 = vmatpush1.msra.mxu0 %v786
      %1162 = vmatprep.subr.mxu0 0.0
      %1163 = vmatpush1.msra.mxu0 %v787
      %1164 = vmatprep.subr.mxu0 0.0
      %1165 = vmatpush1.msra.mxu0 %v788
      %1166 = vmatprep.subr.mxu0 0.0
      %1167 = vmatpush1.msra.mxu0 %v789
      %1168 = vmatprep.subr.mxu0 0.0
      %1169 = vmatpush1.msra.mxu0 %v790
      %1170 = vmatprep.subr.mxu0 0.0
      %1171 = vmatpush1.msra.mxu0 %v791
      %1172 = vmatprep.subr.mxu0 0.0
      %1173 = vmatpush1.msra.mxu0 %v792
      %1174 = vmatprep.subr.mxu0 0.0
      %1175 = vmatpush1.msra.mxu0 %v793
      %1176 = vmatprep.subr.mxu0 0.0
      %1177 = vmatpush1.msra.mxu0 %v794
      %1178 = vmatprep.subr.mxu0 0.0
      %1179 = vmatpush1.msra.mxu0 %v795
      %1180 = vmatprep.subr.mxu0 0.0
      %1181 = vmatpush1.msra.mxu0 %v796
      %1182 = vmatprep.subr.mxu0 0.0
      %1183 = vmatpush1.msra.mxu0 %v797
      %1184 = vmatprep.subr.mxu0 0.0
      %1185 = vmatpush1.msra.mxu0 %v798
      %1186 = vmatprep.subr.mxu0 0.0
      %1187 = vmatpush1.msra.mxu0 %v799
      %1188 = vmatprep.subr.mxu0 0.0
      %1189 = vmatpush1.msra.mxu0 %v800
      %1190 = vmatprep.subr.mxu0 0.0
      %1191 = vmatpush1.msra.mxu0 %v801
      %1192 = vmatprep.subr.mxu0 0.0
      %1193 = vmatpush1.msra.mxu0 %v802
      %1194 = vmatprep.subr.mxu0 0.0
      %1195 = vmatpush1.msra.mxu0 %v803
      %1196 = vmatprep.subr.mxu0 0.0
      %1197 = vmatpush1.msra.mxu0 %v804
      %1198 = vmatprep.subr.mxu0 0.0
      %1199 = vmatpush1.msra.mxu0 %v805
      %1200 = vmatprep.subr.mxu0 0.0
      %1201 = vmatpush1.msra.mxu0 %v806
      %1202 = vmatprep.subr.mxu0 0.0
      %1203 = vmatpush1.msra.mxu0 %v807
      %1204 = vmatprep.subr.mxu0 0.0
      %1205 = vmatpush1.msra.mxu0 %v808
      %1206 = vmatprep.subr.mxu0 0.0
      %1207 = vmatpush1.msra.mxu0 %v809
      %1208 = vmatprep.subr.mxu0 0.0
      %1209 = vmatpush1.msra.mxu0 %v810
      %1210 = vmatprep.subr.mxu0 0.0
      %1211 = vmatpush1.msra.mxu0 %v811
      %1212 = vmatprep.subr.mxu0 0.0
      %1213 = vmatpush1.msra.mxu0 %v812
      %1214 = vmatprep.subr.mxu0 0.0
      %1215 = vmatpush1.msra.mxu0 %v813
      %1216 = vmatprep.mubr.f32.mxu0 %v635
      %1217 = vmatmul.mubr.f32.gmra.mrb[0].mxu0 %v578
      %v1218 = vpop.f32.mrb[0].mxu0
      %v1219 = vadd.f32 %v1074, %v1218
      %v1220 = vpop.f32.mrb[0].mxu0
      %1221 = vmatprep.mubr.f32.mxu0 %v637
      %1222 = vmatmul.mubr.f32.gmra.mrb[0].mxu0 %v580
      %v1223 = vpop.f32.mrb[0].mxu0
      %v1224 = vadd.f32 %v1079, %v1223
      %v1225 = vpop.f32.mrb[0].mxu0
      %1226 = vmatprep.mubr.f32.mxu0 %v640
      %1227 = vmatmul.mubr.f32.gmra.mrb[0].mxu0 %v583
      %v1228 = vpop.f32.mrb[0].mxu0
      %v1229 = vadd.f32 %v1084, %v1228
      %v1230 = vpop.f32.mrb[0].mxu0
      %1231 = vmatprep.mubr.f32.mxu0 %v642
      %1232 = vmatmul.mubr.f32.gmra.mrb[0].mxu0 %v585
      %v1233 = vpop.f32.mrb[0].mxu0
      %v1234 = vadd.f32 %v1089, %v1233
      %v1235 = vpop.f32.mrb[0].mxu0
      %1236 = vmatprep.mubr.f32.mxu0 %v645
      %1237 = vmatmul.mubr.f32.gmra.mrb[0].mxu0 %v588
      %v1238 = vpop.f32.mrb[0].mxu0
      %v1239 = vadd.f32 %v1094, %v1238
      %v1240 = vpop.f32.mrb[0].mxu0
      %1241 = vmatprep.mubr.f32.mxu0 %v647
      %1242 = vmatmul.mubr.f32.gmra.mrb[0].mxu0 %v590
      %v1243 = vpop.f32.mrb[0].mxu0
      %v1244 = vadd.f32 %v1099, %v1243
      %v1245 = vpop.f32.mrb[0].mxu0
      %1246 = vmatprep.mubr.f32.mxu0 %v650
      %1247 = vmatmul.mubr.f32.gmra.mrb[0].mxu0 %v593
      %v1248 = vpop.f32.mrb[0].mxu0
      %v1249 = vadd.f32 %v1104, %v1248
      %v1250 = vpop.f32.mrb[0].mxu0
      %1251 = vmatprep.mubr.f32.mxu0 %v652
      %1252 = vmatmul.mubr.f32.gmra.mrb[0].mxu0 %v595
      %v1253 = vpop.f32.mrb[0].mxu0
      %v1254 = vadd.f32 %v1109, %v1253
      %v1255 = vpop.f32.mrb[0].mxu0
      %1256 = vmatprep.mubr.f32.mxu0 %v655
      %1257 = vmatmul.mubr.f32.gmra.mrb[0].mxu0 %v598
      %v1258 = vpop.f32.mrb[0].mxu0
      %v1259 = vadd.f32 %v1114, %v1258
      %v1260 = vpop.f32.mrb[0].mxu0
      %1261 = vmatprep.mubr.f32.mxu0 %v657
      %1262 = vmatmul.mubr.f32.gmra.mrb[0].mxu0 %v600
      %v1263 = vpop.f32.mrb[0].mxu0
      %v1264 = vadd.f32 %v1119, %v1263
      %v1265 = vpop.f32.mrb[0].mxu0
      %1266 = vmatprep.mubr.f32.mxu0 %v660
      %1267 = vmatmul.mubr.f32.gmra.mrb[0].mxu0 %v603
      %v1268 = vpop.f32.mrb[0].mxu0
      %v1269 = vadd.f32 %v1124, %v1268
      %v1270 = vpop.f32.mrb[0].mxu0
      %1271 = vmatprep.mubr.f32.mxu0 %v662
      %1272 = vmatmul.mubr.f32.gmra.mrb[0].mxu0 %v605
      %v1273 = vpop.f32.mrb[0].mxu0
      %v1274 = vadd.f32 %v1129, %v1273
      %v1275 = vpop.f32.mrb[0].mxu0
      %1276 = vmatprep.mubr.f32.mxu0 %v665
      %1277 = vmatmul.mubr.f32.gmra.mrb[0].mxu0 %v608
      %v1278 = vpop.f32.mrb[0].mxu0
      %v1279 = vadd.f32 %v1134, %v1278
      %v1280 = vpop.f32.mrb[0].mxu0
      %1281 = vmatprep.mubr.f32.mxu0 %v667
      %1282 = vmatmul.mubr.f32.gmra.mrb[0].mxu0 %v610
      %v1283 = vpop.f32.mrb[0].mxu0
      %v1284 = vadd.f32 %v1139, %v1283
      %v1285 = vpop.f32.mrb[0].mxu0
      %1286 = vmatprep.mubr.f32.mxu0 %v696
      %1287 = vmatmul.mubr.f32.gmra.mrb[0].mxu0 %v689
      %v1288 = vpop.f32.mrb[0].mxu0
      %v1289 = vadd.f32 %v1144, %v1288
      %v1290 = vpop.f32.mrb[0].mxu0
      %1291 = vmatprep.mubr.f32.mxu0 %v698
      %1292 = vmatmul.mubr.f32.gmra.mrb[0].mxu0 %v691
      %v1293 = vpop.f32.mrb[0].mxu0
      %v1294 = vadd.f32 %v1149, %v1293
      %v1295 = vpop.f32.mrb[0].mxu0
      %1296 = vdwg.mxu0
      %1297 = vmatprep.subr.mxu0 0.0
      %1298 = vmatpush1.msra.mxu0 %v814
      %1299 = vmatprep.subr.mxu0 0.0
      %1300 = vmatpush1.msra.mxu0 %v815
      %1301 = vmatprep.subr.mxu0 0.0
      %1302 = vmatpush1.msra.mxu0 %v816
      %1303 = vmatprep.subr.mxu0 0.0
      %1304 = vmatpush1.msra.mxu0 %v817
      %1305 = vmatprep.subr.mxu0 0.0
      %1306 = vmatpush1.msra.mxu0 %v818
      %1307 = vmatprep.subr.mxu0 0.0
      %1308 = vmatpush1.msra.mxu0 %v819
      %1309 = vmatprep.subr.mxu0 0.0
      %1310 = vmatpush1.msra.mxu0 %v820
      %1311 = vmatprep.subr.mxu0 0.0
      %1312 = vmatpush1.msra.mxu0 %v821
      %1313 = vmatprep.subr.mxu0 0.0
      %1314 = vmatpush1.msra.mxu0 %v822
      %1315 = vmatprep.subr.mxu0 0.0
      %1316 = vmatpush1.msra.mxu0 %v823
      %1317 = vmatprep.subr.mxu0 0.0
      %1318 = vmatpush1.msra.mxu0 %v824
      %1319 = vmatprep.subr.mxu0 0.0
      %1320 = vmatpush1.msra.mxu0 %v825
      %1321 = vmatprep.subr.mxu0 0.0
      %1322 = vmatpush1.msra.mxu0 %v826
      %1323 = vmatprep.subr.mxu0 0.0
      %1324 = vmatpush1.msra.mxu0 %v827
      %1325 = vmatprep.subr.mxu0 0.0
      %1326 = vmatpush1.msra.mxu0 %v828
      %1327 = vmatprep.subr.mxu0 0.0
      %1328 = vmatpush1.msra.mxu0 %v829
      %1329 = vmatprep.subr.mxu0 0.0
      %1330 = vmatpush1.msra.mxu0 %v830
      %1331 = vmatprep.subr.mxu0 0.0
      %1332 = vmatpush1.msra.mxu0 %v831
      %1333 = vmatprep.subr.mxu0 0.0
      %1334 = vmatpush1.msra.mxu0 %v832
      %1335 = vmatprep.subr.mxu0 0.0
      %1336 = vmatpush1.msra.mxu0 %v833
      %1337 = vmatprep.subr.mxu0 0.0
      %1338 = vmatpush1.msra.mxu0 %v834
      %1339 = vmatprep.subr.mxu0 0.0
      %1340 = vmatpush1.msra.mxu0 %v835
      %1341 = vmatprep.subr.mxu0 0.0
      %1342 = vmatpush1.msra.mxu0 %v836
      %1343 = vmatprep.subr.mxu0 0.0
      %1344 = vmatpush1.msra.mxu0 %v837
      %1345 = vmatprep.subr.mxu0 0.0
      %1346 = vmatpush1.msra.mxu0 %v838
      %1347 = vmatprep.subr.mxu0 0.0
      %1348 = vmatpush1.msra.mxu0 %v839
      %1349 = vmatprep.subr.mxu0 0.0
      %1350 = vmatpush1.msra.mxu0 %v840
      %1351 = vmatprep.subr.mxu0 0.0
      %1352 = vmatpush1.msra.mxu0 %v841
      %1353 = vmatprep.subr.mxu0 0.0
      %1354 = vmatpush1.msra.mxu0 %v842
      %1355 = vmatprep.subr.mxu0 0.0
      %1356 = vmatpush1.msra.mxu0 %v843
      %1357 = vmatprep.subr.mxu0 0.0
      %1358 = vmatpush1.msra.mxu0 %v844
      %1359 = vmatprep.subr.mxu0 0.0
      %1360 = vmatpush1.msra.mxu0 %v845
      %1361 = vmatprep.mubr.f32.mxu0 %v583
      %1362 = vmatmul.mubr.f32.gmra.mrb[0].mxu0 %v522
      %v1363 = vpop.f32.mrb[0].mxu0
      %v1364 = vadd.f32 %v1219, %v1363
      %v1365 = vpop.f32.mrb[0].mxu0
      %1366 = vmatprep.mubr.f32.mxu0 %v585
      %1367 = vmatmul.mubr.f32.gmra.mrb[0].mxu0 %v523
      %v1368 = vpop.f32.mrb[0].mxu0
      %v1369 = vadd.f32 %v1224, %v1368
      %v1370 = vpop.f32.mrb[0].mxu0
      %1371 = vmatprep.mubr.f32.mxu0 %v588
      %1372 = vmatmul.mubr.f32.gmra.mrb[0].mxu0 %v525
      %v1373 = vpop.f32.mrb[0].mxu0
      %v1374 = vadd.f32 %v1229, %v1373
      %v1375 = vpop.f32.mrb[0].mxu0
      %1376 = vmatprep.mubr.f32.mxu0 %v590
      %1377 = vmatmul.mubr.f32.gmra.mrb[0].mxu0 %v526
      %v1378 = vpop.f32.mrb[0].mxu0
      %v1379 = vadd.f32 %v1234, %v1378
      %v1380 = vpop.f32.mrb[0].mxu0
      %1381 = vmatprep.mubr.f32.mxu0 %v593
      %1382 = vmatmul.mubr.f32.gmra.mrb[0].mxu0 %v528
      %v1383 = vpop.f32.mrb[0].mxu0
      %v1384 = vadd.f32 %v1239, %v1383
      %v1385 = vpop.f32.mrb[0].mxu0
      %1386 = vmatprep.mubr.f32.mxu0 %v595
      %1387 = vmatmul.mubr.f32.gmra.mrb[0].mxu0 %v529
      %v1388 = vpop.f32.mrb[0].mxu0
      %v1389 = vadd.f32 %v1244, %v1388
      %v1390 = vpop.f32.mrb[0].mxu0
      %1391 = vmatprep.mubr.f32.mxu0 %v598
      %1392 = vmatmul.mubr.f32.gmra.mrb[0].mxu0 %v531
      %v1393 = vpop.f32.mrb[0].mxu0
      %v1394 = vadd.f32 %v1249, %v1393
      %v1395 = vpop.f32.mrb[0].mxu0
      %1396 = vmatprep.mubr.f32.mxu0 %v600
      %1397 = vmatmul.mubr.f32.gmra.mrb[0].mxu0 %v532
      %v1398 = vpop.f32.mrb[0].mxu0
      %v1399 = vadd.f32 %v1254, %v1398
      %v1400 = vpop.f32.mrb[0].mxu0
      %1401 = vmatprep.mubr.f32.mxu0 %v603
      %1402 = vmatmul.mubr.f32.gmra.mrb[0].mxu0 %v534
      %v1403 = vpop.f32.mrb[0].mxu0
      %v1404 = vadd.f32 %v1259, %v1403
      %v1405 = vpop.f32.mrb[0].mxu0
      %1406 = vmatprep.mubr.f32.mxu0 %v605
      %1407 = vmatmul.mubr.f32.gmra.mrb[0].mxu0 %v535
      %v1408 = vpop.f32.mrb[0].mxu0
      %v1409 = vadd.f32 %v1264, %v1408
      %v1410 = vpop.f32.mrb[0].mxu0
      %1411 = vmatprep.mubr.f32.mxu0 %v608
      %1412 = vmatmul.mubr.f32.gmra.mrb[0].mxu0 %v537
      %v1413 = vpop.f32.mrb[0].mxu0
      %v1414 = vadd.f32 %v1269, %v1413
      %v1415 = vpop.f32.mrb[0].mxu0
      %1416 = vmatprep.mubr.f32.mxu0 %v610
      %1417 = vmatmul.mubr.f32.gmra.mrb[0].mxu0 %v538
      %v1418 = vpop.f32.mrb[0].mxu0
      %v1419 = vadd.f32 %v1274, %v1418
      %v1420 = vpop.f32.mrb[0].mxu0
      %1421 = vmatprep.mubr.f32.mxu0 %v689
      %1422 = vmatmul.mubr.f32.gmra.mrb[0].mxu0 %v540
      %v1423 = vpop.f32.mrb[0].mxu0
      %v1424 = vadd.f32 %v1279, %v1423
      %v1425 = vpop.f32.mrb[0].mxu0
      %1426 = vmatprep.mubr.f32.mxu0 %v691
      %1427 = vmatmul.mubr.f32.gmra.mrb[0].mxu0 %v541
      %v1428 = vpop.f32.mrb[0].mxu0
      %v1429 = vadd.f32 %v1284, %v1428
      %v1430 = vpop.f32.mrb[0].mxu0
      %1431 = vmatprep.mubr.f32.mxu0 %v706
      %1432 = vmatmul.mubr.f32.gmra.mrb[0].mxu0 %v543
      %v1433 = vpop.f32.mrb[0].mxu0
      %v1434 = vadd.f32 %v1289, %v1433
      %v1435 = vpop.f32.mrb[0].mxu0
      %1436 = vmatprep.mubr.f32.mxu0 %v708
      %1437 = vmatmul.mubr.f32.gmra.mrb[0].mxu0 %v544
      %v1438 = vpop.f32.mrb[0].mxu0
      %v1439 = vadd.f32 %v1294, %v1438
      %v1440 = vpop.f32.mrb[0].mxu0
      %1441 = vdwg.mxu0
      %1442 = vmatprep.subr.mxu0 0.0
      %1443 = vmatpush1.msra.mxu0 %v846
      %1444 = vmatprep.subr.mxu0 0.0
      %1445 = vmatpush1.msra.mxu0 %v847
      %1446 = vmatprep.subr.mxu0 0.0
      %1447 = vmatpush1.msra.mxu0 %v848
      %1448 = vmatprep.subr.mxu0 0.0
      %1449 = vmatpush1.msra.mxu0 %v849
      %1450 = vmatprep.subr.mxu0 0.0
      %1451 = vmatpush1.msra.mxu0 %v850
      %1452 = vmatprep.subr.mxu0 0.0
      %1453 = vmatpush1.msra.mxu0 %v851
      %1454 = vmatprep.subr.mxu0 0.0
      %1455 = vmatpush1.msra.mxu0 %v852
      %1456 = vmatprep.subr.mxu0 0.0
      %1457 = vmatpush1.msra.mxu0 %v853
      %1458 = vmatprep.subr.mxu0 0.0
      %1459 = vmatpush1.msra.mxu0 %v854
      %1460 = vmatprep.subr.mxu0 0.0
      %1461 = vmatpush1.msra.mxu0 %v855
      %1462 = vmatprep.subr.mxu0 0.0
      %1463 = vmatpush1.msra.mxu0 %v856
      %1464 = vmatprep.subr.mxu0 0.0
      %1465 = vmatpush1.msra.mxu0 %v857
      %1466 = vmatprep.subr.mxu0 0.0
      %1467 = vmatpush1.msra.mxu0 %v858
      %1468 = vmatprep.subr.mxu0 0.0
      %1469 = vmatpush1.msra.mxu0 %v859
      %1470 = vmatprep.subr.mxu0 0.0
      %1471 = vmatpush1.msra.mxu0 %v860
      %1472 = vmatprep.subr.mxu0 0.0
      %1473 = vmatpush1.msra.mxu0 %v861
      %1474 = vmatprep.subr.mxu0 0.0
      %1475 = vmatpush1.msra.mxu0 0.0
      %1476 = vmatprep.subr.mxu0 0.0
      %1477 = vmatpush1.msra.mxu0 0.0
      %1478 = vmatprep.subr.mxu0 0.0
      %1479 = vmatpush1.msra.mxu0 0.0
      %1480 = vmatprep.subr.mxu0 0.0
      %1481 = vmatpush1.msra.mxu0 0.0
      %1482 = vmatprep.subr.mxu0 0.0
      %1483 = vmatpush1.msra.mxu0 0.0
      %1484 = vmatprep.subr.mxu0 0.0
      %1485 = vmatpush1.msra.mxu0 0.0
      %1486 = vmatprep.subr.mxu0 0.0
      %1487 = vmatpush1.msra.mxu0 0.0
      %1488 = vmatprep.subr.mxu0 0.0
      %1489 = vmatpush1.msra.mxu0 0.0
      %1490 = vmatprep.subr.mxu0 0.0
      %1491 = vmatpush1.msra.mxu0 0.0
      %1492 = vmatprep.subr.mxu0 0.0
      %1493 = vmatpush1.msra.mxu0 0.0
      %1494 = vmatprep.subr.mxu0 0.0
      %1495 = vmatpush1.msra.mxu0 0.0
      %1496 = vmatprep.subr.mxu0 0.0
      %1497 = vmatpush1.msra.mxu0 0.0
      %1498 = vmatprep.subr.mxu0 0.0
      %1499 = vmatpush1.msra.mxu0 0.0
      %1500 = vmatprep.subr.mxu0 0.0
      %1501 = vmatpush1.msra.mxu0 0.0
      %1502 = vmatprep.subr.mxu0 0.0
      %1503 = vmatpush1.msra.mxu0 0.0
      %1504 = vmatprep.subr.mxu0 0.0
      %1505 = vmatpush1.msra.mxu0 0.0
      %1506 = vmatprep.mubr.f32.mxu0 0.0
      %1507 = vmatmul.mubr.f32.gmra.mrb[0].mxu0 %v640
      %v1508 = vpop.f32.mrb[0].mxu0
      %v1509 = vadd.f32 %v1364, %v1508
      %v1510 = vpop.f32.mrb[0].mxu0
      %1511 = vmatprep.mubr.f32.mxu0 0.0
      %1512 = vmatmul.mubr.f32.gmra.mrb[0].mxu0 %v642
      %v1513 = vpop.f32.mrb[0].mxu0
      %v1514 = vadd.f32 %v1369, %v1513
      %v1515 = vpop.f32.mrb[0].mxu0
      %1516 = vmatprep.mubr.f32.mxu0 0.0
      %1517 = vmatmul.mubr.f32.gmra.mrb[0].mxu0 %v645
      %v1518 = vpop.f32.mrb[0].mxu0
      %v1519 = vadd.f32 %v1374, %v1518
      %v1520 = vpop.f32.mrb[0].mxu0
      %1521 = vmatprep.mubr.f32.mxu0 0.0
      %1522 = vmatmul.mubr.f32.gmra.mrb[0].mxu0 %v647
      %v1523 = vpop.f32.mrb[0].mxu0
      %v1524 = vadd.f32 %v1379, %v1523
      %v1525 = vpop.f32.mrb[0].mxu0
      %1526 = vmatprep.mubr.f32.mxu0 0.0
      %1527 = vmatmul.mubr.f32.gmra.mrb[0].mxu0 %v650
      %v1528 = vpop.f32.mrb[0].mxu0
      %v1529 = vadd.f32 %v1384, %v1528
      %v1530 = vpop.f32.mrb[0].mxu0
      %1531 = vmatprep.mubr.f32.mxu0 0.0
      %1532 = vmatmul.mubr.f32.gmra.mrb[0].mxu0 %v652
      %v1533 = vpop.f32.mrb[0].mxu0
      %v1534 = vadd.f32 %v1389, %v1533
      %v1535 = vpop.f32.mrb[0].mxu0
      %1536 = vmatprep.mubr.f32.mxu0 0.0
      %1537 = vmatmul.mubr.f32.gmra.mrb[0].mxu0 %v655
      %v1538 = vpop.f32.mrb[0].mxu0
      %v1539 = vadd.f32 %v1394, %v1538
      %v1540 = vpop.f32.mrb[0].mxu0
      %1541 = vmatprep.mubr.f32.mxu0 0.0
      %1542 = vmatmul.mubr.f32.gmra.mrb[0].mxu0 %v657
      %v1543 = vpop.f32.mrb[0].mxu0
      %v1544 = vadd.f32 %v1399, %v1543
      %v1545 = vpop.f32.mrb[0].mxu0
      %1546 = vmatprep.mubr.f32.mxu0 0.0
      %1547 = vmatmul.mubr.f32.gmra.mrb[0].mxu0 %v660
      %v1548 = vpop.f32.mrb[0].mxu0
      %v1549 = vadd.f32 %v1404, %v1548
      %v1550 = vpop.f32.mrb[0].mxu0
      %1551 = vmatprep.mubr.f32.mxu0 0.0
      %1552 = vmatmul.mubr.f32.gmra.mrb[0].mxu0 %v662
      %v1553 = vpop.f32.mrb[0].mxu0
      %v1554 = vadd.f32 %v1409, %v1553
      %v1555 = vpop.f32.mrb[0].mxu0
      %1556 = vmatprep.mubr.f32.mxu0 0.0
      %1557 = vmatmul.mubr.f32.gmra.mrb[0].mxu0 %v665
      %v1558 = vpop.f32.mrb[0].mxu0
      %v1559 = vadd.f32 %v1414, %v1558
      %v1560 = vpop.f32.mrb[0].mxu0
      %1561 = vmatprep.mubr.f32.mxu0 0.0
      %1562 = vmatmul.mubr.f32.gmra.mrb[0].mxu0 %v667
      %v1563 = vpop.f32.mrb[0].mxu0
      %v1564 = vadd.f32 %v1419, %v1563
      %v1565 = vpop.f32.mrb[0].mxu0
      %1566 = vmatprep.mubr.f32.mxu0 0.0
      %1567 = vmatmul.mubr.f32.gmra.mrb[0].mxu0 %v696
      %v1568 = vpop.f32.mrb[0].mxu0
      %v1569 = vadd.f32 %v1424, %v1568
      %v1570 = vpop.f32.mrb[0].mxu0
      %1571 = vmatprep.mubr.f32.mxu0 0.0
      %1572 = vmatmul.mubr.f32.gmra.mrb[0].mxu0 %v698
      %v1573 = vpop.f32.mrb[0].mxu0
      %v1574 = vadd.f32 %v1429, %v1573
      %v1575 = vpop.f32.mrb[0].mxu0
      %1576 = vmatprep.mubr.f32.mxu0 0.0
      %1577 = vmatmul.mubr.f32.gmra.mrb[0].mxu0 %v713
      %v1578 = vpop.f32.mrb[0].mxu0
      %v1579 = vadd.f32 %v1434, %v1578
      %v1580 = vpop.f32.mrb[0].mxu0
      %1581 = vmatprep.mubr.f32.mxu0 0.0
      %1582 = vmatmul.mubr.f32.gmra.mrb[0].mxu0 %v715
      %v1583 = vpop.f32.mrb[0].mxu0
      %v1584 = vadd.f32 %v1439, %v1583
      %v1585 = vpop.f32.mrb[0].mxu0
      %1586 = vdwg.mxu0
      %1587 = vst [vmem:[%s215] sm:$0xff] %v1509
      %1588 = vst [vmem:[%s215 + $0x8] sm:$0xff] %v1514
      %1589 = vst [vmem:[%s215 + $0x10] sm:$0xff] %v1519
      %1590 = vst [vmem:[%s215 + $0x18] sm:$0xff] %v1524
      %1591 = vst [vmem:[%s215 + $0x20] sm:$0xff] %v1529
      %1592 = vst [vmem:[%s215 + $0x28] sm:$0xff] %v1534
      %1593 = vst [vmem:[%s215 + $0x30] sm:$0xff] %v1539
      %1594 = vst [vmem:[%s215 + $0x38] sm:$0xff] %v1544
      %1595 = vst [vmem:[%s215 + $0x40] sm:$0xff] %v1549
      %1596 = vst [vmem:[%s215 + $0x48] sm:$0xff] %v1554
      %1597 = vst [vmem:[%s215 + $0x50] sm:$0xff] %v1559
      %1598 = vst [vmem:[%s215 + $0x58] sm:$0xff] %v1564
      %1599 = vst [vmem:[%s215 + $0x60] sm:$0xff] %v1569
      %1600 = vst [vmem:[%s215 + $0x68] sm:$0xff] %v1574
      %1601 = vst [vmem:[%s215 + $0x70] sm:$0xff] %v1579
      %1602 = vst [vmem:[%s215 + $0x78] sm:$0xff] %v1584
      %v1603 = vadd.f32 %v1509, %v1514
      %v1604 = vadd.f32 %v1603, %v1519
      %v1605 = vadd.f32 %v1604, %v1524
      %v1606 = vadd.f32 %v1605, %v1529
      %v1607 = vadd.f32 %v1606, %v1534
      %v1608 = vadd.f32 %v1607, %v1539
      %v1609 = vadd.f32 %v1608, %v1544
      %v1610 = vadd.f32 %v1609, %v1549
      %v1611 = vadd.f32 %v1610, %v1554
      %v1612 = vadd.f32 %v1611, %v1559
      %v1613 = vadd.f32 %v1612, %v1564
      %v1614 = vadd.f32 %v1613, %v1569
      %v1615 = vadd.f32 %v1614, %v1574
      %v1616 = vadd.f32 %v1615, %v1579
      %v1617 = vadd.f32 %v1616, %v1584
      %v1618 = vrot.slane %v1617, 4
      %v1619 = vadd.f32 %v1617, %v1618
      %v1620 = vrot.slane %v1619, 2
      %v1621 = vadd.f32 %v1619, %v1620
      %v1622 = vrot.slane %v1621, 1
      %v1623 = vadd.f32 %v1621, %v1622
      %v1624 = vmul.f32 %v1509, %v1509
      %v1625 = vmul.f32 %v1514, %v1514
      %v1626 = vmul.f32 %v1519, %v1519
      %v1627 = vmul.f32 %v1524, %v1524
      %v1628 = vmul.f32 %v1529, %v1529
      %v1629 = vmul.f32 %v1534, %v1534
      %v1630 = vmul.f32 %v1539, %v1539
      %v1631 = vmul.f32 %v1544, %v1544
      %v1632 = vmul.f32 %v1549, %v1549
      %v1633 = vmul.f32 %v1554, %v1554
      %v1634 = vmul.f32 %v1559, %v1559
      %v1635 = vmul.f32 %v1564, %v1564
      %v1636 = vmul.f32 %v1569, %v1569
      %v1637 = vmul.f32 %v1574, %v1574
      %v1638 = vmul.f32 %v1579, %v1579
      %v1639 = vmul.f32 %v1584, %v1584
      %v1640 = vadd.f32 %v1624, %v1625
      %v1641 = vadd.f32 %v1640, %v1626
      %v1642 = vadd.f32 %v1641, %v1627
      %v1643 = vadd.f32 %v1642, %v1628
      %v1644 = vadd.f32 %v1643, %v1629
      %v1645 = vadd.f32 %v1644, %v1630
      %v1646 = vadd.f32 %v1645, %v1631
      %v1647 = vadd.f32 %v1646, %v1632
      %v1648 = vadd.f32 %v1647, %v1633
      %v1649 = vadd.f32 %v1648, %v1634
      %v1650 = vadd.f32 %v1649, %v1635
      %v1651 = vadd.f32 %v1650, %v1636
      %v1652 = vadd.f32 %v1651, %v1637
      %v1653 = vadd.f32 %v1652, %v1638
      %v1654 = vadd.f32 %v1653, %v1639
      %v1655 = vrot.slane %v1654, 4
      %v1656 = vadd.f32 %v1654, %v1655
      %v1657 = vrot.slane %v1656, 2
      %v1658 = vadd.f32 %v1656, %v1657
      %v1659 = vrot.slane %v1658, 1
      %v1660 = vadd.f32 %v1658, %v1659
      %vm1661 = vcmask 1040384
      %v1662 = vsel %vm1661, %v1623, %v1660
      %1663 = vst [vmem:[%s224] sm:$0x3] %v1662
      %s1664 = smul.u32 8, %s22
      %p1665 = scmp.lt.s32.totalorder %s21, 1
      %s1666 = scalar_select %p1665, %s21, 1
      %p1667 = scmp.lt.s32.totalorder %s1664, 15
      %s1668 = scalar_select %p1667, %s1664, 15
      %s1669 = smul.addr %s1668, 2
      %s1670 = smul.addr %s1666, 32
      %s1671 = sadd.s32 %s1669, %s1670
      %s1672 = smul.addr %s1671, 8
      %s1673 = scalar_lea.vmem %s4, %s1672
      %p1674 = scmp.lt.s32.totalorder %s21, 1
      %s1675 = scalar_select %p1674, %s21, 1
      %p1676 = scmp.lt.s32.totalorder %s22, 1
      %s1677 = scalar_select %p1676, %s22, 1
      %s1678 = smul.addr %s1675, 2
      %s1679 = sadd.s32 %s1677, %s1678
      %s1680 = smul.addr %s1679, 2
      %s1681 = scalar_lea.vmem %s5, %s1680
      // Predicated region
      $region115: #{double_conv_forward.3} parent=31 // pred_check
        %p1682 = pneg %p112
      $region116: #{double_conv_forward.3} parent=31 // pred_check_branch
        %1684 = sbr.rel (%p1682) target = $region118
      $region117: #{double_conv_forward.3} parent=31 // pred_region
        %s1685 = smul.u32 8, %s22
      $region118: #{double_conv_forward.3} parent=31 // pred_fallthru
        _
      // Predicated region
      $region119: #{double_conv_forward.3} parent=31 // pred_check
        %p1686 = pneg %p140
      $region120: #{double_conv_forward.3} parent=31 // pred_check_branch
        %1688 = sbr.rel (%p1686) target = $region122
      $region121: #{double_conv_forward.3} parent=31 // pred_region
        _
      $region122: #{double_conv_forward.3} parent=31 // pred_fallthru
        _
    $region32: #{double_conv_forward.3} parent=5 // pred_fallthru
      _
    %p1689 = scmp.le.s32.totalorder 2, %s12
    // Predicated region
    $region123: #{double_conv_forward.3} parent=5 // pred_check
      %p1690 = pneg %p1689
    $region124: #{double_conv_forward.3} parent=5 // pred_check_branch
      %1692 = sbr.rel (%p1690) target = $region126
    $region125: #{double_conv_forward.3} parent=5 // pred_region
      %s1693 = ssub.s32 %s12, 2
      // Predicated region
      $region127: #{double_conv_forward.3} parent=125 // pred_check
        %p1694 = pneg %p118
      $region128: #{double_conv_forward.3} parent=125 // pred_check_branch
        %1696 = sbr.rel (%p1694) target = $region130
      $region129: #{double_conv_forward.3} parent=125 // pred_region
        %s1697 = smul.u32 8, %s24
        %p1698 = scmp.lt.s32.totalorder %s23, 1
        %s1699 = scalar_select %p1698, %s23, 1
        %p1700 = scmp.lt.s32.totalorder %s1697, 15
        %s1701 = scalar_select %p1700, %s1697, 15
        %s1702 = smul.addr %s1701, 2
        %s1703 = smul.addr %s1699, 32
        %s1704 = sadd.s32 %s1702, %s1703
        %s1705 = smul.addr %s1704, 8
        %s1706 = scalar_lea.vmem %s4, %s1705
      $region130: #{double_conv_forward.3} parent=125 // pred_fallthru
        _
      // Predicated region
      $region131: #{double_conv_forward.3} parent=125 // pred_check
        %p1707 = pneg %p146
      $region132: #{double_conv_forward.3} parent=125 // pred_check_branch
        %1709 = sbr.rel (%p1707) target = $region134
      $region133: #{double_conv_forward.3} parent=125 // pred_region
        %p1710 = scmp.lt.s32.totalorder %s23, 1
        %s1711 = scalar_select %p1710, %s23, 1
        %p1712 = scmp.lt.s32.totalorder %s24, 1
        %s1713 = scalar_select %p1712, %s24, 1
        %s1714 = smul.addr %s1711, 2
        %s1715 = sadd.s32 %s1713, %s1714
        %s1716 = smul.addr %s1715, 2
        %s1717 = scalar_lea.vmem %s5, %s1716
      $region134: #{double_conv_forward.3} parent=125 // pred_fallthru
        _
    $region126: #{double_conv_forward.3} parent=5 // pred_fallthru
      _
  $region6: #{double_conv_forward.3} parent=0 // loop_footer
    %s16 = sadd.s32 1, %s12
  $region7: #{double_conv_forward.3} parent=0 // loop_footer_branch
    %11 = sbr.rel target = $region3
  $region8: #{double_conv_forward.3} parent=0 // loop_exit
    _
  %1718 = vsyncmov [#allocation3]
  %s1719 = vpop.sfrf %1718
  %p1720 = scmp.eq.s32.totalorder %s1719, 0
  %p1721 = pneg %p1720
  %1723 = shalt.err (%p1721)
  %s1724 = scalar_lea.sflag [#allocation3], 1
  %1725 = vsyncmov %s1724
  %s1726 = vpop.sfrf %1725
  %p1727 = scmp.eq.s32.totalorder %s1726, 0
  %p1728 = pneg %p1727
  %1730 = shalt.err (%p1728)

// kernel: double_conv_forward.4
$region0: #{double_conv_forward.4}
  #allocation0 [shape = 'u32[]', space=smem, size = 0x4, offset = 0x4, fixed_abs, tag = 'smem constant byte address 0x4 - core index']
  #allocation1 [shape = 'u32[144,128]{1,0:T(1,128)}', space=vmem, size = 0x12000, scoped, tag = 'internal scratch']
  #allocation2 [shape = 'f32[2,10,18,128]{3,2,1,0:T(8,128)}', space=vmem, size = 0x3c000, scoped, tag = 'scratch operand']
  #allocation3 [shape = 's32[2]{0}', space=sflag, size = 0x8, scoped, tag = 'scratch operand']
  #allocation4 [shape = 's32[]', space=sflag, size = 0x4, offset = 0, fixed_abs, tag = 'sflag constant byte address 0x0 - dummy sync flag']
  #allocation5 [shape = 's32[]', space=sflag, size = 0x4, offset = 0, fixed_abs, tag = 'sflag constant byte address 0x0 - dummy sync flag']
  %s0 = inlined_call_operand.vmem [shape: f32[2,18,18,128], index: 0, kind: input, shape index: {}]
  %s1 = inlined_call_operand.vmem [shape: f32[1152,128], index: 1, kind: input, shape index: {}]
  %s2 = inlined_call_operand.vmem [shape: f32[1,128], index: 2, kind: input, shape index: {}]
  %s3 = inlined_call_operand.vmem [shape: f32[1,128], index: 3, kind: input, shape index: {}]
  %s4 = inlined_call_operand.vmem [shape: f32[2,16,16,128], index: 4, kind: output, shape index: {0}]
  %s5 = inlined_call_operand.vmem [shape: f32[2,2,2,128], index: 5, kind: output, shape index: {1}]
  %6 = xla_tuple %s4, %s5
  %s7 = sld [smem:[#allocation0]]
  $region135: #{double_conv_forward.4} parent=0
    _
  %s9 = ssub.s32 1, %s7
  %s10 = scalar_select 0, %s9, %s7
  loop: start=0, step=1, limit=6
  $region2: #{double_conv_forward.4} parent=0 // loop_pre_header
    _
  $region3: #{double_conv_forward.4} parent=0 // loop_header
    %s12 = sphi 0, %s16
    %p13 = scmp.ge.s32.totalorder %s12, 6
    %s19 = sphi 0, %s31
    %s20 = sphi 0, %s27
    %s21 = sphi 0, %s19
    %s22 = sphi 0, %s20
    %s23 = sphi 0, %s21
    %s24 = sphi 0, %s22
    %s32 = sphi 0, %s32
    %s34 = sphi 0, %s32
    %s35 = sphi 0, %s34
    %s49 = sphi 0, %s35
    %s53 = sphi 0, %s53
    %s55 = sphi 0, %s53
    %s56 = sphi 0, %s55
    %s70 = sphi 0, %s56
    %s74 = sphi 0, %s74
    %s76 = sphi 0, %s74
    %s77 = sphi 0, %s76
    %s91 = sphi 0, %s77
    %s99 = sphi 0, %s101
    %s102 = sphi 0, %s99
    %s103 = sphi 0, %s102
    %s119 = sphi 0, %s103
    %s127 = sphi 0, %s129
    %s130 = sphi 0, %s127
    %s131 = sphi 0, %s130
    %s147 = sphi 0, %s131
  $region4: #{double_conv_forward.4} parent=0 // loop_header_branch
    %15 = sbr.rel (%p13) target = $region8
  $region5: #{double_conv_forward.4} parent=0 // loop_body
    %s17 = ssub.s32 %s12, 1
    %s18 = ssub.s32 %s12, 2
    %s25 = sadd.s32 1, %s20
    %p26 = scmp.ge.s32.totalorder %s25, 2
    %s27 = scalar_select %p26, 0, %s25
    %s28 = sadd.s32 1, %s19
    %s29 = scalar_select %p26, %s28, %s19
    %p30 = scmp.ge.s32.totalorder %s29, 2
    %s31 = scalar_select %p30, 0, %s29
    %s33 = sadd.s32 %s32, 1
    %p36 = scmp.eq.s32.totalorder %s12, 3
    %p37 = scmp.ne.s32.totalorder %s32, %s34
    %p38 = scmp.eq.s32.totalorder %s12, 0
    %p39 = por %p37, %p38
    %p40 = scmp.ne.s32.totalorder %s32, %s34
    %p41 = scmp.eq.s32.totalorder %s17, 3
    %p42 = por %p40, %p41
    %p43 = scmp.ne.s32.totalorder %s34, %s35
    %p44 = scmp.eq.s32.totalorder %s17, 0
    %p45 = por %p43, %p44
    %p46 = scmp.ne.s32.totalorder %s34, %s35
    %p47 = scmp.eq.s32.totalorder %s18, 3
    %p48 = por %p46, %p47
    %p50 = scmp.ne.s32.totalorder %s35, %s49
    %p51 = scmp.eq.s32.totalorder %s18, 0
    %p52 = por %p50, %p51
    %s54 = sadd.s32 %s53, 1
    %p57 = scmp.eq.s32.totalorder %s12, 3
    %p58 = scmp.ne.s32.totalorder %s53, %s55
    %p59 = scmp.eq.s32.totalorder %s12, 0
    %p60 = por %p58, %p59
    %p61 = scmp.ne.s32.totalorder %s53, %s55
    %p62 = scmp.eq.s32.totalorder %s17, 3
    %p63 = por %p61, %p62
    %p64 = scmp.ne.s32.totalorder %s55, %s56
    %p65 = scmp.eq.s32.totalorder %s17, 0
    %p66 = por %p64, %p65
    %p67 = scmp.ne.s32.totalorder %s55, %s56
    %p68 = scmp.eq.s32.totalorder %s18, 3
    %p69 = por %p67, %p68
    %p71 = scmp.ne.s32.totalorder %s56, %s70
    %p72 = scmp.eq.s32.totalorder %s18, 0
    %p73 = por %p71, %p72
    %s75 = sadd.s32 %s74, 1
    %p78 = scmp.eq.s32.totalorder %s12, 3
    %p79 = scmp.ne.s32.totalorder %s74, %s76
    %p80 = scmp.eq.s32.totalorder %s12, 0
    %p81 = por %p79, %p80
    %p82 = scmp.ne.s32.totalorder %s74, %s76
    %p83 = scmp.eq.s32.totalorder %s17, 3
    %p84 = por %p82, %p83
    %p85 = scmp.ne.s32.totalorder %s76, %s77
    %p86 = scmp.eq.s32.totalorder %s17, 0
    %p87 = por %p85, %p86
    %p88 = scmp.ne.s32.totalorder %s76, %s77
    %p89 = scmp.eq.s32.totalorder %s18, 3
    %p90 = por %p88, %p89
    %p92 = scmp.ne.s32.totalorder %s77, %s91
    %p93 = scmp.eq.s32.totalorder %s18, 0
    %p94 = por %p92, %p93
    %s95 = ssub.s32 %s19, %s31
    %s96 = ssub.s32 %s20, %s27
    %s97 = sor.u32 %s95, %s96
    %p98 = scmp.eq.s32.totalorder %s97, 0
    %s100 = sadd.s32 %s99, 1
    %s101 = scalar_select %p98, %s99, %s100
    %p104 = pneg %p98
    %p105 = scmp.eq.s32.totalorder %s12, 3
    %p106 = por %p104, %p105
    %p107 = scmp.ne.s32.totalorder %s99, %s102
    %p108 = scmp.eq.s32.totalorder %s12, 0
    %p109 = por %p107, %p108
    %p110 = scmp.ne.s32.totalorder %s99, %s102
    %p111 = scmp.eq.s32.totalorder %s17, 3
    %p112 = por %p110, %p111
    %p113 = scmp.ne.s32.totalorder %s102, %s103
    %p114 = scmp.eq.s32.totalorder %s17, 0
    %p115 = por %p113, %p114
    %p116 = scmp.ne.s32.totalorder %s102, %s103
    %p117 = scmp.eq.s32.totalorder %s18, 3
    %p118 = por %p116, %p117
    %p120 = scmp.ne.s32.totalorder %s103, %s119
    %p121 = scmp.eq.s32.totalorder %s18, 0
    %p122 = por %p120, %p121
    %s123 = ssub.s32 %s19, %s31
    %s124 = ssub.s32 %s20, %s27
    %s125 = sor.u32 %s123, %s124
    %p126 = scmp.eq.s32.totalorder %s125, 0
    %s128 = sadd.s32 %s127, 1
    %s129 = scalar_select %p126, %s127, %s128
    %p132 = pneg %p126
    %p133 = scmp.eq.s32.totalorder %s12, 3
    %p134 = por %p132, %p133
    %p135 = scmp.ne.s32.totalorder %s127, %s130
    %p136 = scmp.eq.s32.totalorder %s12, 0
    %p137 = por %p135, %p136
    %p138 = scmp.ne.s32.totalorder %s127, %s130
    %p139 = scmp.eq.s32.totalorder %s17, 3
    %p140 = por %p138, %p139
    %p141 = scmp.ne.s32.totalorder %s130, %s131
    %p142 = scmp.eq.s32.totalorder %s17, 0
    %p143 = por %p141, %p142
    %p144 = scmp.ne.s32.totalorder %s130, %s131
    %p145 = scmp.eq.s32.totalorder %s18, 3
    %p146 = por %p144, %p145
    %p148 = scmp.ne.s32.totalorder %s131, %s147
    %p149 = scmp.eq.s32.totalorder %s18, 0
    %p150 = por %p148, %p149
    %p151 = scmp.le.s32.totalorder 1, %s12
    %p152 = scmp.lt.s32.totalorder %s12, 5
    %p153 = pnand %p151, %p152
    %p154 = pneg %p153
    // Predicated region
    $region9: #{double_conv_forward.4} parent=5 // pred_check
      _
    $region10: #{double_conv_forward.4} parent=5 // pred_check_branch
      %156 = sbr.rel (%p153) target = $region12
    $region11: #{double_conv_forward.4} parent=5 // pred_region
      %s157 = ssub.s32 %s12, 1
      // Predicated region
      $region13: #{double_conv_forward.4} parent=11 // pred_check
        %p158 = pneg %p45
      $region14: #{double_conv_forward.4} parent=11 // pred_check_branch
        %160 = sbr.rel (%p158) target = $region16
      $region15: #{double_conv_forward.4} parent=11 // pred_region
        _
      $region16: #{double_conv_forward.4} parent=11 // pred_fallthru
        _
      // Predicated region
      $region17: #{double_conv_forward.4} parent=11 // pred_check
        %p161 = pneg %p66
      $region18: #{double_conv_forward.4} parent=11 // pred_check_branch
        %163 = sbr.rel (%p161) target = $region20
      $region19: #{double_conv_forward.4} parent=11 // pred_region
        _
      $region20: #{double_conv_forward.4} parent=11 // pred_fallthru
        _
      // Predicated region
      $region21: #{double_conv_forward.4} parent=11 // pred_check
        %p164 = pneg %p87
      $region22: #{double_conv_forward.4} parent=11 // pred_check_branch
        %166 = sbr.rel (%p164) target = $region24
      $region23: #{double_conv_forward.4} parent=11 // pred_region
        _
      $region24: #{double_conv_forward.4} parent=11 // pred_fallthru
        _
    $region12: #{double_conv_forward.4} parent=5 // pred_fallthru
      _
    %p167 = scmp.lt.s32.totalorder %s12, 4
    // Predicated region
    $region25: #{double_conv_forward.4} parent=5 // pred_check
      %p168 = pneg %p167
    $region26: #{double_conv_forward.4} parent=5 // pred_check_branch
      %170 = sbr.rel (%p168) target = $region28
    $region27: #{double_conv_forward.4} parent=5 // pred_region
      _
    $region28: #{double_conv_forward.4} parent=5 // pred_fallthru
      _
    %p171 = scmp.le.s32.totalorder 1, %s12
    %p172 = scmp.lt.s32.totalorder %s12, 5
    %p173 = pnand %p171, %p172
    %p174 = pneg %p173
    // Predicated region
    $region29: #{double_conv_forward.4} parent=5 // pred_check
      _
    $region30: #{double_conv_forward.4} parent=5 // pred_check_branch
      %176 = sbr.rel (%p173) target = $region32
    $region31: #{double_conv_forward.4} parent=5 // pred_region
      %s177 = ssub.s32 %s12, 1
      %p178 = pneg %p45
      %p179 = pneg %p42
      %p180 = pneg %p66
      %p181 = pneg %p63
      %p182 = pneg %p87
      %p183 = pneg %p84
      %p184 = pneg %p115
      %p185 = pneg %p112
      %s186 = smul.u32 8, %s22
      %p187 = scmp.lt.s32.totalorder %s21, 1
      %s188 = scalar_select %p187, %s21, 1
      %p189 = scmp.lt.s32.totalorder %s186, 15
      %s190 = scalar_select %p189, %s186, 15
      %s191 = smul.addr %s190, 2
      %s192 = smul.addr %s188, 32
      %s193 = sadd.s32 %s191, %s192
      %s194 = smul.addr %s193, 8
      %s195 = scalar_lea.vmem %s4, %s194
      %p196 = pneg %p143
      %p197 = pneg %p140
      %p198 = scmp.lt.s32.totalorder %s21, 1
      %s199 = scalar_select %p198, %s21, 1
      %p200 = scmp.lt.s32.totalorder %s22, 1
      %s201 = scalar_select %p200, %s22, 1
      %s202 = smul.addr %s199, 2
      %s203 = sadd.s32 %s201, %s202
      %s204 = smul.addr %s203, 2
      %s205 = scalar_lea.vmem %s5, %s204
      %s206 = smul.u32 8, %s22
      %p207 = scmp.lt.s32.totalorder %s21, 1
      %s208 = scalar_select %p207, %s21, 1
      %p209 = scmp.lt.s32.totalorder %s206, 15
      %s210 = scalar_select %p209, %s206, 15
      %s211 = smul.addr %s210, 2
      %s212 = smul.addr %s208, 32
      %s213 = sadd.s32 %s211, %s212
      %s214 = smul.addr %s213, 8
      %s215 = scalar_lea.vmem %s4, %s214
      %s216 = smul.u32 8, %s22
      %p217 = scmp.lt.s32.totalorder %s21, 1
      %s218 = scalar_select %p217, %s21, 1
      %p219 = scmp.lt.s32.totalorder %s22, 1
      %s220 = scalar_select %p219, %s22, 1
      %s221 = smul.addr %s218, 2
      %s222 = sadd.s32 %s220, %s221
      %s223 = smul.addr %s222, 2
      %s224 = scalar_lea.vmem %s5, %s223
      %s225 = sand.u32 %s22, 1
      %p226 = scmp.eq.s32.totalorder %s22, 0
      // Predicated region
      $region33: #{double_conv_forward.4} parent=31 // pred_check
        %p227 = pneg %p226
      $region34: #{double_conv_forward.4} parent=31 // pred_check_branch
        %229 = sbr.rel (%p227) target = $region36
      $region35: #{double_conv_forward.4} parent=31 // pred_region
        %s230 = smul.u32 %s22, 8
        %s231 = smul.u32 %s230, 24
        %s232 = smul.u32 %s21, 432
        %s233 = sadd.s32 %s231, %s232
        %s234 = scalar_lea.vmem %s0, %s233
        %s235 = smul.u32 %s225, 240
        %s236 = scalar_lea.vmem [#allocation2], %s235
        %s237 = scalar_lea.sflag [#allocation3], %s225
        %p239 = scmp.lt.u32.totalorder 18, 8
        %p240 = pneg %p239
        // Predicated region
        $region37: #{double_conv_forward.4} parent=35 // pred_check
          _
        $region38: #{double_conv_forward.4} parent=35 // pred_check_branch
          %242 = sbr.rel (%p239) target = $region40
        $region39: #{double_conv_forward.4} parent=35 // pred_region
          %s275 = sand.u32 18, 7
          %p276 = scmp.eq.s32.totalorder %s275, 0
          %p277 = pneg %p276
          // Predicated region
          $region52: #{double_conv_forward.4} parent=39 // pred_check
            _
          $region53: #{double_conv_forward.4} parent=39 // pred_check_branch
            %279 = sbr.rel (%p276) target = $region55
          $region54: #{double_conv_forward.4} parent=39 // pred_region
            %s280 = sand.u32 18, 7
            %s281 = ssub.s32 18, %s280
            %s282 = scalar_lea.vmem %s234, %s281
            %s283 = ssub.s32 18, %s280
            %s284 = scalar_lea.vmem %s236, %s283 [#allocation2]
            loop: start=0, step=1, limit=1
            $region56: #{double_conv_forward.4} parent=54 // loop_pre_header
              _
            $region57: #{double_conv_forward.4} parent=54 // loop_header
              %s286 = sphi 0, %s290
              %p287 = scmp.ge.s32.totalorder %s286, 1
              %s291 = sphi %s234, %s234
              %s292 = sphi %s236, %s236
            $region58: #{double_conv_forward.4} parent=54 // loop_header_branch
              %289 = sbr.rel (%p287) target = $region62
            $region59: #{double_conv_forward.4} parent=54 // loop_body
              %v293 = vld [vmem:[%s291] sm:$0xff]
              %294 = vst [vmem:[%s292] sm:$0xff] %v293
              %v295 = vld [vmem:[%s291 + $0x8] sm:$0xff]
              %296 = vst [vmem:[%s292 + $0x8] sm:$0xff] %v295
              %v297 = vld [vmem:[%s291 + $0x18] sm:$0xff]
              %298 = vst [vmem:[%s292 + $0x18] sm:$0xff] %v297
              %v299 = vld [vmem:[%s291 + $0x20] sm:$0xff]
              %300 = vst [vmem:[%s292 + $0x20] sm:$0xff] %v299
              %v301 = vld [vmem:[%s291 + $0x30] sm:$0xff]
              %302 = vst [vmem:[%s292 + $0x30] sm:$0xff] %v301
              %v303 = vld [vmem:[%s291 + $0x38] sm:$0xff]
              %304 = vst [vmem:[%s292 + $0x38] sm:$0xff] %v303
              %v305 = vld [vmem:[%s291 + $0x48] sm:$0xff]
              %306 = vst [vmem:[%s292 + $0x48] sm:$0xff] %v305
              %v307 = vld [vmem:[%s291 + $0x50] sm:$0xff]
              %308 = vst [vmem:[%s292 + $0x50] sm:$0xff] %v307
              %v309 = vld [vmem:[%s291 + $0x60] sm:$0xff]
              %310 = vst [vmem:[%s292 + $0x60] sm:$0xff] %v309
              %v311 = vld [vmem:[%s291 + $0x68] sm:$0xff]
              %312 = vst [vmem:[%s292 + $0x68] sm:$0xff] %v311
              %v313 = vld [vmem:[%s291 + $0x78] sm:$0xff]
              %314 = vst [vmem:[%s292 + $0x78] sm:$0xff] %v313
              %v315 = vld [vmem:[%s291 + $0x80] sm:$0xff]
              %316 = vst [vmem:[%s292 + $0x80] sm:$0xff] %v315
              %v317 = vld [vmem:[%s291 + $0x90] sm:$0xff]
              %318 = vst [vmem:[%s292 + $0x90] sm:$0xff] %v317
              %v319 = vld [vmem:[%s291 + $0x98] sm:$0xff]
              %320 = vst [vmem:[%s292 + $0x98] sm:$0xff] %v319
              %v321 = vld [vmem:[%s291 + $0xa8] sm:$0xff]
              %322 = vst [vmem:[%s292 + $0xa8] sm:$0xff] %v321
              %v323 = vld [vmem:[%s291 + $0xb0] sm:$0xff]
              %324 = vst [vmem:[%s292 + $0xb0] sm:$0xff] %v323
              %v325 = vld [vmem:[%s291 + $0xc0] sm:$0xff]
              %326 = vst [vmem:[%s292 + $0xc0] sm:$0xff] %v325
              %v327 = vld [vmem:[%s291 + $0xc8] sm:$0xff]
              %328 = vst [vmem:[%s292 + $0xc8] sm:$0xff] %v327
              %v329 = vld [vmem:[%s291 + $0xd8] sm:$0xff]
              %330 = vst [vmem:[%s292 + $0xd8] sm:$0xff] %v329
              %v331 = vld [vmem:[%s291 + $0xe0] sm:$0xff]
              %332 = vst [vmem:[%s292 + $0xe0] sm:$0xff] %v331
            $region60: #{double_conv_forward.4} parent=54 // loop_footer
              %s290 = sadd.s32 1, %s286
            $region61: #{double_conv_forward.4} parent=54 // loop_footer_branch
              %285 = sbr.rel target = $region57
            $region62: #{double_conv_forward.4} parent=54 // loop_exit
              _
            %s333 = sshllo.u32 0, %s280
            loop: start=0, step=1, limit=1
            $region63: #{double_conv_forward.4} parent=54 // loop_pre_header
              _
            $region64: #{double_conv_forward.4} parent=54 // loop_header
              %s335 = sphi 0, %s339
              %p336 = scmp.ge.s32.totalorder %s335, 1
              %s340 = sphi %s282, %s282
              %s341 = sphi %s284, %s284
            $region65: #{double_conv_forward.4} parent=54 // loop_header_branch
              %338 = sbr.rel (%p336) target = $region69
            $region66: #{double_conv_forward.4} parent=54 // loop_body
              %v342 = vld [vmem:[%s340] sm:%s333]
              %343 = vst [vmem:[%s341] sm:%s333] %v342
              %v344 = vld [vmem:[%s340 + $0x18] sm:%s333]
              %345 = vst [vmem:[%s341 + $0x18] sm:%s333] %v344
              %v346 = vld [vmem:[%s340 + $0x30] sm:%s333]
              %347 = vst [vmem:[%s341 + $0x30] sm:%s333] %v346
              %v348 = vld [vmem:[%s340 + $0x48] sm:%s333]
              %349 = vst [vmem:[%s341 + $0x48] sm:%s333] %v348
              %v350 = vld [vmem:[%s340 + $0x60] sm:%s333]
              %351 = vst [vmem:[%s341 + $0x60] sm:%s333] %v350
              %v352 = vld [vmem:[%s340 + $0x78] sm:%s333]
              %353 = vst [vmem:[%s341 + $0x78] sm:%s333] %v352
              %v354 = vld [vmem:[%s340 + $0x90] sm:%s333]
              %355 = vst [vmem:[%s341 + $0x90] sm:%s333] %v354
              %v356 = vld [vmem:[%s340 + $0xa8] sm:%s333]
              %357 = vst [vmem:[%s341 + $0xa8] sm:%s333] %v356
              %v358 = vld [vmem:[%s340 + $0xc0] sm:%s333]
              %359 = vst [vmem:[%s341 + $0xc0] sm:%s333] %v358
              %v360 = vld [vmem:[%s340 + $0xd8] sm:%s333]
              %361 = vst [vmem:[%s341 + $0xd8] sm:%s333] %v360
            $region67: #{double_conv_forward.4} parent=54 // loop_footer
              %s339 = sadd.s32 1, %s335
            $region68: #{double_conv_forward.4} parent=54 // loop_footer_branch
              %334 = sbr.rel target = $region64
            $region69: #{double_conv_forward.4} parent=54 // loop_exit
              _
          $region55: #{double_conv_forward.4} parent=39 // pred_fallthru
            _
        $region40: #{double_conv_forward.4} parent=35 // pred_fallthru
          _
        // Predicated region
        $region41: #{double_conv_forward.4} parent=35 // pred_check
          %p243 = pneg %p239
        $region42: #{double_conv_forward.4} parent=35 // pred_check_branch
          %245 = sbr.rel (%p243) target = $region44
        $region43: #{double_conv_forward.4} parent=35 // pred_region
          %s246 = sshllo.u32 0, 18
          loop: start=0, step=1, limit=1
          $region45: #{double_conv_forward.4} parent=43 // loop_pre_header
            _
          $region46: #{double_conv_forward.4} parent=43 // loop_header
            %s248 = sphi 0, %s252
            %p249 = scmp.ge.s32.totalorder %s248, 1
            %s253 = sphi %s234, %s234
            %s254 = sphi %s236, %s236
          $region47: #{double_conv_forward.4} parent=43 // loop_header_branch
            %251 = sbr.rel (%p249) target = $region51
          $region48: #{double_conv_forward.4} parent=43 // loop_body
            %v255 = vld [vmem:[%s253] sm:%s246]
            %256 = vst [vmem:[%s254] sm:%s246] %v255
            %v257 = vld [vmem:[%s253 + $0x18] sm:%s246]
            %258 = vst [vmem:[%s254 + $0x18] sm:%s246] %v257
            %v259 = vld [vmem:[%s253 + $0x30] sm:%s246]
            %260 = vst [vmem:[%s254 + $0x30] sm:%s246] %v259
            %v261 = vld [vmem:[%s253 + $0x48] sm:%s246]
            %262 = vst [vmem:[%s254 + $0x48] sm:%s246] %v261
            %v263 = vld [vmem:[%s253 + $0x60] sm:%s246]
            %264 = vst [vmem:[%s254 + $0x60] sm:%s246] %v263
            %v265 = vld [vmem:[%s253 + $0x78] sm:%s246]
            %266 = vst [vmem:[%s254 + $0x78] sm:%s246] %v265
            %v267 = vld [vmem:[%s253 + $0x90] sm:%s246]
            %268 = vst [vmem:[%s254 + $0x90] sm:%s246] %v267
            %v269 = vld [vmem:[%s253 + $0xa8] sm:%s246]
            %270 = vst [vmem:[%s254 + $0xa8] sm:%s246] %v269
            %v271 = vld [vmem:[%s253 + $0xc0] sm:%s246]
            %272 = vst [vmem:[%s254 + $0xc0] sm:%s246] %v271
            %v273 = vld [vmem:[%s253 + $0xd8] sm:%s246]
            %274 = vst [vmem:[%s254 + $0xd8] sm:%s246] %v273
          $region49: #{double_conv_forward.4} parent=43 // loop_footer
            %s252 = sadd.s32 1, %s248
          $region50: #{double_conv_forward.4} parent=43 // loop_footer_branch
            %247 = sbr.rel target = $region46
          $region51: #{double_conv_forward.4} parent=43 // loop_exit
            _
        $region44: #{double_conv_forward.4} parent=35 // pred_fallthru
          _
        // Predicated region
        $region70: #{double_conv_forward.4} parent=35 // pred_check
          _
        $region71: #{double_conv_forward.4} parent=35 // pred_check_branch
          %364 = sbr.rel (0) target = $region73
        $region72: #{double_conv_forward.4} parent=35 // pred_region
          %365 = vsyncadd %s237, 2880
        $region73: #{double_conv_forward.4} parent=35 // pred_fallthru
          _
      $region36: #{double_conv_forward.4} parent=31 // pred_fallthru
        _
      %s366 = smul.u32 %s22, 8
      %s367 = smul.u32 %s225, 240
      %s368 = scalar_lea.vmem [#allocation2], %s367
      %s369 = scalar_lea.sflag [#allocation3], %s225
      %s370 = smul.u32 10, 18
      %s371 = smul.u32 %s370, 1
      %s372 = sshll.u32 %s371, 4
      %373 = dma.done %s369, %s372
      %s374 = sadd.s32 %s22, 1
      %p375 = scmp.lt.s32.totalorder %s374, 2
      // Predicated region
      $region74: #{double_conv_forward.4} parent=31 // pred_check
        %p376 = pneg %p375
      $region75: #{double_conv_forward.4} parent=31 // pred_check_branch
        %378 = sbr.rel (%p376) target = $region77
      $region76: #{double_conv_forward.4} parent=31 // pred_region
        %s379 = ssub.s32 1, %s225
        %s380 = smul.u32 %s374, 8
        %s381 = smul.u32 %s380, 24
        %s382 = smul.u32 %s21, 432
        %s383 = sadd.s32 %s381, %s382
        %s384 = scalar_lea.vmem %s0, %s383
        %s385 = smul.u32 %s379, 240
        %s386 = scalar_lea.vmem [#allocation2], %s385
        %s387 = scalar_lea.sflag [#allocation3], %s379
        %p389 = scmp.lt.u32.totalorder 18, 8
        %p390 = pneg %p389
        // Predicated region
        $region78: #{double_conv_forward.4} parent=76 // pred_check
          _
        $region79: #{double_conv_forward.4} parent=76 // pred_check_branch
          %392 = sbr.rel (%p389) target = $region81
        $region80: #{double_conv_forward.4} parent=76 // pred_region
          %s425 = sand.u32 18, 7
          %p426 = scmp.eq.s32.totalorder %s425, 0
          %p427 = pneg %p426
          // Predicated region
          $region93: #{double_conv_forward.4} parent=80 // pred_check
            _
          $region94: #{double_conv_forward.4} parent=80 // pred_check_branch
            %429 = sbr.rel (%p426) target = $region96
          $region95: #{double_conv_forward.4} parent=80 // pred_region
            %s430 = sand.u32 18, 7
            %s431 = ssub.s32 18, %s430
            %s432 = scalar_lea.vmem %s384, %s431
            %s433 = ssub.s32 18, %s430
            %s434 = scalar_lea.vmem %s386, %s433 [#allocation2]
            loop: start=0, step=1, limit=1
            $region97: #{double_conv_forward.4} parent=95 // loop_pre_header
              _
            $region98: #{double_conv_forward.4} parent=95 // loop_header
              %s436 = sphi 0, %s440
              %p437 = scmp.ge.s32.totalorder %s436, 1
              %s441 = sphi %s384, %s384
              %s442 = sphi %s386, %s386
            $region99: #{double_conv_forward.4} parent=95 // loop_header_branch
              %439 = sbr.rel (%p437) target = $region103
            $region100: #{double_conv_forward.4} parent=95 // loop_body
              %v443 = vld [vmem:[%s441] sm:$0xff]
              %444 = vst [vmem:[%s442] sm:$0xff] %v443
              %v445 = vld [vmem:[%s441 + $0x8] sm:$0xff]
              %446 = vst [vmem:[%s442 + $0x8] sm:$0xff] %v445
              %v447 = vld [vmem:[%s441 + $0x18] sm:$0xff]
              %448 = vst [vmem:[%s442 + $0x18] sm:$0xff] %v447
              %v449 = vld [vmem:[%s441 + $0x20] sm:$0xff]
              %450 = vst [vmem:[%s442 + $0x20] sm:$0xff] %v449
              %v451 = vld [vmem:[%s441 + $0x30] sm:$0xff]
              %452 = vst [vmem:[%s442 + $0x30] sm:$0xff] %v451
              %v453 = vld [vmem:[%s441 + $0x38] sm:$0xff]
              %454 = vst [vmem:[%s442 + $0x38] sm:$0xff] %v453
              %v455 = vld [vmem:[%s441 + $0x48] sm:$0xff]
              %456 = vst [vmem:[%s442 + $0x48] sm:$0xff] %v455
              %v457 = vld [vmem:[%s441 + $0x50] sm:$0xff]
              %458 = vst [vmem:[%s442 + $0x50] sm:$0xff] %v457
              %v459 = vld [vmem:[%s441 + $0x60] sm:$0xff]
              %460 = vst [vmem:[%s442 + $0x60] sm:$0xff] %v459
              %v461 = vld [vmem:[%s441 + $0x68] sm:$0xff]
              %462 = vst [vmem:[%s442 + $0x68] sm:$0xff] %v461
              %v463 = vld [vmem:[%s441 + $0x78] sm:$0xff]
              %464 = vst [vmem:[%s442 + $0x78] sm:$0xff] %v463
              %v465 = vld [vmem:[%s441 + $0x80] sm:$0xff]
              %466 = vst [vmem:[%s442 + $0x80] sm:$0xff] %v465
              %v467 = vld [vmem:[%s441 + $0x90] sm:$0xff]
              %468 = vst [vmem:[%s442 + $0x90] sm:$0xff] %v467
              %v469 = vld [vmem:[%s441 + $0x98] sm:$0xff]
              %470 = vst [vmem:[%s442 + $0x98] sm:$0xff] %v469
              %v471 = vld [vmem:[%s441 + $0xa8] sm:$0xff]
              %472 = vst [vmem:[%s442 + $0xa8] sm:$0xff] %v471
              %v473 = vld [vmem:[%s441 + $0xb0] sm:$0xff]
              %474 = vst [vmem:[%s442 + $0xb0] sm:$0xff] %v473
              %v475 = vld [vmem:[%s441 + $0xc0] sm:$0xff]
              %476 = vst [vmem:[%s442 + $0xc0] sm:$0xff] %v475
              %v477 = vld [vmem:[%s441 + $0xc8] sm:$0xff]
              %478 = vst [vmem:[%s442 + $0xc8] sm:$0xff] %v477
              %v479 = vld [vmem:[%s441 + $0xd8] sm:$0xff]
              %480 = vst [vmem:[%s442 + $0xd8] sm:$0xff] %v479
              %v481 = vld [vmem:[%s441 + $0xe0] sm:$0xff]
              %482 = vst [vmem:[%s442 + $0xe0] sm:$0xff] %v481
            $region101: #{double_conv_forward.4} parent=95 // loop_footer
              %s440 = sadd.s32 1, %s436
            $region102: #{double_conv_forward.4} parent=95 // loop_footer_branch
              %435 = sbr.rel target = $region98
            $region103: #{double_conv_forward.4} parent=95 // loop_exit
              _
            %s483 = sshllo.u32 0, %s430
            loop: start=0, step=1, limit=1
            $region104: #{double_conv_forward.4} parent=95 // loop_pre_header
              _
            $region105: #{double_conv_forward.4} parent=95 // loop_header
              %s485 = sphi 0, %s489
              %p486 = scmp.ge.s32.totalorder %s485, 1
              %s490 = sphi %s432, %s432
              %s491 = sphi %s434, %s434
            $region106: #{double_conv_forward.4} parent=95 // loop_header_branch
              %488 = sbr.rel (%p486) target = $region110
            $region107: #{double_conv_forward.4} parent=95 // loop_body
              %v492 = vld [vmem:[%s490] sm:%s483]
              %493 = vst [vmem:[%s491] sm:%s483] %v492
              %v494 = vld [vmem:[%s490 + $0x18] sm:%s483]
              %495 = vst [vmem:[%s491 + $0x18] sm:%s483] %v494
              %v496 = vld [vmem:[%s490 + $0x30] sm:%s483]
              %497 = vst [vmem:[%s491 + $0x30] sm:%s483] %v496
              %v498 = vld [vmem:[%s490 + $0x48] sm:%s483]
              %499 = vst [vmem:[%s491 + $0x48] sm:%s483] %v498
              %v500 = vld [vmem:[%s490 + $0x60] sm:%s483]
              %501 = vst [vmem:[%s491 + $0x60] sm:%s483] %v500
              %v502 = vld [vmem:[%s490 + $0x78] sm:%s483]
              %503 = vst [vmem:[%s491 + $0x78] sm:%s483] %v502
              %v504 = vld [vmem:[%s490 + $0x90] sm:%s483]
              %505 = vst [vmem:[%s491 + $0x90] sm:%s483] %v504
              %v506 = vld [vmem:[%s490 + $0xa8] sm:%s483]
              %507 = vst [vmem:[%s491 + $0xa8] sm:%s483] %v506
              %v508 = vld [vmem:[%s490 + $0xc0] sm:%s483]
              %509 = vst [vmem:[%s491 + $0xc0] sm:%s483] %v508
              %v510 = vld [vmem:[%s490 + $0xd8] sm:%s483]
              %511 = vst [vmem:[%s491 + $0xd8] sm:%s483] %v510
            $region108: #{double_conv_forward.4} parent=95 // loop_footer
              %s489 = sadd.s32 1, %s485
            $region109: #{double_conv_forward.4} parent=95 // loop_footer_branch
              %484 = sbr.rel target = $region105
            $region110: #{double_conv_forward.4} parent=95 // loop_exit
              _
          $region96: #{double_conv_forward.4} parent=80 // pred_fallthru
            _
        $region81: #{double_conv_forward.4} parent=76 // pred_fallthru
          _
        // Predicated region
        $region82: #{double_conv_forward.4} parent=76 // pred_check
          %p393 = pneg %p389
        $region83: #{double_conv_forward.4} parent=76 // pred_check_branch
          %395 = sbr.rel (%p393) target = $region85
        $region84: #{double_conv_forward.4} parent=76 // pred_region
          %s396 = sshllo.u32 0, 18
          loop: start=0, step=1, limit=1
          $region86: #{double_conv_forward.4} parent=84 // loop_pre_header
            _
          $region87: #{double_conv_forward.4} parent=84 // loop_header
            %s398 = sphi 0, %s402
            %p399 = scmp.ge.s32.totalorder %s398, 1
            %s403 = sphi %s384, %s384
            %s404 = sphi %s386, %s386
          $region88: #{double_conv_forward.4} parent=84 // loop_header_branch
            %401 = sbr.rel (%p399) target = $region92
          $region89: #{double_conv_forward.4} parent=84 // loop_body
            %v405 = vld [vmem:[%s403] sm:%s396]
            %406 = vst [vmem:[%s404] sm:%s396] %v405
            %v407 = vld [vmem:[%s403 + $0x18] sm:%s396]
            %408 = vst [vmem:[%s404 + $0x18] sm:%s396] %v407
            %v409 = vld [vmem:[%s403 + $0x30] sm:%s396]
            %410 = vst [vmem:[%s404 + $0x30] sm:%s396] %v409
            %v411 = vld [vmem:[%s403 + $0x48] sm:%s396]
            %412 = vst [vmem:[%s404 + $0x48] sm:%s396] %v411
            %v413 = vld [vmem:[%s403 + $0x60] sm:%s396]
            %414 = vst [vmem:[%s404 + $0x60] sm:%s396] %v413
            %v415 = vld [vmem:[%s403 + $0x78] sm:%s396]
            %416 = vst [vmem:[%s404 + $0x78] sm:%s396] %v415
            %v417 = vld [vmem:[%s403 + $0x90] sm:%s396]
            %418 = vst [vmem:[%s404 + $0x90] sm:%s396] %v417
            %v419 = vld [vmem:[%s403 + $0xa8] sm:%s396]
            %420 = vst [vmem:[%s404 + $0xa8] sm:%s396] %v419
            %v421 = vld [vmem:[%s403 + $0xc0] sm:%s396]
            %422 = vst [vmem:[%s404 + $0xc0] sm:%s396] %v421
            %v423 = vld [vmem:[%s403 + $0xd8] sm:%s396]
            %424 = vst [vmem:[%s404 + $0xd8] sm:%s396] %v423
          $region90: #{double_conv_forward.4} parent=84 // loop_footer
            %s402 = sadd.s32 1, %s398
          $region91: #{double_conv_forward.4} parent=84 // loop_footer_branch
            %397 = sbr.rel target = $region87
          $region92: #{double_conv_forward.4} parent=84 // loop_exit
            _
        $region85: #{double_conv_forward.4} parent=76 // pred_fallthru
          _
        // Predicated region
        $region111: #{double_conv_forward.4} parent=76 // pred_check
          _
        $region112: #{double_conv_forward.4} parent=76 // pred_check_branch
          %514 = sbr.rel (0) target = $region114
        $region113: #{double_conv_forward.4} parent=76 // pred_region
          %515 = vsyncadd %s387, 2880
        $region114: #{double_conv_forward.4} parent=76 // pred_fallthru
          _
      $region77: #{double_conv_forward.4} parent=31 // pred_fallthru
        _
      %v516 = vld [vmem:[%s368] sm:$0xff]
      %v517 = vld [vmem:[%s368 + $0x8] sm:$0xff]
      %v518 = vld [vmem:[%s368 + $0x10] sm:$0x3]
      %v519 = vld [vmem:[%s368 + $0x18] sm:$0xff]
      %v520 = vld [vmem:[%s368 + $0x20] sm:$0xff]
      %v521 = vld [vmem:[%s368 + $0x28] sm:$0x3]
      %v522 = vld [vmem:[%s368 + $0x30] sm:$0xff]
      %v523 = vld [vmem:[%s368 + $0x38] sm:$0xff]
      %v524 = vld [vmem:[%s368 + $0x40] sm:$0x3]
      %v525 = vld [vmem:[%s368 + $0x48] sm:$0xff]
      %v526 = vld [vmem:[%s368 + $0x50] sm:$0xff]
      %v527 = vld [vmem:[%s368 + $0x58] sm:$0x3]
      %v528 = vld [vmem:[%s368 + $0x60] sm:$0xff]
      %v529 = vld [vmem:[%s368 + $0x68] sm:$0xff]
      %v530 = vld [vmem:[%s368 + $0x70] sm:$0x3]
      %v531 = vld [vmem:[%s368 + $0x78] sm:$0xff]
      %v532 = vld [vmem:[%s368 + $0x80] sm:$0xff]
      %v533 = vld [vmem:[%s368 + $0x88] sm:$0x3]
      %v534 = vld [vmem:[%s368 + $0x90] sm:$0xff]
      %v535 = vld [vmem:[%s368 + $0x98] sm:$0xff]
      %v536 = vld [vmem:[%s368 + $0xa0] sm:$0x3]
      %v537 = vld [vmem:[%s368 + $0xa8] sm:$0xff]
      %v538 = vld [vmem:[%s368 + $0xb0] sm:$0xff]
      %v539 = vld [vmem:[%s368 + $0xb8] sm:$0x3]
      %v540 = vld [vmem:[%s368 + $0xc0] sm:$0xff]
      %v541 = vld [vmem:[%s368 + $0xc8] sm:$0xff]
      %v542 = vld [vmem:[%s368 + $0xd0] sm:$0x3]
      %v543 = vld [vmem:[%s368 + $0xd8] sm:$0xff]
      %v544 = vld [vmem:[%s368 + $0xe0] sm:$0xff]
      %v545 = vld [vmem:[%s368 + $0xe8] sm:$0x3]
      %v546 = vld [vmem:[%s2] sm:$0x1]
      %v548 = vlaneseq
      %v549 = vshrl.u32 %v548, 7
      %v550 = vsub.s32 0, %v549
      %v551 = vrot.slane %v546, %v550
      %v553 = vmul.f32 %v516, %v551
      %v554 = vmul.f32 %v517, %v551
      %v555 = vmul.f32 %v518, %v551
      %v556 = vmul.f32 %v519, %v551
      %v557 = vmul.f32 %v520, %v551
      %v558 = vmul.f32 %v521, %v551
      %v559 = vmul.f32 %v522, %v551
      %v560 = vmul.f32 %v523, %v551
      %v561 = vmul.f32 %v524, %v551
      %v562 = vmul.f32 %v525, %v551
      %v563 = vmul.f32 %v526, %v551
      %v564 = vmul.f32 %v527, %v551
      %v565 = vmul.f32 %v528, %v551
      %v566 = vmul.f32 %v529, %v551
      %v567 = vmul.f32 %v530, %v551
      %v568 = vmul.f32 %v531, %v551
      %v569 = vmul.f32 %v532, %v551
      %v570 = vmul.f32 %v533, %v551
      %v571 = vmul.f32 %v534, %v551
      %v572 = vmul.f32 %v535, %v551
      %v573 = vmul.f32 %v536, %v551
      %v574 = vmul.f32 %v537, %v551
      %v575 = vmul.f32 %v538, %v551
      %v576 = vmul.f32 %v539, %v551
      %v577 = vmul.f32 %v540, %v551
      %v578 = vmul.f32 %v541, %v551
      %v579 = vmul.f32 %v542, %v551
      %v580 = vmul.f32 %v543, %v551
      %v581 = vmul.f32 %v544, %v551
      %v582 = vmul.f32 %v545, %v551
      %v583 = vld [vmem:[%s3] sm:$0x1]
      %v585 = vlaneseq
      %v586 = vshrl.u32 %v585, 7
      %v587 = vsub.s32 0, %v586
      %v588 = vrot.slane %v583, %v587
      %v590 = vadd.f32 %v553, %v588
      %v591 = vadd.f32 %v554, %v588
      %v592 = vadd.f32 %v555, %v588
      %v593 = vadd.f32 %v556, %v588
      %v594 = vadd.f32 %v557, %v588
      %v595 = vadd.f32 %v558, %v588
      %v596 = vadd.f32 %v559, %v588
      %v597 = vadd.f32 %v560, %v588
      %v598 = vadd.f32 %v561, %v588
      %v599 = vadd.f32 %v562, %v588
      %v600 = vadd.f32 %v563, %v588
      %v601 = vadd.f32 %v564, %v588
      %v602 = vadd.f32 %v565, %v588
      %v603 = vadd.f32 %v566, %v588
      %v604 = vadd.f32 %v567, %v588
      %v605 = vadd.f32 %v568, %v588
      %v606 = vadd.f32 %v569, %v588
      %v607 = vadd.f32 %v570, %v588
      %v608 = vadd.f32 %v571, %v588
      %v609 = vadd.f32 %v572, %v588
      %v610 = vadd.f32 %v573, %v588
      %v611 = vadd.f32 %v574, %v588
      %v612 = vadd.f32 %v575, %v588
      %v613 = vadd.f32 %v576, %v588
      %v614 = vadd.f32 %v577, %v588
      %v615 = vadd.f32 %v578, %v588
      %v616 = vadd.f32 %v579, %v588
      %v617 = vadd.f32 %v580, %v588
      %v618 = vadd.f32 %v581, %v588
      %v619 = vadd.f32 %v582, %v588
      %v620 = vmax.f32 %v590, 0.0
      %v621 = vmax.f32 %v591, 0.0
      %v622 = vmax.f32 %v592, 0.0
      %v623 = vmax.f32 %v593, 0.0
      %v624 = vmax.f32 %v594, 0.0
      %v625 = vmax.f32 %v595, 0.0
      %v626 = vmax.f32 %v596, 0.0
      %v627 = vmax.f32 %v597, 0.0
      %v628 = vmax.f32 %v598, 0.0
      %v629 = vmax.f32 %v599, 0.0
      %v630 = vmax.f32 %v600, 0.0
      %v631 = vmax.f32 %v601, 0.0
      %v632 = vmax.f32 %v602, 0.0
      %v633 = vmax.f32 %v603, 0.0
      %v634 = vmax.f32 %v604, 0.0
      %v635 = vmax.f32 %v605, 0.0
      %v636 = vmax.f32 %v606, 0.0
      %v637 = vmax.f32 %v607, 0.0
      %v638 = vmax.f32 %v608, 0.0
      %v639 = vmax.f32 %v609, 0.0
      %v640 = vmax.f32 %v610, 0.0
      %v641 = vmax.f32 %v611, 0.0
      %v642 = vmax.f32 %v612, 0.0
      %v643 = vmax.f32 %v613, 0.0
      %v644 = vmax.f32 %v614, 0.0
      %v645 = vmax.f32 %v615, 0.0
      %v646 = vmax.f32 %v616, 0.0
      %v647 = vmax.f32 %v617, 0.0
      %v648 = vmax.f32 %v618, 0.0
      %v649 = vmax.f32 %v619, 0.0
      %v650 = vstv %s366
      %v651 = vadd.s32 %v650, 1
      %v652 = vadd.s32 %v650, 2
      %v653 = vadd.s32 %v650, 3
      %v654 = vadd.s32 %v650, 4
      %v655 = vadd.s32 %v650, 5
      %v656 = vadd.s32 %v650, 6
      %v657 = vadd.s32 %v650, 7
      %v658 = vadd.s32 %v650, 8
      %v659 = vadd.s32 %v650, 9
      %v660 = vlaneseq
      %v661 = vshrl.u32 %v660, 7
      %v662 = vadd.s32 %v661, 8
      %v663 = vadd.s32 %v661, 16
      %vm664 = vcmp.gt.s32.totalorder %v650, 0
      %vm665 = vcmp.gt.s32.totalorder %v651, 0
      %vm666 = vcmp.gt.s32.totalorder %v652, 0
      %vm667 = vcmp.gt.s32.totalorder %v653, 0
      %vm668 = vcmp.gt.s32.totalorder %v654, 0
      %vm669 = vcmp.gt.s32.totalorder %v655, 0
      %vm670 = vcmp.gt.s32.totalorder %v656, 0
      %vm671 = vcmp.gt.s32.totalorder %v657, 0
      %vm672 = vcmp.gt.s32.totalorder %v658, 0
      %vm673 = vcmp.gt.s32.totalorder %v659, 0
      %vm674 = vcmp.lt.s32.totalorder %v650, 17
      %vm675 = vcmp.lt.s32.totalorder %v651, 17
      %vm676 = vcmp.lt.s32.totalorder %v652, 17
      %vm677 = vcmp.lt.s32.totalorder %v653, 17
      %vm678 = vcmp.lt.s32.totalorder %v654, 17
      %vm679 = vcmp.lt.s32.totalorder %v655, 17
      %vm680 = vcmp.lt.s32.totalorder %v656, 17
      %vm681 = vcmp.lt.s32.totalorder %v657, 17
      %vm682 = vcmp.lt.s32.totalorder %v658, 17
      %vm683 = vcmp.lt.s32.totalorder %v659, 17
      %vm684 = vmand %vm664, %vm674
      %vm685 = vmand %vm665, %vm675
      %vm686 = vmand %vm666, %vm676
      %vm687 = vmand %vm667, %vm677
      %vm688 = vmand %vm668, %vm678
      %vm689 = vmand %vm669, %vm679
      %vm690 = vmand %vm670, %vm680
      %vm691 = vmand %vm671, %vm681
      %vm692 = vmand %vm672, %vm682
      %vm693 = vmand %vm673, %vm683
      %vm694 = vcmp.gt.s32.totalorder %v661, 0
      %vm695 = vcmp.gt.s32.totalorder %v662, 0
      %vm696 = vcmp.gt.s32.totalorder %v663, 0
      %vm697 = vmand %vm684, %vm694
      %vm698 = vmand %vm684, %vm695
      %vm699 = vmand %vm684, %vm696
      %vm700 = vmand %vm685, %vm694
      %vm701 = vmand %vm685, %vm695
      %vm702 = vmand %vm685, %vm696
      %vm703 = vmand %vm686, %vm694
      %vm704 = vmand %vm686, %vm695
      %vm705 = vmand %vm686, %vm696
      %vm706 = vmand %vm687, %vm694
      %vm707 = vmand %vm687, %vm695
      %vm708 = vmand %vm687, %vm696
      %vm709 = vmand %vm688, %vm694
      %vm710 = vmand %vm688, %vm695
      %vm711 = vmand %vm688, %vm696
      %vm712 = vmand %vm689, %vm694
      %vm713 = vmand %vm689, %vm695
      %vm714 = vmand %vm689, %vm696
      %vm715 = vmand %vm690, %vm694
      %vm716 = vmand %vm690, %vm695
      %vm717 = vmand %vm690, %vm696
      %vm718 = vmand %vm691, %vm694
      %vm719 = vmand %vm691, %vm695
      %vm720 = vmand %vm691, %vm696
      %vm721 = vmand %vm692, %vm694
      %vm722 = vmand %vm692, %vm695
      %vm723 = vmand %vm692, %vm696
      %vm724 = vmand %vm693, %vm694
      %vm725 = vmand %vm693, %vm695
      %vm726 = vmand %vm693, %vm696
      %vm727 = vcmp.lt.s32.totalorder %v661, 17
      %vm728 = vcmp.lt.s32.totalorder %v662, 17
      %vm729 = vcmp.lt.s32.totalorder %v663, 17
      %vm730 = vmand %vm697, %vm727
      %vm731 = vmand %vm698, %vm728
      %vm732 = vmand %vm699, %vm729
      %vm733 = vmand %vm700, %vm727
      %vm734 = vmand %vm701, %vm728
      %vm735 = vmand %vm702, %vm729
      %vm736 = vmand %vm703, %vm727
      %vm737 = vmand %vm704, %vm728
      %vm738 = vmand %vm705, %vm729
      %vm739 = vmand %vm706, %vm727
      %vm740 = vmand %vm707, %vm728
      %vm741 = vmand %vm708, %vm729
      %vm742 = vmand %vm709, %vm727
      %vm743 = vmand %vm710, %vm728
      %vm744 = vmand %vm711, %vm729
      %vm745 = vmand %vm712, %vm727
      %vm746 = vmand %vm713, %vm728
      %vm747 = vmand %vm714, %vm729
      %vm748 = vmand %vm715, %vm727
      %vm749 = vmand %vm716, %vm728
      %vm750 = vmand %vm717, %vm729
      %vm751 = vmand %vm718, %vm727
      %vm752 = vmand %vm719, %vm728
      %vm753 = vmand %vm720, %vm729
      %vm754 = vmand %vm721, %vm727
      %vm755 = vmand %vm722, %vm728
      %vm756 = vmand %vm723, %vm729
      %vm757 = vmand %vm724, %vm727
      %vm758 = vmand %vm725, %vm728
      %vm759 = vmand %vm726, %vm729
      %v760 = vsel %vm730, 1, 0
      %v761 = vsel %vm731, 1, 0
      %v762 = vsel %vm732, 1, 0
      %v763 = vsel %vm733, 1, 0
      %v764 = vsel %vm734, 1, 0
      %v765 = vsel %vm735, 1, 0
      %v766 = vsel %vm736, 1, 0
      %v767 = vsel %vm737, 1, 0
      %v768 = vsel %vm738, 1, 0
      %v769 = vsel %vm739, 1, 0
      %v770 = vsel %vm740, 1, 0
      %v771 = vsel %vm741, 1, 0
      %v772 = vsel %vm742, 1, 0
      %v773 = vsel %vm743, 1, 0
      %v774 = vsel %vm744, 1, 0
      %v775 = vsel %vm745, 1, 0
      %v776 = vsel %vm746, 1, 0
      %v777 = vsel %vm747, 1, 0
      %v778 = vsel %vm748, 1, 0
      %v779 = vsel %vm749, 1, 0
      %v780 = vsel %vm750, 1, 0
      %v781 = vsel %vm751, 1, 0
      %v782 = vsel %vm752, 1, 0
      %v783 = vsel %vm753, 1, 0
      %v784 = vsel %vm754, 1, 0
      %v785 = vsel %vm755, 1, 0
      %v786 = vsel %vm756, 1, 0
      %v787 = vsel %vm757, 1, 0
      %v788 = vsel %vm758, 1, 0
      %v789 = vsel %vm759, 1, 0
      %vm790 = vcmp.eq.s32.totalorder %v760, 1
      %vm791 = vcmp.eq.s32.totalorder %v761, 1
      %vm792 = vcmp.eq.s32.totalorder %v762, 1
      %vm793 = vcmp.eq.s32.totalorder %v763, 1
      %vm794 = vcmp.eq.s32.totalorder %v764, 1
      %vm795 = vcmp.eq.s32.totalorder %v765, 1
      %vm796 = vcmp.eq.s32.totalorder %v766, 1
      %vm797 = vcmp.eq.s32.totalorder %v767, 1
      %vm798 = vcmp.eq.s32.totalorder %v768, 1
      %vm799 = vcmp.eq.s32.totalorder %v769, 1
      %vm800 = vcmp.eq.s32.totalorder %v770, 1
      %vm801 = vcmp.eq.s32.totalorder %v771, 1
      %vm802 = vcmp.eq.s32.totalorder %v772, 1
      %vm803 = vcmp.eq.s32.totalorder %v773, 1
      %vm804 = vcmp.eq.s32.totalorder %v774, 1
      %vm805 = vcmp.eq.s32.totalorder %v775, 1
      %vm806 = vcmp.eq.s32.totalorder %v776, 1
      %vm807 = vcmp.eq.s32.totalorder %v777, 1
      %vm808 = vcmp.eq.s32.totalorder %v778, 1
      %vm809 = vcmp.eq.s32.totalorder %v779, 1
      %vm810 = vcmp.eq.s32.totalorder %v780, 1
      %vm811 = vcmp.eq.s32.totalorder %v781, 1
      %vm812 = vcmp.eq.s32.totalorder %v782, 1
      %vm813 = vcmp.eq.s32.totalorder %v783, 1
      %vm814 = vcmp.eq.s32.totalorder %v784, 1
      %vm815 = vcmp.eq.s32.totalorder %v785, 1
      %vm816 = vcmp.eq.s32.totalorder %v786, 1
      %vm817 = vcmp.eq.s32.totalorder %v787, 1
      %vm818 = vcmp.eq.s32.totalorder %v788, 1
      %vm819 = vcmp.eq.s32.totalorder %v789, 1
      %v820 = vsel %vm790, %v620, 0.0
      %v821 = vsel %vm791, %v621, 0.0
      %v822 = vsel %vm792, %v622, 0.0
      %v823 = vsel %vm793, %v623, 0.0
      %v824 = vsel %vm794, %v624, 0.0
      %v825 = vsel %vm795, %v625, 0.0
      %v826 = vsel %vm796, %v626, 0.0
      %v827 = vsel %vm797, %v627, 0.0
      %v828 = vsel %vm798, %v628, 0.0
      %v829 = vsel %vm799, %v629, 0.0
      %v830 = vsel %vm800, %v630, 0.0
      %v831 = vsel %vm801, %v631, 0.0
      %v832 = vsel %vm802, %v632, 0.0
      %v833 = vsel %vm803, %v633, 0.0
      %v834 = vsel %vm804, %v634, 0.0
      %v835 = vsel %vm805, %v635, 0.0
      %v836 = vsel %vm806, %v636, 0.0
      %v837 = vsel %vm807, %v637, 0.0
      %v838 = vsel %vm808, %v638, 0.0
      %v839 = vsel %vm809, %v639, 0.0
      %v840 = vsel %vm810, %v640, 0.0
      %v841 = vsel %vm811, %v641, 0.0
      %v842 = vsel %vm812, %v642, 0.0
      %v843 = vsel %vm813, %v643, 0.0
      %v844 = vsel %vm814, %v644, 0.0
      %v845 = vsel %vm815, %v645, 0.0
      %v846 = vsel %vm816, %v646, 0.0
      %v847 = vsel %vm817, %v647, 0.0
      %v848 = vsel %vm818, %v648, 0.0
      %v849 = vsel %vm819, %v649, 0.0
      %vm874 = vcmask 1046528
      %v875 = vrot.slane %v820, 1
      %v876 = vrot.slane %v821, 1
      %v877 = vsel %vm874, %v875, %v876
      %v878 = vrot.slane %v822, 1
      %v879 = vsel %vm874, %v876, %v878
      %v880 = vrot.slane %v823, 1
      %v881 = vrot.slane %v824, 1
      %v882 = vsel %vm874, %v880, %v881
      %v883 = vrot.slane %v825, 1
      %v884 = vsel %vm874, %v881, %v883
      %v885 = vrot.slane %v826, 1
      %v886 = vrot.slane %v827, 1
      %v887 = vsel %vm874, %v885, %v886
      %v888 = vrot.slane %v828, 1
      %v889 = vsel %vm874, %v886, %v888
      %v890 = vrot.slane %v829, 1
      %v891 = vrot.slane %v830, 1
      %v892 = vsel %vm874, %v890, %v891
      %v893 = vrot.slane %v831, 1
      %v894 = vsel %vm874, %v891, %v893
      %v895 = vrot.slane %v832, 1
      %v896 = vrot.slane %v833, 1
      %v897 = vsel %vm874, %v895, %v896
      %v898 = vrot.slane %v834, 1
      %v899 = vsel %vm874, %v896, %v898
      %v900 = vrot.slane %v835, 1
      %v901 = vrot.slane %v836, 1
      %v902 = vsel %vm874, %v900, %v901
      %v903 = vrot.slane %v837, 1
      %v904 = vsel %vm874, %v901, %v903
      %v905 = vrot.slane %v838, 1
      %v906 = vrot.slane %v839, 1
      %v907 = vsel %vm874, %v905, %v906
      %v908 = vrot.slane %v840, 1
      %v909 = vsel %vm874, %v906, %v908
      %v910 = vrot.slane %v841, 1
      %v911 = vrot.slane %v842, 1
      %v912 = vsel %vm874, %v910, %v911
      %v913 = vrot.slane %v843, 1
      %v914 = vsel %vm874, %v911, %v913
      %vm931 = vcmask 1045504
      %v932 = vrot.slane %v820, 2
      %v933 = vrot.slane %v821, 2
      %v934 = vsel %vm931, %v932, %v933
      %v935 = vrot.slane %v822, 2
      %v936 = vsel %vm931, %v933, %v935
      %v937 = vrot.slane %v823, 2
      %v938 = vrot.slane %v824, 2
      %v939 = vsel %vm931, %v937, %v938
      %v940 = vrot.slane %v825, 2
      %v941 = vsel %vm931, %v938, %v940
      %v942 = vrot.slane %v826, 2
      %v943 = vrot.slane %v827, 2
      %v944 = vsel %vm931, %v942, %v943
      %v945 = vrot.slane %v828, 2
      %v946 = vsel %vm931, %v943, %v945
      %v947 = vrot.slane %v829, 2
      %v948 = vrot.slane %v830, 2
      %v949 = vsel %vm931, %v947, %v948
      %v950 = vrot.slane %v831, 2
      %v951 = vsel %vm931, %v948, %v950
      %v952 = vrot.slane %v832, 2
      %v953 = vrot.slane %v833, 2
      %v954 = vsel %vm931, %v952, %v953
      %v955 = vrot.slane %v834, 2
      %v956 = vsel %vm931, %v953, %v955
      %v957 = vrot.slane %v835, 2
      %v958 = vrot.slane %v836, 2
      %v959 = vsel %vm931, %v957, %v958
      %v960 = vrot.slane %v837, 2
      %v961 = vsel %vm931, %v958, %v960
      %v962 = vrot.slane %v838, 2
      %v963 = vrot.slane %v839, 2
      %v964 = vsel %vm931, %v962, %v963
      %v965 = vrot.slane %v840, 2
      %v966 = vsel %vm931, %v963, %v965
      %v967 = vrot.slane %v841, 2
      %v968 = vrot.slane %v842, 2
      %v969 = vsel %vm931, %v967, %v968
      %v970 = vrot.slane %v843, 2
      %v971 = vsel %vm931, %v968, %v970
      %v991 = vrot.slane %v844, 1
      %v992 = vrot.slane %v845, 1
      %v993 = vsel %vm874, %v991, %v992
      %v994 = vrot.slane %v846, 1
      %v995 = vsel %vm874, %v992, %v994
      %v998 = vrot.slane %v844, 2
      %v999 = vrot.slane %v845, 2
      %v1000 = vsel %vm931, %v998, %v999
      %v1001 = vrot.slane %v846, 2
      %v1002 = vsel %vm931, %v999, %v1001
      %v1008 = vrot.slane %v847, 1
      %v1009 = vrot.slane %v848, 1
      %v1010 = vsel %vm874, %v1008, %v1009
      %v1011 = vrot.slane %v849, 1
      %v1012 = vsel %vm874, %v1009, %v1011
      %v1015 = vrot.slane %v847, 2
      %v1016 = vrot.slane %v848, 2
      %v1017 = vsel %vm931, %v1015, %v1016
      %v1018 = vrot.slane %v849, 2
      %v1019 = vsel %vm931, %v1016, %v1018
      %v1022 = vld [vmem:[%s1] sm:$0xff]
      %v1023 = vld [vmem:[%s1 + $0x8] sm:$0xff]
      %v1024 = vld [vmem:[%s1 + $0x10] sm:$0xff]
      %v1025 = vld [vmem:[%s1 + $0x18] sm:$0xff]
      %v1026 = vld [vmem:[%s1 + $0x20] sm:$0xff]
      %v1027 = vld [vmem:[%s1 + $0x28] sm:$0xff]
      %v1028 = vld [vmem:[%s1 + $0x30] sm:$0xff]
      %v1029 = vld [vmem:[%s1 + $0x38] sm:$0xff]
      %v1030 = vld [vmem:[%s1 + $0x40] sm:$0xff]
      %v1031 = vld [vmem:[%s1 + $0x48] sm:$0xff]
      %v1032 = vld [vmem:[%s1 + $0x50] sm:$0xff]
      %v1033 = vld [vmem:[%s1 + $0x58] sm:$0xff]
      %v1034 = vld [vmem:[%s1 + $0x60] sm:$0xff]
      %v1035 = vld [vmem:[%s1 + $0x68] sm:$0xff]
      %v1036 = vld [vmem:[%s1 + $0x70] sm:$0xff]
      %v1037 = vld [vmem:[%s1 + $0x78] sm:$0xff]
      %v1038 = vld [vmem:[%s1 + $0x80] sm:$0xff]
      %v1039 = vld [vmem:[%s1 + $0x88] sm:$0xff]
      %v1040 = vld [vmem:[%s1 + $0x90] sm:$0xff]
      %v1041 = vld [vmem:[%s1 + $0x98] sm:$0xff]
      %v1042 = vld [vmem:[%s1 + $0xa0] sm:$0xff]
      %v1043 = vld [vmem:[%s1 + $0xa8] sm:$0xff]
      %v1044 = vld [vmem:[%s1 + $0xb0] sm:$0xff]
      %v1045 = vld [vmem:[%s1 + $0xb8] sm:$0xff]
      %v1046 = vld [vmem:[%s1 + $0xc0] sm:$0xff]
      %v1047 = vld [vmem:[%s1 + $0xc8] sm:$0xff]
      %v1048 = vld [vmem:[%s1 + $0xd0] sm:$0xff]
      %v1049 = vld [vmem:[%s1 + $0xd8] sm:$0xff]
      %v1050 = vld [vmem:[%s1 + $0xe0] sm:$0xff]
      %v1051 = vld [vmem:[%s1 + $0xe8] sm:$0xff]
      %v1052 = vld [vmem:[%s1 + $0xf0] sm:$0xff]
      %v1053 = vld [vmem:[%s1 + $0xf8] sm:$0xff]
      %v1054 = vld [vmem:[%s1 + $0x100] sm:$0xff]
      %v1055 = vld [vmem:[%s1 + $0x108] sm:$0xff]
      %v1056 = vld [vmem:[%s1 + $0x110] sm:$0xff]
      %v1057 = vld [vmem:[%s1 + $0x118] sm:$0xff]
      %v1058 = vld [vmem:[%s1 + $0x120] sm:$0xff]
      %v1059 = vld [vmem:[%s1 + $0x128] sm:$0xff]
      %v1060 = vld [vmem:[%s1 + $0x130] sm:$0xff]
      %v1061 = vld [vmem:[%s1 + $0x138] sm:$0xff]
      %v1062 = vld [vmem:[%s1 + $0x140] sm:$0xff]
      %v1063 = vld [vmem:[%s1 + $0x148] sm:$0xff]
      %v1064 = vld [vmem:[%s1 + $0x150] sm:$0xff]
      %v1065 = vld [vmem:[%s1 + $0x158] sm:$0xff]
      %v1066 = vld [vmem:[%s1 + $0x160] sm:$0xff]
      %v1067 = vld [vmem:[%s1 + $0x168] sm:$0xff]
      %v1068 = vld [vmem:[%s1 + $0x170] sm:$0xff]
      %v1069 = vld [vmem:[%s1 + $0x178] sm:$0xff]
      %v1070 = vld [vmem:[%s1 + $0x180] sm:$0xff]
      %v1071 = vld [vmem:[%s1 + $0x188] sm:$0xff]
      %v1072 = vld [vmem:[%s1 + $0x190] sm:$0xff]
      %v1073 = vld [vmem:[%s1 + $0x198] sm:$0xff]
      %v1074 = vld [vmem:[%s1 + $0x1a0] sm:$0xff]
      %v1075 = vld [vmem:[%s1 + $0x1a8] sm:$0xff]
      %v1076 = vld [vmem:[%s1 + $0x1b0] sm:$0xff]
      %v1077 = vld [vmem:[%s1 + $0x1b8] sm:$0xff]
      %v1078 = vld [vmem:[%s1 + $0x1c0] sm:$0xff]
      %v1079 = vld [vmem:[%s1 + $0x1c8] sm:$0xff]
      %v1080 = vld [vmem:[%s1 + $0x1d0] sm:$0xff]
      %v1081 = vld [vmem:[%s1 + $0x1d8] sm:$0xff]
      %v1082 = vld [vmem:[%s1 + $0x1e0] sm:$0xff]
      %v1083 = vld [vmem:[%s1 + $0x1e8] sm:$0xff]
      %v1084 = vld [vmem:[%s1 + $0x1f0] sm:$0xff]
      %v1085 = vld [vmem:[%s1 + $0x1f8] sm:$0xff]
      %v1086 = vld [vmem:[%s1 + $0x200] sm:$0xff]
      %v1087 = vld [vmem:[%s1 + $0x208] sm:$0xff]
      %v1088 = vld [vmem:[%s1 + $0x210] sm:$0xff]
      %v1089 = vld [vmem:[%s1 + $0x218] sm:$0xff]
      %v1090 = vld [vmem:[%s1 + $0x220] sm:$0xff]
      %v1091 = vld [vmem:[%s1 + $0x228] sm:$0xff]
      %v1092 = vld [vmem:[%s1 + $0x230] sm:$0xff]
      %v1093 = vld [vmem:[%s1 + $0x238] sm:$0xff]
      %v1094 = vld [vmem:[%s1 + $0x240] sm:$0xff]
      %v1095 = vld [vmem:[%s1 + $0x248] sm:$0xff]
      %v1096 = vld [vmem:[%s1 + $0x250] sm:$0xff]
      %v1097 = vld [vmem:[%s1 + $0x258] sm:$0xff]
      %v1098 = vld [vmem:[%s1 + $0x260] sm:$0xff]
      %v1099 = vld [vmem:[%s1 + $0x268] sm:$0xff]
      %v1100 = vld [vmem:[%s1 + $0x270] sm:$0xff]
      %v1101 = vld [vmem:[%s1 + $0x278] sm:$0xff]
      %v1102 = vld [vmem:[%s1 + $0x280] sm:$0xff]
      %v1103 = vld [vmem:[%s1 + $0x288] sm:$0xff]
      %v1104 = vld [vmem:[%s1 + $0x290] sm:$0xff]
      %v1105 = vld [vmem:[%s1 + $0x298] sm:$0xff]
      %v1106 = vld [vmem:[%s1 + $0x2a0] sm:$0xff]
      %v1107 = vld [vmem:[%s1 + $0x2a8] sm:$0xff]
      %v1108 = vld [vmem:[%s1 + $0x2b0] sm:$0xff]
      %v1109 = vld [vmem:[%s1 + $0x2b8] sm:$0xff]
      %v1110 = vld [vmem:[%s1 + $0x2c0] sm:$0xff]
      %v1111 = vld [vmem:[%s1 + $0x2c8] sm:$0xff]
      %v1112 = vld [vmem:[%s1 + $0x2d0] sm:$0xff]
      %v1113 = vld [vmem:[%s1 + $0x2d8] sm:$0xff]
      %v1114 = vld [vmem:[%s1 + $0x2e0] sm:$0xff]
      %v1115 = vld [vmem:[%s1 + $0x2e8] sm:$0xff]
      %v1116 = vld [vmem:[%s1 + $0x2f0] sm:$0xff]
      %v1117 = vld [vmem:[%s1 + $0x2f8] sm:$0xff]
      %v1118 = vld [vmem:[%s1 + $0x300] sm:$0xff]
      %v1119 = vld [vmem:[%s1 + $0x308] sm:$0xff]
      %v1120 = vld [vmem:[%s1 + $0x310] sm:$0xff]
      %v1121 = vld [vmem:[%s1 + $0x318] sm:$0xff]
      %v1122 = vld [vmem:[%s1 + $0x320] sm:$0xff]
      %v1123 = vld [vmem:[%s1 + $0x328] sm:$0xff]
      %v1124 = vld [vmem:[%s1 + $0x330] sm:$0xff]
      %v1125 = vld [vmem:[%s1 + $0x338] sm:$0xff]
      %v1126 = vld [vmem:[%s1 + $0x340] sm:$0xff]
      %v1127 = vld [vmem:[%s1 + $0x348] sm:$0xff]
      %v1128 = vld [vmem:[%s1 + $0x350] sm:$0xff]
      %v1129 = vld [vmem:[%s1 + $0x358] sm:$0xff]
      %v1130 = vld [vmem:[%s1 + $0x360] sm:$0xff]
      %v1131 = vld [vmem:[%s1 + $0x368] sm:$0xff]
      %v1132 = vld [vmem:[%s1 + $0x370] sm:$0xff]
      %v1133 = vld [vmem:[%s1 + $0x378] sm:$0xff]
      %v1134 = vld [vmem:[%s1 + $0x380] sm:$0xff]
      %v1135 = vld [vmem:[%s1 + $0x388] sm:$0xff]
      %v1136 = vld [vmem:[%s1 + $0x390] sm:$0xff]
      %v1137 = vld [vmem:[%s1 + $0x398] sm:$0xff]
      %v1138 = vld [vmem:[%s1 + $0x3a0] sm:$0xff]
      %v1139 = vld [vmem:[%s1 + $0x3a8] sm:$0xff]
      %v1140 = vld [vmem:[%s1 + $0x3b0] sm:$0xff]
      %v1141 = vld [vmem:[%s1 + $0x3b8] sm:$0xff]
      %v1142 = vld [vmem:[%s1 + $0x3c0] sm:$0xff]
      %v1143 = vld [vmem:[%s1 + $0x3c8] sm:$0xff]
      %v1144 = vld [vmem:[%s1 + $0x3d0] sm:$0xff]
      %v1145 = vld [vmem:[%s1 + $0x3d8] sm:$0xff]
      %v1146 = vld [vmem:[%s1 + $0x3e0] sm:$0xff]
      %v1147 = vld [vmem:[%s1 + $0x3e8] sm:$0xff]
      %v1148 = vld [vmem:[%s1 + $0x3f0] sm:$0xff]
      %v1149 = vld [vmem:[%s1 + $0x3f8] sm:$0xff]
      %v1150 = vld [vmem:[%s1 + $0x400] sm:$0xff]
      %v1151 = vld [vmem:[%s1 + $0x408] sm:$0xff]
      %v1152 = vld [vmem:[%s1 + $0x410] sm:$0xff]
      %v1153 = vld [vmem:[%s1 + $0x418] sm:$0xff]
      %v1154 = vld [vmem:[%s1 + $0x420] sm:$0xff]
      %v1155 = vld [vmem:[%s1 + $0x428] sm:$0xff]
      %v1156 = vld [vmem:[%s1 + $0x430] sm:$0xff]
      %v1157 = vld [vmem:[%s1 + $0x438] sm:$0xff]
      %v1158 = vld [vmem:[%s1 + $0x440] sm:$0xff]
      %v1159 = vld [vmem:[%s1 + $0x448] sm:$0xff]
      %v1160 = vld [vmem:[%s1 + $0x450] sm:$0xff]
      %v1161 = vld [vmem:[%s1 + $0x458] sm:$0xff]
      %v1162 = vld [vmem:[%s1 + $0x460] sm:$0xff]
      %v1163 = vld [vmem:[%s1 + $0x468] sm:$0xff]
      %v1164 = vld [vmem:[%s1 + $0x470] sm:$0xff]
      %v1165 = vld [vmem:[%s1 + $0x478] sm:$0xff]
      %1166 = vmatprep.subr.mxu0 0.0
      %1167 = vmatpush1.msra.mxu0 %v1022
      %1168 = vmatprep.subr.mxu0 0.0
      %1169 = vmatpush1.msra.mxu0 %v1023
      %1170 = vmatprep.subr.mxu0 0.0
      %1171 = vmatpush1.msra.mxu0 %v1024
      %1172 = vmatprep.subr.mxu0 0.0
      %1173 = vmatpush1.msra.mxu0 %v1025
      %1174 = vmatprep.subr.mxu0 0.0
      %1175 = vmatpush1.msra.mxu0 %v1026
      %1176 = vmatprep.subr.mxu0 0.0
      %1177 = vmatpush1.msra.mxu0 %v1027
      %1178 = vmatprep.subr.mxu0 0.0
      %1179 = vmatpush1.msra.mxu0 %v1028
      %1180 = vmatprep.subr.mxu0 0.0
      %1181 = vmatpush1.msra.mxu0 %v1029
      %1182 = vmatprep.subr.mxu0 0.0
      %1183 = vmatpush1.msra.mxu0 %v1030
      %1184 = vmatprep.subr.mxu0 0.0
      %1185 = vmatpush1.msra.mxu0 %v1031
      %1186 = vmatprep.subr.mxu0 0.0
      %1187 = vmatpush1.msra.mxu0 %v1032
      %1188 = vmatprep.subr.mxu0 0.0
      %1189 = vmatpush1.msra.mxu0 %v1033
      %1190 = vmatprep.subr.mxu0 0.0
      %1191 = vmatpush1.msra.mxu0 %v1034
      %1192 = vmatprep.subr.mxu0 0.0
      %1193 = vmatpush1.msra.mxu0 %v1035
      %1194 = vmatprep.subr.mxu0 0.0
      %1195 = vmatpush1.msra.mxu0 %v1036
      %1196 = vmatprep.subr.mxu0 0.0
      %1197 = vmatpush1.msra.mxu0 %v1037
      %1198 = vmatprep.subr.mxu0 0.0
      %1199 = vmatpush1.msra.mxu0 %v1038
      %1200 = vmatprep.subr.mxu0 0.0
      %1201 = vmatpush1.msra.mxu0 %v1039
      %1202 = vmatprep.subr.mxu0 0.0
      %1203 = vmatpush1.msra.mxu0 %v1040
      %1204 = vmatprep.subr.mxu0 0.0
      %1205 = vmatpush1.msra.mxu0 %v1041
      %1206 = vmatprep.subr.mxu0 0.0
      %1207 = vmatpush1.msra.mxu0 %v1042
      %1208 = vmatprep.subr.mxu0 0.0
      %1209 = vmatpush1.msra.mxu0 %v1043
      %1210 = vmatprep.subr.mxu0 0.0
      %1211 = vmatpush1.msra.mxu0 %v1044
      %1212 = vmatprep.subr.mxu0 0.0
      %1213 = vmatpush1.msra.mxu0 %v1045
      %1214 = vmatprep.subr.mxu0 0.0
      %1215 = vmatpush1.msra.mxu0 %v1046
      %1216 = vmatprep.subr.mxu0 0.0
      %1217 = vmatpush1.msra.mxu0 %v1047
      %1218 = vmatprep.subr.mxu0 0.0
      %1219 = vmatpush1.msra.mxu0 %v1048
      %1220 = vmatprep.subr.mxu0 0.0
      %1221 = vmatpush1.msra.mxu0 %v1049
      %1222 = vmatprep.subr.mxu0 0.0
      %1223 = vmatpush1.msra.mxu0 %v1050
      %1224 = vmatprep.subr.mxu0 0.0
      %1225 = vmatpush1.msra.mxu0 %v1051
      %1226 = vmatprep.subr.mxu0 0.0
      %1227 = vmatpush1.msra.mxu0 %v1052
      %1228 = vmatprep.subr.mxu0 0.0
      %1229 = vmatpush1.msra.mxu0 %v1053
      %1230 = vmatprep.mubr.f32.mxu0 %v877
      %1231 = vmatmul.mubr.f32.gmra.mrb[0].mxu0 %v820
      %v1232 = vpop.f32.mrb[0].mxu0
      %v1233 = vadd.f32 0.0, %v1232
      %v1234 = vpop.f32.mrb[0].mxu0
      %1235 = vmatprep.mubr.f32.mxu0 %v879
      %1236 = vmatmul.mubr.f32.gmra.mrb[0].mxu0 %v821
      %v1237 = vpop.f32.mrb[0].mxu0
      %v1238 = vadd.f32 0.0, %v1237
      %v1239 = vpop.f32.mrb[0].mxu0
      %1240 = vmatprep.mubr.f32.mxu0 %v882
      %1241 = vmatmul.mubr.f32.gmra.mrb[0].mxu0 %v823
      %v1242 = vpop.f32.mrb[0].mxu0
      %v1243 = vadd.f32 0.0, %v1242
      %v1244 = vpop.f32.mrb[0].mxu0
      %1245 = vmatprep.mubr.f32.mxu0 %v884
      %1246 = vmatmul.mubr.f32.gmra.mrb[0].mxu0 %v824
      %v1247 = vpop.f32.mrb[0].mxu0
      %v1248 = vadd.f32 0.0, %v1247
      %v1249 = vpop.f32.mrb[0].mxu0
      %1250 = vmatprep.mubr.f32.mxu0 %v887
      %1251 = vmatmul.mubr.f32.gmra.mrb[0].mxu0 %v826
      %v1252 = vpop.f32.mrb[0].mxu0
      %v1253 = vadd.f32 0.0, %v1252
      %v1254 = vpop.f32.mrb[0].mxu0
      %1255 = vmatprep.mubr.f32.mxu0 %v889
      %1256 = vmatmul.mubr.f32.gmra.mrb[0].mxu0 %v827
      %v1257 = vpop.f32.mrb[0].mxu0
      %v1258 = vadd.f32 0.0, %v1257
      %v1259 = vpop.f32.mrb[0].mxu0
      %1260 = vmatprep.mubr.f32.mxu0 %v892
      %1261 = vmatmul.mubr.f32.gmra.mrb[0].mxu0 %v829
      %v1262 = vpop.f32.mrb[0].mxu0
      %v1263 = vadd.f32 0.0, %v1262
      %v1264 = vpop.f32.mrb[0].mxu0
      %1265 = vmatprep.mubr.f32.mxu0 %v894
      %1266 = vmatmul.mubr.f32.gmra.mrb[0].mxu0 %v830
      %v1267 = vpop.f32.mrb[0].mxu0
      %v1268 = vadd.f32 0.0, %v1267
      %v1269 = vpop.f32.mrb[0].mxu0
      %1270 = vmatprep.mubr.f32.mxu0 %v897
      %1271 = vmatmul.mubr.f32.gmra.mrb[0].mxu0 %v832
      %v1272 = vpop.f32.mrb[0].mxu0
      %v1273 = vadd.f32 0.0, %v1272
      %v1274 = vpop.f32.mrb[0].mxu0
      %1275 = vmatprep.mubr.f32.mxu0 %v899
      %1276 = vmatmul.mubr.f32.gmra.mrb[0].mxu0 %v833
      %v1277 = vpop.f32.mrb[0].mxu0
      %v1278 = vadd.f32 0.0, %v1277
      %v1279 = vpop.f32.mrb[0].mxu0
      %1280 = vmatprep.mubr.f32.mxu0 %v902
      %1281 = vmatmul.mubr.f32.gmra.mrb[0].mxu0 %v835
      %v1282 = vpop.f32.mrb[0].mxu0
      %v1283 = vadd.f32 0.0, %v1282
      %v1284 = vpop.f32.mrb[0].mxu0
      %1285 = vmatprep.mubr.f32.mxu0 %v904
      %1286 = vmatmul.mubr.f32.gmra.mrb[0].mxu0 %v836
      %v1287 = vpop.f32.mrb[0].mxu0
      %v1288 = vadd.f32 0.0, %v1287
      %v1289 = vpop.f32.mrb[0].mxu0
      %1290 = vmatprep.mubr.f32.mxu0 %v907
      %1291 = vmatmul.mubr.f32.gmra.mrb[0].mxu0 %v838
      %v1292 = vpop.f32.mrb[0].mxu0
      %v1293 = vadd.f32 0.0, %v1292
      %v1294 = vpop.f32.mrb[0].mxu0
      %1295 = vmatprep.mubr.f32.mxu0 %v909
      %1296 = vmatmul.mubr.f32.gmra.mrb[0].mxu0 %v839
      %v1297 = vpop.f32.mrb[0].mxu0
      %v1298 = vadd.f32 0.0, %v1297
      %v1299 = vpop.f32.mrb[0].mxu0
      %1300 = vmatprep.mubr.f32.mxu0 %v912
      %1301 = vmatmul.mubr.f32.gmra.mrb[0].mxu0 %v841
      %v1302 = vpop.f32.mrb[0].mxu0
      %v1303 = vadd.f32 0.0, %v1302
      %v1304 = vpop.f32.mrb[0].mxu0
      %1305 = vmatprep.mubr.f32.mxu0 %v914
      %1306 = vmatmul.mubr.f32.gmra.mrb[0].mxu0 %v842
      %v1307 = vpop.f32.mrb[0].mxu0
      %v1308 = vadd.f32 0.0, %v1307
      %v1309 = vpop.f32.mrb[0].mxu0
      %1310 = vdwg.mxu0
      %1311 = vmatprep.subr.mxu0 0.0
      %1312 = vmatpush1.msra.mxu0 %v1054
      %1313 = vmatprep.subr.mxu0 0.0
      %1314 = vmatpush1.msra.mxu0 %v1055
      %1315 = vmatprep.subr.mxu0 0.0
      %1316 = vmatpush1.msra.mxu0 %v1056
      %1317 = vmatprep.subr.mxu0 0.0
      %1318 = vmatpush1.msra.mxu0 %v1057
      %1319 = vmatprep.subr.mxu0 0.0
      %1320 = vmatpush1.msra.mxu0 %v1058
      %1321 = vmatprep.subr.mxu0 0.0
      %1322 = vmatpush1.msra.mxu0 %v1059
      %1323 = vmatprep.subr.mxu0 0.0
      %1324 = vmatpush1.msra.mxu0 %v1060
      %1325 = vmatprep.subr.mxu0 0.0
      %1326 = vmatpush1.msra.mxu0 %v1061
      %1327 = vmatprep.subr.mxu0 0.0
      %1328 = vmatpush1.msra.mxu0 %v1062
      %1329 = vmatprep.subr.mxu0 0.0
      %1330 = vmatpush1.msra.mxu0 %v1063
      %1331 = vmatprep.subr.mxu0 0.0
      %1332 = vmatpush1.msra.mxu0 %v1064
      %1333 = vmatprep.subr.mxu0 0.0
      %1334 = vmatpush1.msra.mxu0 %v1065
      %1335 = vmatprep.subr.mxu0 0.0
      %1336 = vmatpush1.msra.mxu0 %v1066
      %1337 = vmatprep.subr.mxu0 0.0
      %1338 = vmatpush1.msra.mxu0 %v1067
      %1339 = vmatprep.subr.mxu0 0.0
      %1340 = vmatpush1.msra.mxu0 %v1068
      %1341 = vmatprep.subr.mxu0 0.0
      %1342 = vmatpush1.msra.mxu0 %v1069
      %1343 = vmatprep.subr.mxu0 0.0
      %1344 = vmatpush1.msra.mxu0 %v1070
      %1345 = vmatprep.subr.mxu0 0.0
      %1346 = vmatpush1.msra.mxu0 %v1071
      %1347 = vmatprep.subr.mxu0 0.0
      %1348 = vmatpush1.msra.mxu0 %v1072
      %1349 = vmatprep.subr.mxu0 0.0
      %1350 = vmatpush1.msra.mxu0 %v1073
      %1351 = vmatprep.subr.mxu0 0.0
      %1352 = vmatpush1.msra.mxu0 %v1074
      %1353 = vmatprep.subr.mxu0 0.0
      %1354 = vmatpush1.msra.mxu0 %v1075
      %1355 = vmatprep.subr.mxu0 0.0
      %1356 = vmatpush1.msra.mxu0 %v1076
      %1357 = vmatprep.subr.mxu0 0.0
      %1358 = vmatpush1.msra.mxu0 %v1077
      %1359 = vmatprep.subr.mxu0 0.0
      %1360 = vmatpush1.msra.mxu0 %v1078
      %1361 = vmatprep.subr.mxu0 0.0
      %1362 = vmatpush1.msra.mxu0 %v1079
      %1363 = vmatprep.subr.mxu0 0.0
      %1364 = vmatpush1.msra.mxu0 %v1080
      %1365 = vmatprep.subr.mxu0 0.0
      %1366 = vmatpush1.msra.mxu0 %v1081
      %1367 = vmatprep.subr.mxu0 0.0
      %1368 = vmatpush1.msra.mxu0 %v1082
      %1369 = vmatprep.subr.mxu0 0.0
      %1370 = vmatpush1.msra.mxu0 %v1083
      %1371 = vmatprep.subr.mxu0 0.0
      %1372 = vmatpush1.msra.mxu0 %v1084
      %1373 = vmatprep.subr.mxu0 0.0
      %1374 = vmatpush1.msra.mxu0 %v1085
      %1375 = vmatprep.mubr.f32.mxu0 %v823
      %1376 = vmatmul.mubr.f32.gmra.mrb[0].mxu0 %v934
      %v1377 = vpop.f32.mrb[0].mxu0
      %v1378 = vadd.f32 %v1233, %v1377
      %v1379 = vpop.f32.mrb[0].mxu0
      %1380 = vmatprep.mubr.f32.mxu0 %v824
      %1381 = vmatmul.mubr.f32.gmra.mrb[0].mxu0 %v936
      %v1382 = vpop.f32.mrb[0].mxu0
      %v1383 = vadd.f32 %v1238, %v1382
      %v1384 = vpop.f32.mrb[0].mxu0
      %1385 = vmatprep.mubr.f32.mxu0 %v826
      %1386 = vmatmul.mubr.f32.gmra.mrb[0].mxu0 %v939
      %v1387 = vpop.f32.mrb[0].mxu0
      %v1388 = vadd.f32 %v1243, %v1387
      %v1389 = vpop.f32.mrb[0].mxu0
      %1390 = vmatprep.mubr.f32.mxu0 %v827
      %1391 = vmatmul.mubr.f32.gmra.mrb[0].mxu0 %v941
      %v1392 = vpop.f32.mrb[0].mxu0
      %v1393 = vadd.f32 %v1248, %v1392
      %v1394 = vpop.f32.mrb[0].mxu0
      %1395 = vmatprep.mubr.f32.mxu0 %v829
      %1396 = vmatmul.mubr.f32.gmra.mrb[0].mxu0 %v944
      %v1397 = vpop.f32.mrb[0].mxu0
      %v1398 = vadd.f32 %v1253, %v1397
      %v1399 = vpop.f32.mrb[0].mxu0
      %1400 = vmatprep.mubr.f32.mxu0 %v830
      %1401 = vmatmul.mubr.f32.gmra.mrb[0].mxu0 %v946
      %v1402 = vpop.f32.mrb[0].mxu0
      %v1403 = vadd.f32 %v1258, %v1402
      %v1404 = vpop.f32.mrb[0].mxu0
      %1405 = vmatprep.mubr.f32.mxu0 %v832
      %1406 = vmatmul.mubr.f32.gmra.mrb[0].mxu0 %v949
      %v1407 = vpop.f32.mrb[0].mxu0
      %v1408 = vadd.f32 %v1263, %v1407
      %v1409 = vpop.f32.mrb[0].mxu0
      %1410 = vmatprep.mubr.f32.mxu0 %v833
      %1411 = vmatmul.mubr.f32.gmra.mrb[0].mxu0 %v951
      %v1412 = vpop.f32.mrb[0].mxu0
      %v1413 = vadd.f32 %v1268, %v1412
      %v1414 = vpop.f32.mrb[0].mxu0
      %1415 = vmatprep.mubr.f32.mxu0 %v835
      %1416 = vmatmul.mubr.f32.gmra.mrb[0].mxu0 %v954
      %v1417 = vpop.f32.mrb[0].mxu0
      %v1418 = vadd.f32 %v1273, %v1417
      %v1419 = vpop.f32.mrb[0].mxu0
      %1420 = vmatprep.mubr.f32.mxu0 %v836
      %1421 = vmatmul.mubr.f32.gmra.mrb[0].mxu0 %v956
      %v1422 = vpop.f32.mrb[0].mxu0
      %v1423 = vadd.f32 %v1278, %v1422
      %v1424 = vpop.f32.mrb[0].mxu0
      %1425 = vmatprep.mubr.f32.mxu0 %v838
      %1426 = vmatmul.mubr.f32.gmra.mrb[0].mxu0 %v959
      %v1427 = vpop.f32.mrb[0].mxu0
      %v1428 = vadd.f32 %v1283, %v1427
      %v1429 = vpop.f32.mrb[0].mxu0
      %1430 = vmatprep.mubr.f32.mxu0 %v839
      %1431 = vmatmul.mubr.f32.gmra.mrb[0].mxu0 %v961
      %v1432 = vpop.f32.mrb[0].mxu0
      %v1433 = vadd.f32 %v1288, %v1432
      %v1434 = vpop.f32.mrb[0].mxu0
      %1435 = vmatprep.mubr.f32.mxu0 %v841
      %1436 = vmatmul.mubr.f32.gmra.mrb[0].mxu0 %v964
      %v1437 = vpop.f32.mrb[0].mxu0
      %v1438 = vadd.f32 %v1293, %v1437
      %v1439 = vpop.f32.mrb[0].mxu0
      %1440 = vmatprep.mubr.f32.mxu0 %v842
      %1441 = vmatmul.mubr.f32.gmra.mrb[0].mxu0 %v966
      %v1442 = vpop.f32.mrb[0].mxu0
      %v1443 = vadd.f32 %v1298, %v1442
      %v1444 = vpop.f32.mrb[0].mxu0
      %1445 = vmatprep.mubr.f32.mxu0 %v844
      %1446 = vmatmul.mubr.f32.gmra.mrb[0].mxu0 %v969
      %v1447 = vpop.f32.mrb[0].mxu0
      %v1448 = vadd.f32 %v1303, %v1447
      %v1449 = vpop.f32.mrb[0].mxu0
      %1450 = vmatprep.mubr.f32.mxu0 %v845
      %1451 = vmatmul.mubr.f32.gmra.mrb[0].mxu0 %v971
      %v1452 = vpop.f32.mrb[0].mxu0
      %v1453 = vadd.f32 %v1308, %v1452
      %v1454 = vpop.f32.mrb[0].mxu0
      %1455 = vdwg.mxu0
      %1456 = vmatprep.subr.mxu0 0.0
      %1457 = vmatpush1.msra.mxu0 %v1086
      %1458 = vmatprep.subr.mxu0 0.0
      %1459 = vmatpush1.msra.mxu0 %v1087
      %1460 = vmatprep.subr.mxu0 0.0
      %1461 = vmatpush1.msra.mxu0 %v1088
      %1462 = vmatprep.subr.mxu0 0.0
      %1463 = vmatpush1.msra.mxu0 %v1089
      %1464 = vmatprep.subr.mxu0 0.0
      %1465 = vmatpush1.msra.mxu0 %v1090
      %1466 = vmatprep.subr.mxu0 0.0
      %1467 = vmatpush1.msra.mxu0 %v1091
      %1468 = vmatprep.subr.mxu0 0.0
      %1469 = vmatpush1.msra.mxu0 %v1092
      %1470 = vmatprep.subr.mxu0 0.0
      %1471 = vmatpush1.msra.mxu0 %v1093
      %1472 = vmatprep.subr.mxu0 0.0
      %1473 = vmatpush1.msra.mxu0 %v1094
      %1474 = vmatprep.subr.mxu0 0.0
      %1475 = vmatpush1.msra.mxu0 %v1095
      %1476 = vmatprep.subr.mxu0 0.0
      %1477 = vmatpush1.msra.mxu0 %v1096
      %1478 = vmatprep.subr.mxu0 0.0
      %1479 = vmatpush1.msra.mxu0 %v1097
      %1480 = vmatprep.subr.mxu0 0.0
      %1481 = vmatpush1.msra.mxu0 %v1098
      %1482 = vmatprep.subr.mxu0 0.0
      %1483 = vmatpush1.msra.mxu0 %v1099
      %1484 = vmatprep.subr.mxu0 0.0
      %1485 = vmatpush1.msra.mxu0 %v1100
      %1486 = vmatprep.subr.mxu0 0.0
      %1487 = vmatpush1.msra.mxu0 %v1101
      %1488 = vmatprep.subr.mxu0 0.0
      %1489 = vmatpush1.msra.mxu0 %v1102
      %1490 = vmatprep.subr.mxu0 0.0
      %1491 = vmatpush1.msra.mxu0 %v1103
      %1492 = vmatprep.subr.mxu0 0.0
      %1493 = vmatpush1.msra.mxu0 %v1104
      %1494 = vmatprep.subr.mxu0 0.0
      %1495 = vmatpush1.msra.mxu0 %v1105
      %1496 = vmatprep.subr.mxu0 0.0
      %1497 = vmatpush1.msra.mxu0 %v1106
      %1498 = vmatprep.subr.mxu0 0.0
      %1499 = vmatpush1.msra.mxu0 %v1107
      %1500 = vmatprep.subr.mxu0 0.0
      %1501 = vmatpush1.msra.mxu0 %v1108
      %1502 = vmatprep.subr.mxu0 0.0
      %1503 = vmatpush1.msra.mxu0 %v1109
      %1504 = vmatprep.subr.mxu0 0.0
      %1505 = vmatpush1.msra.mxu0 %v1110
      %1506 = vmatprep.subr.mxu0 0.0
      %1507 = vmatpush1.msra.mxu0 %v1111
      %1508 = vmatprep.subr.mxu0 0.0
      %1509 = vmatpush1.msra.mxu0 %v1112
      %1510 = vmatprep.subr.mxu0 0.0
      %1511 = vmatpush1.msra.mxu0 %v1113
      %1512 = vmatprep.subr.mxu0 0.0
      %1513 = vmatpush1.msra.mxu0 %v1114
      %1514 = vmatprep.subr.mxu0 0.0
      %1515 = vmatpush1.msra.mxu0 %v1115
      %1516 = vmatprep.subr.mxu0 0.0
      %1517 = vmatpush1.msra.mxu0 %v1116
      %1518 = vmatprep.subr.mxu0 0.0
      %1519 = vmatpush1.msra.mxu0 %v1117
      %1520 = vmatprep.mubr.f32.mxu0 %v939
      %1521 = vmatmul.mubr.f32.gmra.mrb[0].mxu0 %v882
      %v1522 = vpop.f32.mrb[0].mxu0
      %v1523 = vadd.f32 %v1378, %v1522
      %v1524 = vpop.f32.mrb[0].mxu0
      %1525 = vmatprep.mubr.f32.mxu0 %v941
      %1526 = vmatmul.mubr.f32.gmra.mrb[0].mxu0 %v884
      %v1527 = vpop.f32.mrb[0].mxu0
      %v1528 = vadd.f32 %v1383, %v1527
      %v1529 = vpop.f32.mrb[0].mxu0
      %1530 = vmatprep.mubr.f32.mxu0 %v944
      %1531 = vmatmul.mubr.f32.gmra.mrb[0].mxu0 %v887
      %v1532 = vpop.f32.mrb[0].mxu0
      %v1533 = vadd.f32 %v1388, %v1532
      %v1534 = vpop.f32.mrb[0].mxu0
      %1535 = vmatprep.mubr.f32.mxu0 %v946
      %1536 = vmatmul.mubr.f32.gmra.mrb[0].mxu0 %v889
      %v1537 = vpop.f32.mrb[0].mxu0
      %v1538 = vadd.f32 %v1393, %v1537
      %v1539 = vpop.f32.mrb[0].mxu0
      %1540 = vmatprep.mubr.f32.mxu0 %v949
      %1541 = vmatmul.mubr.f32.gmra.mrb[0].mxu0 %v892
      %v1542 = vpop.f32.mrb[0].mxu0
      %v1543 = vadd.f32 %v1398, %v1542
      %v1544 = vpop.f32.mrb[0].mxu0
      %1545 = vmatprep.mubr.f32.mxu0 %v951
      %1546 = vmatmul.mubr.f32.gmra.mrb[0].mxu0 %v894
      %v1547 = vpop.f32.mrb[0].mxu0
      %v1548 = vadd.f32 %v1403, %v1547
      %v1549 = vpop.f32.mrb[0].mxu0
      %1550 = vmatprep.mubr.f32.mxu0 %v954
      %1551 = vmatmul.mubr.f32.gmra.mrb[0].mxu0 %v897
      %v1552 = vpop.f32.mrb[0].mxu0
      %v1553 = vadd.f32 %v1408, %v1552
      %v1554 = vpop.f32.mrb[0].mxu0
      %1555 = vmatprep.mubr.f32.mxu0 %v956
      %1556 = vmatmul.mubr.f32.gmra.mrb[0].mxu0 %v899
      %v1557 = vpop.f32.mrb[0].mxu0
      %v1558 = vadd.f32 %v1413, %v1557
      %v1559 = vpop.f32.mrb[0].mxu0
      %1560 = vmatprep.mubr.f32.mxu0 %v959
      %1561 = vmatmul.mubr.f32.gmra.mrb[0].mxu0 %v902
      %v1562 = vpop.f32.mrb[0].mxu0
      %v1563 = vadd.f32 %v1418, %v1562
      %v1564 = vpop.f32.mrb[0].mxu0
      %1565 = vmatprep.mubr.f32.mxu0 %v961
      %1566 = vmatmul.mubr.f32.gmra.mrb[0].mxu0 %v904
      %v1567 = vpop.f32.mrb[0].mxu0
      %v1568 = vadd.f32 %v1423, %v1567
      %v1569 = vpop.f32.mrb[0].mxu0
      %1570 = vmatprep.mubr.f32.mxu0 %v964
      %1571 = vmatmul.mubr.f32.gmra.mrb[0].mxu0 %v907
      %v1572 = vpop.f32.mrb[0].mxu0
      %v1573 = vadd.f32 %v1428, %v1572
      %v1574 = vpop.f32.mrb[0].mxu0
      %1575 = vmatprep.mubr.f32.mxu0 %v966
      %1576 = vmatmul.mubr.f32.gmra.mrb[0].mxu0 %v909
      %v1577 = vpop.f32.mrb[0].mxu0
      %v1578 = vadd.f32 %v1433, %v1577
      %v1579 = vpop.f32.mrb[0].mxu0
      %1580 = vmatprep.mubr.f32.mxu0 %v969
      %1581 = vmatmul.mubr.f32.gmra.mrb[0].mxu0 %v912
      %v1582 = vpop.f32.mrb[0].mxu0
      %v1583 = vadd.f32 %v1438, %v1582
      %v1584 = vpop.f32.mrb[0].mxu0
      %1585 = vmatprep.mubr.f32.mxu0 %v971
      %1586 = vmatmul.mubr.f32.gmra.mrb[0].mxu0 %v914
      %v1587 = vpop.f32.mrb[0].mxu0
      %v1588 = vadd.f32 %v1443, %v1587
      %v1589 = vpop.f32.mrb[0].mxu0
      %1590 = vmatprep.mubr.f32.mxu0 %v1000
      %1591 = vmatmul.mubr.f32.gmra.mrb[0].mxu0 %v993
      %v1592 = vpop.f32.mrb[0].mxu0
      %v1593 = vadd.f32 %v1448, %v1592
      %v1594 = vpop.f32.mrb[0].mxu0
      %1595 = vmatprep.mubr.f32.mxu0 %v1002
      %1596 = vmatmul.mubr.f32.gmra.mrb[0].mxu0 %v995
      %v1597 = vpop.f32.mrb[0].mxu0
      %v1598 = vadd.f32 %v1453, %v1597
      %v1599 = vpop.f32.mrb[0].mxu0
      %1600 = vdwg.mxu0
      %1601 = vmatprep.subr.mxu0 0.0
      %1602 = vmatpush1.msra.mxu0 %v1118
      %1603 = vmatprep.subr.mxu0 0.0
      %1604 = vmatpush1.msra.mxu0 %v1119
      %1605 = vmatprep.subr.mxu0 0.0
      %1606 = vmatpush1.msra.mxu0 %v1120
      %1607 = vmatprep.subr.mxu0 0.0
      %1608 = vmatpush1.msra.mxu0 %v1121
      %1609 = vmatprep.subr.mxu0 0.0
      %1610 = vmatpush1.msra.mxu0 %v1122
      %1611 = vmatprep.subr.mxu0 0.0
      %1612 = vmatpush1.msra.mxu0 %v1123
      %1613 = vmatprep.subr.mxu0 0.0
      %1614 = vmatpush1.msra.mxu0 %v1124
      %1615 = vmatprep.subr.mxu0 0.0
      %1616 = vmatpush1.msra.mxu0 %v1125
      %1617 = vmatprep.subr.mxu0 0.0
      %1618 = vmatpush1.msra.mxu0 %v1126
      %1619 = vmatprep.subr.mxu0 0.0
      %1620 = vmatpush1.msra.mxu0 %v1127
      %1621 = vmatprep.subr.mxu0 0.0
      %1622 = vmatpush1.msra.mxu0 %v1128
      %1623 = vmatprep.subr.mxu0 0.0
      %1624 = vmatpush1.msra.mxu0 %v1129
      %1625 = vmatprep.subr.mxu0 0.0
      %1626 = vmatpush1.msra.mxu0 %v1130
      %1627 = vmatprep.subr.mxu0 0.0
      %1628 = vmatpush1.msra.mxu0 %v1131
      %1629 = vmatprep.subr.mxu0 0.0
      %1630 = vmatpush1.msra.mxu0 %v1132
      %1631 = vmatprep.subr.mxu0 0.0
      %1632 = vmatpush1.msra.mxu0 %v1133
      %1633 = vmatprep.subr.mxu0 0.0
      %1634 = vmatpush1.msra.mxu0 %v1134
      %1635 = vmatprep.subr.mxu0 0.0
      %1636 = vmatpush1.msra.mxu0 %v1135
      %1637 = vmatprep.subr.mxu0 0.0
      %1638 = vmatpush1.msra.mxu0 %v1136
      %1639 = vmatprep.subr.mxu0 0.0
      %1640 = vmatpush1.msra.mxu0 %v1137
      %1641 = vmatprep.subr.mxu0 0.0
      %1642 = vmatpush1.msra.mxu0 %v1138
      %1643 = vmatprep.subr.mxu0 0.0
      %1644 = vmatpush1.msra.mxu0 %v1139
      %1645 = vmatprep.subr.mxu0 0.0
      %1646 = vmatpush1.msra.mxu0 %v1140
      %1647 = vmatprep.subr.mxu0 0.0
      %1648 = vmatpush1.msra.mxu0 %v1141
      %1649 = vmatprep.subr.mxu0 0.0
      %1650 = vmatpush1.msra.mxu0 %v1142
      %1651 = vmatprep.subr.mxu0 0.0
      %1652 = vmatpush1.msra.mxu0 %v1143
      %1653 = vmatprep.subr.mxu0 0.0
      %1654 = vmatpush1.msra.mxu0 %v1144
      %1655 = vmatprep.subr.mxu0 0.0
      %1656 = vmatpush1.msra.mxu0 %v1145
      %1657 = vmatprep.subr.mxu0 0.0
      %1658 = vmatpush1.msra.mxu0 %v1146
      %1659 = vmatprep.subr.mxu0 0.0
      %1660 = vmatpush1.msra.mxu0 %v1147
      %1661 = vmatprep.subr.mxu0 0.0
      %1662 = vmatpush1.msra.mxu0 %v1148
      %1663 = vmatprep.subr.mxu0 0.0
      %1664 = vmatpush1.msra.mxu0 %v1149
      %1665 = vmatprep.mubr.f32.mxu0 %v887
      %1666 = vmatmul.mubr.f32.gmra.mrb[0].mxu0 %v826
      %v1667 = vpop.f32.mrb[0].mxu0
      %v1668 = vadd.f32 %v1523, %v1667
      %v1669 = vpop.f32.mrb[0].mxu0
      %1670 = vmatprep.mubr.f32.mxu0 %v889
      %1671 = vmatmul.mubr.f32.gmra.mrb[0].mxu0 %v827
      %v1672 = vpop.f32.mrb[0].mxu0
      %v1673 = vadd.f32 %v1528, %v1672
      %v1674 = vpop.f32.mrb[0].mxu0
      %1675 = vmatprep.mubr.f32.mxu0 %v892
      %1676 = vmatmul.mubr.f32.gmra.mrb[0].mxu0 %v829
      %v1677 = vpop.f32.mrb[0].mxu0
      %v1678 = vadd.f32 %v1533, %v1677
      %v1679 = vpop.f32.mrb[0].mxu0
      %1680 = vmatprep.mubr.f32.mxu0 %v894
      %1681 = vmatmul.mubr.f32.gmra.mrb[0].mxu0 %v830
      %v1682 = vpop.f32.mrb[0].mxu0
      %v1683 = vadd.f32 %v1538, %v1682
      %v1684 = vpop.f32.mrb[0].mxu0
      %1685 = vmatprep.mubr.f32.mxu0 %v897
      %1686 = vmatmul.mubr.f32.gmra.mrb[0].mxu0 %v832
      %v1687 = vpop.f32.mrb[0].mxu0
      %v1688 = vadd.f32 %v1543, %v1687
      %v1689 = vpop.f32.mrb[0].mxu0
      %1690 = vmatprep.mubr.f32.mxu0 %v899
      %1691 = vmatmul.mubr.f32.gmra.mrb[0].mxu0 %v833
      %v1692 = vpop.f32.mrb[0].mxu0
      %v1693 = vadd.f32 %v1548, %v1692
      %v1694 = vpop.f32.mrb[0].mxu0
      %1695 = vmatprep.mubr.f32.mxu0 %v902
      %1696 = vmatmul.mubr.f32.gmra.mrb[0].mxu0 %v835
      %v1697 = vpop.f32.mrb[0].mxu0
      %v1698 = vadd.f32 %v1553, %v1697
      %v1699 = vpop.f32.mrb[0].mxu0
      %1700 = vmatprep.mubr.f32.mxu0 %v904
      %1701 = vmatmul.mubr.f32.gmra.mrb[0].mxu0 %v836
      %v1702 = vpop.f32.mrb[0].mxu0
      %v1703 = vadd.f32 %v1558, %v1702
      %v1704 = vpop.f32.mrb[0].mxu0
      %1705 = vmatprep.mubr.f32.mxu0 %v907
      %1706 = vmatmul.mubr.f32.gmra.mrb[0].mxu0 %v838
      %v1707 = vpop.f32.mrb[0].mxu0
      %v1708 = vadd.f32 %v1563, %v1707
      %v1709 = vpop.f32.mrb[0].mxu0
      %1710 = vmatprep.mubr.f32.mxu0 %v909
      %1711 = vmatmul.mubr.f32.gmra.mrb[0].mxu0 %v839
      %v1712 = vpop.f32.mrb[0].mxu0
      %v1713 = vadd.f32 %v1568, %v1712
      %v1714 = vpop.f32.mrb[0].mxu0
      %1715 = vmatprep.mubr.f32.mxu0 %v912
      %1716 = vmatmul.mubr.f32.gmra.mrb[0].mxu0 %v841
      %v1717 = vpop.f32.mrb[0].mxu0
      %v1718 = vadd.f32 %v1573, %v1717
      %v1719 = vpop.f32.mrb[0].mxu0
      %1720 = vmatprep.mubr.f32.mxu0 %v914
      %1721 = vmatmul.mubr.f32.gmra.mrb[0].mxu0 %v842
      %v1722 = vpop.f32.mrb[0].mxu0
      %v1723 = vadd.f32 %v1578, %v1722
      %v1724 = vpop.f32.mrb[0].mxu0
      %1725 = vmatprep.mubr.f32.mxu0 %v993
      %1726 = vmatmul.mubr.f32.gmra.mrb[0].mxu0 %v844
      %v1727 = vpop.f32.mrb[0].mxu0
      %v1728 = vadd.f32 %v1583, %v1727
      %v1729 = vpop.f32.mrb[0].mxu0
      %1730 = vmatprep.mubr.f32.mxu0 %v995
      %1731 = vmatmul.mubr.f32.gmra.mrb[0].mxu0 %v845
      %v1732 = vpop.f32.mrb[0].mxu0
      %v1733 = vadd.f32 %v1588, %v1732
      %v1734 = vpop.f32.mrb[0].mxu0
      %1735 = vmatprep.mubr.f32.mxu0 %v1010
      %1736 = vmatmul.mubr.f32.gmra.mrb[0].mxu0 %v847
      %v1737 = vpop.f32.mrb[0].mxu0
      %v1738 = vadd.f32 %v1593, %v1737
      %v1739 = vpop.f32.mrb[0].mxu0
      %1740 = vmatprep.mubr.f32.mxu0 %v1012
      %1741 = vmatmul.mubr.f32.gmra.mrb[0].mxu0 %v848
      %v1742 = vpop.f32.mrb[0].mxu0
      %v1743 = vadd.f32 %v1598, %v1742
      %v1744 = vpop.f32.mrb[0].mxu0
      %1745 = vdwg.mxu0
      %1746 = vmatprep.subr.mxu0 0.0
      %1747 = vmatpush1.msra.mxu0 %v1150
      %1748 = vmatprep.subr.mxu0 0.0
      %1749 = vmatpush1.msra.mxu0 %v1151
      %1750 = vmatprep.subr.mxu0 0.0
      %1751 = vmatpush1.msra.mxu0 %v1152
      %1752 = vmatprep.subr.mxu0 0.0
      %1753 = vmatpush1.msra.mxu0 %v1153
      %1754 = vmatprep.subr.mxu0 0.0
      %1755 = vmatpush1.msra.mxu0 %v1154
      %1756 = vmatprep.subr.mxu0 0.0
      %1757 = vmatpush1.msra.mxu0 %v1155
      %1758 = vmatprep.subr.mxu0 0.0
      %1759 = vmatpush1.msra.mxu0 %v1156
      %1760 = vmatprep.subr.mxu0 0.0
      %1761 = vmatpush1.msra.mxu0 %v1157
      %1762 = vmatprep.subr.mxu0 0.0
      %1763 = vmatpush1.msra.mxu0 %v1158
      %1764 = vmatprep.subr.mxu0 0.0
      %1765 = vmatpush1.msra.mxu0 %v1159
      %1766 = vmatprep.subr.mxu0 0.0
      %1767 = vmatpush1.msra.mxu0 %v1160
      %1768 = vmatprep.subr.mxu0 0.0
      %1769 = vmatpush1.msra.mxu0 %v1161
      %1770 = vmatprep.subr.mxu0 0.0
      %1771 = vmatpush1.msra.mxu0 %v1162
      %1772 = vmatprep.subr.mxu0 0.0
      %1773 = vmatpush1.msra.mxu0 %v1163
      %1774 = vmatprep.subr.mxu0 0.0
      %1775 = vmatpush1.msra.mxu0 %v1164
      %1776 = vmatprep.subr.mxu0 0.0
      %1777 = vmatpush1.msra.mxu0 %v1165
      %1778 = vmatprep.subr.mxu0 0.0
      %1779 = vmatpush1.msra.mxu0 0.0
      %1780 = vmatprep.subr.mxu0 0.0
      %1781 = vmatpush1.msra.mxu0 0.0
      %1782 = vmatprep.subr.mxu0 0.0
      %1783 = vmatpush1.msra.mxu0 0.0
      %1784 = vmatprep.subr.mxu0 0.0
      %1785 = vmatpush1.msra.mxu0 0.0
      %1786 = vmatprep.subr.mxu0 0.0
      %1787 = vmatpush1.msra.mxu0 0.0
      %1788 = vmatprep.subr.mxu0 0.0
      %1789 = vmatpush1.msra.mxu0 0.0
      %1790 = vmatprep.subr.mxu0 0.0
      %1791 = vmatpush1.msra.mxu0 0.0
      %1792 = vmatprep.subr.mxu0 0.0
      %1793 = vmatpush1.msra.mxu0 0.0
      %1794 = vmatprep.subr.mxu0 0.0
      %1795 = vmatpush1.msra.mxu0 0.0
      %1796 = vmatprep.subr.mxu0 0.0
      %1797 = vmatpush1.msra.mxu0 0.0
      %1798 = vmatprep.subr.mxu0 0.0
      %1799 = vmatpush1.msra.mxu0 0.0
      %1800 = vmatprep.subr.mxu0 0.0
      %1801 = vmatpush1.msra.mxu0 0.0
      %1802 = vmatprep.subr.mxu0 0.0
      %1803 = vmatpush1.msra.mxu0 0.0
      %1804 = vmatprep.subr.mxu0 0.0
      %1805 = vmatpush1.msra.mxu0 0.0
      %1806 = vmatprep.subr.mxu0 0.0
      %1807 = vmatpush1.msra.mxu0 0.0
      %1808 = vmatprep.subr.mxu0 0.0
      %1809 = vmatpush1.msra.mxu0 0.0
      %1810 = vmatprep.mubr.f32.mxu0 0.0
      %1811 = vmatmul.mubr.f32.gmra.mrb[0].mxu0 %v944
      %v1812 = vpop.f32.mrb[0].mxu0
      %v1813 = vadd.f32 %v1668, %v1812
      %v1814 = vpop.f32.mrb[0].mxu0
      %1815 = vmatprep.mubr.f32.mxu0 0.0
      %1816 = vmatmul.mubr.f32.gmra.mrb[0].mxu0 %v946
      %v1817 = vpop.f32.mrb[0].mxu0
      %v1818 = vadd.f32 %v1673, %v1817
      %v1819 = vpop.f32.mrb[0].mxu0
      %1820 = vmatprep.mubr.f32.mxu0 0.0
      %1821 = vmatmul.mubr.f32.gmra.mrb[0].mxu0 %v949
      %v1822 = vpop.f32.mrb[0].mxu0
      %v1823 = vadd.f32 %v1678, %v1822
      %v1824 = vpop.f32.mrb[0].mxu0
      %1825 = vmatprep.mubr.f32.mxu0 0.0
      %1826 = vmatmul.mubr.f32.gmra.mrb[0].mxu0 %v951
      %v1827 = vpop.f32.mrb[0].mxu0
      %v1828 = vadd.f32 %v1683, %v1827
      %v1829 = vpop.f32.mrb[0].mxu0
      %1830 = vmatprep.mubr.f32.mxu0 0.0
      %1831 = vmatmul.mubr.f32.gmra.mrb[0].mxu0 %v954
      %v1832 = vpop.f32.mrb[0].mxu0
      %v1833 = vadd.f32 %v1688, %v1832
      %v1834 = vpop.f32.mrb[0].mxu0
      %1835 = vmatprep.mubr.f32.mxu0 0.0
      %1836 = vmatmul.mubr.f32.gmra.mrb[0].mxu0 %v956
      %v1837 = vpop.f32.mrb[0].mxu0
      %v1838 = vadd.f32 %v1693, %v1837
      %v1839 = vpop.f32.mrb[0].mxu0
      %1840 = vmatprep.mubr.f32.mxu0 0.0
      %1841 = vmatmul.mubr.f32.gmra.mrb[0].mxu0 %v959
      %v1842 = vpop.f32.mrb[0].mxu0
      %v1843 = vadd.f32 %v1698, %v1842
      %v1844 = vpop.f32.mrb[0].mxu0
      %1845 = vmatprep.mubr.f32.mxu0 0.0
      %1846 = vmatmul.mubr.f32.gmra.mrb[0].mxu0 %v961
      %v1847 = vpop.f32.mrb[0].mxu0
      %v1848 = vadd.f32 %v1703, %v1847
      %v1849 = vpop.f32.mrb[0].mxu0
      %1850 = vmatprep.mubr.f32.mxu0 0.0
      %1851 = vmatmul.mubr.f32.gmra.mrb[0].mxu0 %v964
      %v1852 = vpop.f32.mrb[0].mxu0
      %v1853 = vadd.f32 %v1708, %v1852
      %v1854 = vpop.f32.mrb[0].mxu0
      %1855 = vmatprep.mubr.f32.mxu0 0.0
      %1856 = vmatmul.mubr.f32.gmra.mrb[0].mxu0 %v966
      %v1857 = vpop.f32.mrb[0].mxu0
      %v1858 = vadd.f32 %v1713, %v1857
      %v1859 = vpop.f32.mrb[0].mxu0
      %1860 = vmatprep.mubr.f32.mxu0 0.0
      %1861 = vmatmul.mubr.f32.gmra.mrb[0].mxu0 %v969
      %v1862 = vpop.f32.mrb[0].mxu0
      %v1863 = vadd.f32 %v1718, %v1862
      %v1864 = vpop.f32.mrb[0].mxu0
      %1865 = vmatprep.mubr.f32.mxu0 0.0
      %1866 = vmatmul.mubr.f32.gmra.mrb[0].mxu0 %v971
      %v1867 = vpop.f32.mrb[0].mxu0
      %v1868 = vadd.f32 %v1723, %v1867
      %v1869 = vpop.f32.mrb[0].mxu0
      %1870 = vmatprep.mubr.f32.mxu0 0.0
      %1871 = vmatmul.mubr.f32.gmra.mrb[0].mxu0 %v1000
      %v1872 = vpop.f32.mrb[0].mxu0
      %v1873 = vadd.f32 %v1728, %v1872
      %v1874 = vpop.f32.mrb[0].mxu0
      %1875 = vmatprep.mubr.f32.mxu0 0.0
      %1876 = vmatmul.mubr.f32.gmra.mrb[0].mxu0 %v1002
      %v1877 = vpop.f32.mrb[0].mxu0
      %v1878 = vadd.f32 %v1733, %v1877
      %v1879 = vpop.f32.mrb[0].mxu0
      %1880 = vmatprep.mubr.f32.mxu0 0.0
      %1881 = vmatmul.mubr.f32.gmra.mrb[0].mxu0 %v1017
      %v1882 = vpop.f32.mrb[0].mxu0
      %v1883 = vadd.f32 %v1738, %v1882
      %v1884 = vpop.f32.mrb[0].mxu0
      %1885 = vmatprep.mubr.f32.mxu0 0.0
      %1886 = vmatmul.mubr.f32.gmra.mrb[0].mxu0 %v1019
      %v1887 = vpop.f32.mrb[0].mxu0
      %v1888 = vadd.f32 %v1743, %v1887
      %v1889 = vpop.f32.mrb[0].mxu0
      %1890 = vdwg.mxu0
      %1891 = vst [vmem:[%s215] sm:$0xff] %v1813
      %1892 = vst [vmem:[%s215 + $0x8] sm:$0xff] %v1818
      %1893 = vst [vmem:[%s215 + $0x10] sm:$0xff] %v1823
      %1894 = vst [vmem:[%s215 + $0x18] sm:$0xff] %v1828
      %1895 = vst [vmem:[%s215 + $0x20] sm:$0xff] %v1833
      %1896 = vst [vmem:[%s215 + $0x28] sm:$0xff] %v1838
      %1897 = vst [vmem:[%s215 + $0x30] sm:$0xff] %v1843
      %1898 = vst [vmem:[%s215 + $0x38] sm:$0xff] %v1848
      %1899 = vst [vmem:[%s215 + $0x40] sm:$0xff] %v1853
      %1900 = vst [vmem:[%s215 + $0x48] sm:$0xff] %v1858
      %1901 = vst [vmem:[%s215 + $0x50] sm:$0xff] %v1863
      %1902 = vst [vmem:[%s215 + $0x58] sm:$0xff] %v1868
      %1903 = vst [vmem:[%s215 + $0x60] sm:$0xff] %v1873
      %1904 = vst [vmem:[%s215 + $0x68] sm:$0xff] %v1878
      %1905 = vst [vmem:[%s215 + $0x70] sm:$0xff] %v1883
      %1906 = vst [vmem:[%s215 + $0x78] sm:$0xff] %v1888
      %v1907 = vadd.f32 %v1813, %v1818
      %v1908 = vadd.f32 %v1907, %v1823
      %v1909 = vadd.f32 %v1908, %v1828
      %v1910 = vadd.f32 %v1909, %v1833
      %v1911 = vadd.f32 %v1910, %v1838
      %v1912 = vadd.f32 %v1911, %v1843
      %v1913 = vadd.f32 %v1912, %v1848
      %v1914 = vadd.f32 %v1913, %v1853
      %v1915 = vadd.f32 %v1914, %v1858
      %v1916 = vadd.f32 %v1915, %v1863
      %v1917 = vadd.f32 %v1916, %v1868
      %v1918 = vadd.f32 %v1917, %v1873
      %v1919 = vadd.f32 %v1918, %v1878
      %v1920 = vadd.f32 %v1919, %v1883
      %v1921 = vadd.f32 %v1920, %v1888
      %v1922 = vrot.slane %v1921, 4
      %v1923 = vadd.f32 %v1921, %v1922
      %v1924 = vrot.slane %v1923, 2
      %v1925 = vadd.f32 %v1923, %v1924
      %v1926 = vrot.slane %v1925, 1
      %v1927 = vadd.f32 %v1925, %v1926
      %v1928 = vmul.f32 %v1813, %v1813
      %v1929 = vmul.f32 %v1818, %v1818
      %v1930 = vmul.f32 %v1823, %v1823
      %v1931 = vmul.f32 %v1828, %v1828
      %v1932 = vmul.f32 %v1833, %v1833
      %v1933 = vmul.f32 %v1838, %v1838
      %v1934 = vmul.f32 %v1843, %v1843
      %v1935 = vmul.f32 %v1848, %v1848
      %v1936 = vmul.f32 %v1853, %v1853
      %v1937 = vmul.f32 %v1858, %v1858
      %v1938 = vmul.f32 %v1863, %v1863
      %v1939 = vmul.f32 %v1868, %v1868
      %v1940 = vmul.f32 %v1873, %v1873
      %v1941 = vmul.f32 %v1878, %v1878
      %v1942 = vmul.f32 %v1883, %v1883
      %v1943 = vmul.f32 %v1888, %v1888
      %v1944 = vadd.f32 %v1928, %v1929
      %v1945 = vadd.f32 %v1944, %v1930
      %v1946 = vadd.f32 %v1945, %v1931
      %v1947 = vadd.f32 %v1946, %v1932
      %v1948 = vadd.f32 %v1947, %v1933
      %v1949 = vadd.f32 %v1948, %v1934
      %v1950 = vadd.f32 %v1949, %v1935
      %v1951 = vadd.f32 %v1950, %v1936
      %v1952 = vadd.f32 %v1951, %v1937
      %v1953 = vadd.f32 %v1952, %v1938
      %v1954 = vadd.f32 %v1953, %v1939
      %v1955 = vadd.f32 %v1954, %v1940
      %v1956 = vadd.f32 %v1955, %v1941
      %v1957 = vadd.f32 %v1956, %v1942
      %v1958 = vadd.f32 %v1957, %v1943
      %v1959 = vrot.slane %v1958, 4
      %v1960 = vadd.f32 %v1958, %v1959
      %v1961 = vrot.slane %v1960, 2
      %v1962 = vadd.f32 %v1960, %v1961
      %v1963 = vrot.slane %v1962, 1
      %v1964 = vadd.f32 %v1962, %v1963
      %vm1965 = vcmask 1040384
      %v1966 = vsel %vm1965, %v1927, %v1964
      %1967 = vst [vmem:[%s224] sm:$0x3] %v1966
      %s1968 = smul.u32 8, %s22
      %p1969 = scmp.lt.s32.totalorder %s21, 1
      %s1970 = scalar_select %p1969, %s21, 1
      %p1971 = scmp.lt.s32.totalorder %s1968, 15
      %s1972 = scalar_select %p1971, %s1968, 15
      %s1973 = smul.addr %s1972, 2
      %s1974 = smul.addr %s1970, 32
      %s1975 = sadd.s32 %s1973, %s1974
      %s1976 = smul.addr %s1975, 8
      %s1977 = scalar_lea.vmem %s4, %s1976
      %p1978 = scmp.lt.s32.totalorder %s21, 1
      %s1979 = scalar_select %p1978, %s21, 1
      %p1980 = scmp.lt.s32.totalorder %s22, 1
      %s1981 = scalar_select %p1980, %s22, 1
      %s1982 = smul.addr %s1979, 2
      %s1983 = sadd.s32 %s1981, %s1982
      %s1984 = smul.addr %s1983, 2
      %s1985 = scalar_lea.vmem %s5, %s1984
      // Predicated region
      $region115: #{double_conv_forward.4} parent=31 // pred_check
        %p1986 = pneg %p112
      $region116: #{double_conv_forward.4} parent=31 // pred_check_branch
        %1988 = sbr.rel (%p1986) target = $region118
      $region117: #{double_conv_forward.4} parent=31 // pred_region
        %s1989 = smul.u32 8, %s22
      $region118: #{double_conv_forward.4} parent=31 // pred_fallthru
        _
      // Predicated region
      $region119: #{double_conv_forward.4} parent=31 // pred_check
        %p1990 = pneg %p140
      $region120: #{double_conv_forward.4} parent=31 // pred_check_branch
        %1992 = sbr.rel (%p1990) target = $region122
      $region121: #{double_conv_forward.4} parent=31 // pred_region
        _
      $region122: #{double_conv_forward.4} parent=31 // pred_fallthru
        _
    $region32: #{double_conv_forward.4} parent=5 // pred_fallthru
      _
    %p1993 = scmp.le.s32.totalorder 2, %s12
    // Predicated region
    $region123: #{double_conv_forward.4} parent=5 // pred_check
      %p1994 = pneg %p1993
    $region124: #{double_conv_forward.4} parent=5 // pred_check_branch
      %1996 = sbr.rel (%p1994) target = $region126
    $region125: #{double_conv_forward.4} parent=5 // pred_region
      %s1997 = ssub.s32 %s12, 2
      // Predicated region
      $region127: #{double_conv_forward.4} parent=125 // pred_check
        %p1998 = pneg %p118
      $region128: #{double_conv_forward.4} parent=125 // pred_check_branch
        %2000 = sbr.rel (%p1998) target = $region130
      $region129: #{double_conv_forward.4} parent=125 // pred_region
        %s2001 = smul.u32 8, %s24
        %p2002 = scmp.lt.s32.totalorder %s23, 1
        %s2003 = scalar_select %p2002, %s23, 1
        %p2004 = scmp.lt.s32.totalorder %s2001, 15
        %s2005 = scalar_select %p2004, %s2001, 15
        %s2006 = smul.addr %s2005, 2
        %s2007 = smul.addr %s2003, 32
        %s2008 = sadd.s32 %s2006, %s2007
        %s2009 = smul.addr %s2008, 8
        %s2010 = scalar_lea.vmem %s4, %s2009
      $region130: #{double_conv_forward.4} parent=125 // pred_fallthru
        _
      // Predicated region
      $region131: #{double_conv_forward.4} parent=125 // pred_check
        %p2011 = pneg %p146
      $region132: #{double_conv_forward.4} parent=125 // pred_check_branch
        %2013 = sbr.rel (%p2011) target = $region134
      $region133: #{double_conv_forward.4} parent=125 // pred_region
        %p2014 = scmp.lt.s32.totalorder %s23, 1
        %s2015 = scalar_select %p2014, %s23, 1
        %p2016 = scmp.lt.s32.totalorder %s24, 1
        %s2017 = scalar_select %p2016, %s24, 1
        %s2018 = smul.addr %s2015, 2
        %s2019 = sadd.s32 %s2017, %s2018
        %s2020 = smul.addr %s2019, 2
        %s2021 = scalar_lea.vmem %s5, %s2020
      $region134: #{double_conv_forward.4} parent=125 // pred_fallthru
        _
    $region126: #{double_conv_forward.4} parent=5 // pred_fallthru
      _
  $region6: #{double_conv_forward.4} parent=0 // loop_footer
    %s16 = sadd.s32 1, %s12
  $region7: #{double_conv_forward.4} parent=0 // loop_footer_branch
    %11 = sbr.rel target = $region3
  $region8: #{double_conv_forward.4} parent=0 // loop_exit
    _
  %2022 = vsyncmov [#allocation3]
  %s2023 = vpop.sfrf %2022
  %p2024 = scmp.eq.s32.totalorder %s2023, 0
  %p2025 = pneg %p2024
  %2027 = shalt.err (%p2025)
  %s2028 = scalar_lea.sflag [#allocation3], 1
  %2029 = vsyncmov %s2028
  %s2030 = vpop.sfrf %2029
  %p2031 = scmp.eq.s32.totalorder %s2030, 0
  %p2032 = pneg %p2031
  %2034 = shalt.err (%p2032)

</llo_original>
